<compile_context>
chip_gen: v6e
topology: v6e:2x2x1
jax: 0.10.0
libtpu: 0.0.40
codegen_flags: <defaults>
</compile_context>

<pallas_src>
import functools
import math

import jax
import jax.numpy as jnp
from jax.experimental import pallas as pl
from jax.experimental.pallas import tpu as pltpu


_PAD = 8     # halo rows in the VMEM scratch (>= max dilation 3, sublane aligned)
_LANE = 128  # lane-dense channel width; all real channel counts here are <= 128


# ------------------------------ fused kernel ------------------------------- #

def _converter_kernel(meta, x_ref, *refs):
    n_params = 2 * len(meta)
    param_refs = refs[:n_params]
    out_ref = refs[n_params]
    buf = refs[n_params + 1]                 # (rows, 128) f32 VMEM scratch

    # One dense memset per grid step: provides the zero halos for every
    # highway layer and kills stale data from the previous batch element.
    buf[...] = jnp.zeros(buf.shape, jnp.float32)

    h = x_ref[...].astype(jnp.float32)       # (T, in_dim), channels-last
    t_cur = h.shape[0]
    h_in_buf = False                         # is h already resident in buf[_PAD:_PAD+t]?

    for li, layer in enumerate(meta):
        kind = layer[0]
        w = param_refs[2 * li][...]          # bf16 matmul weight (K, N)
        b = param_refs[2 * li + 1][...]      # (1, N) f32 bias

        if kind == "pw":                     # 1x1 Conv1d (+ fused act)
            act = layer[1]
            y = jnp.dot(h.astype(w.dtype), w,
                        preferred_element_type=jnp.float32) + b
            if act == "relu":
                y = jnp.maximum(y, 0.0)
            elif act == "sigmoid":
                y = jax.nn.sigmoid(y)
            h = y
            h_in_buf = False

        elif kind == "hw":                   # HighwayConv1d, k=3, dilation d
            d = layer[1]
            L = h.shape[1]                   # 128 (lane-dense)
            if not h_in_buf:                 # 'same' padding via zeroed halos
                buf[pl.ds(_PAD, t_cur), :] = h
            x_l = buf[pl.ds(_PAD - d, t_cur), :]      # x[t - d]
            x_r = buf[pl.ds(_PAD + d, t_cur), :]      # x[t + d]
            # single fused tap+channel matmul: (T, 3L) x (3L, 2L) -> [a | gate]
            x3 = jnp.concatenate([x_l, h, x_r], axis=-1)
            y = jnp.dot(x3.astype(w.dtype), w,
                        preferred_element_type=jnp.float32) + b
            a = y[:, :L]
            g = jax.nn.sigmoid(y[:, L:])              # gate in f32
            h = h + g * (a - h)                       # == g*a + (1-g)*h
            h_in_buf = False

        else:                                # ConvTranspose1d(k=2, stride=2)
            L = h.shape[1]
            y = jnp.dot(h.astype(w.dtype), w,
                        preferred_element_type=jnp.float32) + b   # (T, 2L)
            ye = y[:, :L]                    # -> out[2t]
            yo = y[:, L:]                    # -> out[2t + 1]
            # even/odd time interleave via two sublane-strided row stores
            buf[pl.ds(_PAD, t_cur, stride=2), :] = ye
            buf[pl.ds(_PAD + 1, t_cur, stride=2), :] = yo
            t_cur = 2 * t_cur
            h = buf[pl.ds(_PAD, t_cur), :]
            h_in_buf = True

    out_ref[...] = h.astype(out_ref.dtype)   # full-lane (128-wide) store


# -------------------------- one-time param packing -------------------------- #

def pack_params(params, in_dim, matmul_dtype=jnp.bfloat16):
    """Pad all channel dims to 128 lanes, fold taps into single matmuls,
    cast matmul weights to bf16.  Runs once, outside the per-call path."""
    meta, flat = [], []
    lane_in = in_dim                                   # K of the first matmul
    for p in params:
        if p["kind"] == "pw":
            cin, cout = p["w"].shape
            w = jnp.zeros((lane_in, _LANE), jnp.float32)
            w = w.at[:cin, :cout].set(p["w"])
            b = jnp.zeros((1, _LANE), jnp.float32).at[0, :cout].set(p["b"])
            meta.append(("pw", p["act"]))
            lane_in = _LANE
        elif p["kind"] == "hw":
            k, c, _ = p["w"].shape                     # (3, c, 2c)
            wt = jnp.zeros((k, _LANE, 2 * _LANE), jnp.float32)
            wt = wt.at[:, :c, :c].set(p["w"][:, :, :c])                  # content
            wt = wt.at[:, :c, _LANE:_LANE + c].set(p["w"][:, :, c:])     # gate
            w = wt.reshape(k * _LANE, 2 * _LANE)       # taps [x_l | h | x_r]
            b = jnp.zeros((1, 2 * _LANE), jnp.float32)
            b = b.at[0, :c].set(p["b"][:c]).at[0, _LANE:_LANE + c].set(p["b"][c:])
            meta.append(("hw", p["dilation"]))
        else:  # "ct": w[k] maps x[t] -> out[2t + k]; store as [w0 | w1]
            _, cin, cout = p["w"].shape
            w = jnp.zeros((_LANE, 2 * _LANE), jnp.float32)
            w = w.at[:cin, :cout].set(p["w"][0])
            w = w.at[:cin, _LANE:_LANE + cout].set(p["w"][1])
            b = jnp.zeros((1, 2 * _LANE), jnp.float32)
            b = b.at[0, :cout].set(p["b"]).at[0, _LANE:_LANE + cout].set(p["b"])
            meta.append(("ct",))
            lane_in = _LANE
        flat.append(w.astype(matmul_dtype))
        flat.append(b)                                 # bias stays f32
    return tuple(meta), tuple(flat)


def _vmem_limit_bytes():
    # ~48 MiB on v7x (64 MiB physical / TC), 64 MiB on v5e/v6e (128 MiB physical).
    try:
        cap = int(pltpu.get_tpu_info().vmem_capacity_bytes)
        return min(64 * 1024 * 1024, (cap * 3) // 4)
    except Exception:
        return 32 * 1024 * 1024


# --------------------------------- wrapper --------------------------------- #

@functools.partial(jax.jit, static_argnames=("meta", "out_dim"))
def converter_forward(x, flat, *, meta, out_dim):
    """Fused Converter forward. x: (B, T, in_dim) -> (B, 4*T, out_dim)."""
    B, T, in_dim = x.shape
    n_ct = sum(1 for l in meta if l[0] == "ct")
    t_final = T * (2 ** n_ct)

    in_specs = [pl.BlockSpec((None, T, in_dim), lambda i: (i, 0, 0))]
    for arr in flat:
        in_specs.append(pl.BlockSpec(arr.shape, lambda i: (0, 0)))

    rows = ((2 * _PAD + t_final + 7) // 8) * 8

    # advisory cost estimate for the XLA scheduler
    flops, transc, t = 0, 0, T
    for i, layer in enumerate(meta):
        K, N = flat[2 * i].shape
        flops += 2 * t * K * N
        if layer[0] == "hw":
            transc += t * (N // 2)
        elif layer[0] == "pw" and layer[1] == "sigmoid":
            transc += t * N
        if layer[0] == "ct":
            t *= 2
    bytes_accessed = (x.size * x.dtype.itemsize
                      + sum(int(a.size) * a.dtype.itemsize for a in flat)
                      + B * t_final * _LANE * 4)

    y = pl.pallas_call(
        functools.partial(_converter_kernel, meta),
        out_shape=jax.ShapeDtypeStruct((B, t_final, _LANE), x.dtype),
        grid=(B,),
        in_specs=in_specs,
        out_specs=pl.BlockSpec((None, t_final, _LANE), lambda i: (i, 0, 0)),
        scratch_shapes=[pltpu.VMEM((rows, _LANE), jnp.float32)],
        compiler_params=pltpu.CompilerParams(
            dimension_semantics=("parallel",),
            vmem_limit_bytes=_vmem_limit_bytes()),
        cost_estimate=pl.CostEstimate(flops=B * flops,
                                      transcendentals=B * transc,
                                      bytes_accessed=int(bytes_accessed)),
    )(x, *flat)
    return y[:, :, :out_dim]                 # drop lane padding (cheap XLA slice)


# ----------------------- parameter init (synthetic) ------------------------ #

def init_converter_params(key, in_dim, out_dim, channels=32, kernel_size=3,
                          dropout=0.1):
    """Mirrors the PyTorch init: weight ~ N(0, sqrt(std_mul*(1-p)/(k*Cin))),
    bias = 0. weight_norm is identity at init."""
    C, Fd = channels, out_dim
    spec = [
        ("pw", in_dim, C, 1.0, "none"),
        ("hw", C, 1),
        ("hw", C, 3),
        ("ct", C, C),
        ("hw", C, 1),
        ("hw", C, 3),
        ("ct", C, C),
        ("hw", C, 1),
        ("hw", C, 3),
        ("pw", C, 2 * C, 1.0, "none"),
        ("hw", 2 * C, 1),
        ("hw", 2 * C, 1),
        ("pw", 2 * C, Fd, 1.0, "none"),
        ("pw", Fd, Fd, 1.0, "relu"),      # Conv1d + nn.ReLU fused
        ("pw", Fd, Fd, 2.0, "relu"),      # Conv1d(std_mul=2) + nn.ReLU fused
        ("pw", Fd, Fd, 2.0, "sigmoid"),   # Conv1d(std_mul=2) + nn.Sigmoid fused
    ]
    keys = jax.random.split(key, len(spec))
    layers = []
    for k, s in zip(keys, spec):
        if s[0] == "pw":
            _, cin, cout, std_mul, act = s
            std = math.sqrt(std_mul / (1 * cin))
            w = std * jax.random.normal(k, (cin, cout), jnp.float32)
            layers.append(dict(kind="pw", w=w,
                               b=jnp.zeros((cout,), jnp.float32), act=act))
        elif s[0] == "hw":
            _, c, dil = s
            std = math.sqrt((1.0 * (1.0 - dropout)) / (kernel_size * c))
            w = std * jax.random.normal(k, (kernel_size, c, 2 * c), jnp.float32)
            layers.append(dict(kind="hw", w=w,
                               b=jnp.zeros((2 * c,), jnp.float32), dilation=dil))
        else:  # "ct"
            _, cin, cout = s
            std = math.sqrt(1.0 / (2 * cin))
            w = std * jax.random.normal(k, (2, cin, cout), jnp.float32)
            layers.append(dict(kind="ct", w=w,
                               b=jnp.zeros((cout,), jnp.float32)))
    return layers


# ------------------------- pure-JAX reference (f32) ------------------------ #

def converter_reference(x, params):
    h = x
    for p in params:
        if p["kind"] == "pw":
            h = h @ p["w"] + p["b"]
            if p["act"] == "relu":
                h = jnp.maximum(h, 0.0)
            elif p["act"] == "sigmoid":
                h = jax.nn.sigmoid(h)
        elif p["kind"] == "hw":
            d = p["dilation"]
            Tc, C = h.shape[1], h.shape[2]
            xp = jnp.pad(h, ((0, 0), (d, d), (0, 0)))
            x_l = xp[:, 0:Tc]
            x_r = xp[:, 2 * d:2 * d + Tc]
            y = (x_l @ p["w"][0] + h @ p["w"][1] + x_r @ p["w"][2] + p["b"])
            a = y[..., :C]
            g = jax.nn.sigmoid(y[..., C:])
            h = g * a + (1.0 - g) * h
        else:
            ye = h @ p["w"][0] + p["b"]
            yo = h @ p["w"][1] + p["b"]
            B, Tc, Co = ye.shape
            h = jnp.stack([ye, yo], axis=2).reshape(B, 2 * Tc, Co)
    return h


# ----------------------------------- main ----------------------------------- #

if __name__ == "__main__":
    B, T, in_dim, out_dim, C = 2, 8, 32, 16, 32
    key = jax.random.PRNGKey(0)
    kx, kp = jax.random.split(key)
    x = jax.random.normal(kx, (B, T, in_dim), jnp.float32)
    params = init_converter_params(kp, in_dim, out_dim, channels=C,
                                   kernel_size=3, dropout=0.1)

    # One-time packing/padding/bf16 cast of the weights (hoisted out of the call path).
    meta, flat = pack_params(params, in_dim)

    y = converter_forward(x, flat, meta=meta, out_dim=out_dim)
    y = jax.block_until_ready(y)

    assert y.shape == (B, 4 * T, out_dim), y.shape
    assert y.dtype == jnp.float32
    # final layer is a sigmoid -> outputs must lie in [0, 1]
    assert bool(jnp.all((y >= 0.0) & (y <= 1.0)))

    # numerical check against a pure-JAX reference (f32 math; loose tolerance
    # accounts for bf16 matmul inputs in the kernel)
    with jax.default_matmul_precision("float32"):
        y_ref = converter_reference(x, params)
    err = float(jnp.max(jnp.abs(y - y_ref)))
    assert err < 5e-2, f"max abs error vs reference: {err}"

    print("KERNEL_OK")
</pallas_src>

<mosaic_0001>
module attributes {stable_mosaic.version = 11 : i64} {
  func.func @_converter_kernel(%arg0: i32, %arg1: memref<1x8x32xf32, #tpu.memory_space<vmem>>, %arg2: memref<32x128xbf16, #tpu.memory_space<vmem>>, %arg3: memref<1x128xf32, #tpu.memory_space<vmem>>, %arg4: memref<384x256xbf16, #tpu.memory_space<vmem>>, %arg5: memref<1x256xf32, #tpu.memory_space<vmem>>, %arg6: memref<384x256xbf16, #tpu.memory_space<vmem>>, %arg7: memref<1x256xf32, #tpu.memory_space<vmem>>, %arg8: memref<128x256xbf16, #tpu.memory_space<vmem>>, %arg9: memref<1x256xf32, #tpu.memory_space<vmem>>, %arg10: memref<384x256xbf16, #tpu.memory_space<vmem>>, %arg11: memref<1x256xf32, #tpu.memory_space<vmem>>, %arg12: memref<384x256xbf16, #tpu.memory_space<vmem>>, %arg13: memref<1x256xf32, #tpu.memory_space<vmem>>, %arg14: memref<128x256xbf16, #tpu.memory_space<vmem>>, %arg15: memref<1x256xf32, #tpu.memory_space<vmem>>, %arg16: memref<384x256xbf16, #tpu.memory_space<vmem>>, %arg17: memref<1x256xf32, #tpu.memory_space<vmem>>, %arg18: memref<384x256xbf16, #tpu.memory_space<vmem>>, %arg19: memref<1x256xf32, #tpu.memory_space<vmem>>, %arg20: memref<128x128xbf16, #tpu.memory_space<vmem>>, %arg21: memref<1x128xf32, #tpu.memory_space<vmem>>, %arg22: memref<384x256xbf16, #tpu.memory_space<vmem>>, %arg23: memref<1x256xf32, #tpu.memory_space<vmem>>, %arg24: memref<384x256xbf16, #tpu.memory_space<vmem>>, %arg25: memref<1x256xf32, #tpu.memory_space<vmem>>, %arg26: memref<128x128xbf16, #tpu.memory_space<vmem>>, %arg27: memref<1x128xf32, #tpu.memory_space<vmem>>, %arg28: memref<128x128xbf16, #tpu.memory_space<vmem>>, %arg29: memref<1x128xf32, #tpu.memory_space<vmem>>, %arg30: memref<128x128xbf16, #tpu.memory_space<vmem>>, %arg31: memref<1x128xf32, #tpu.memory_space<vmem>>, %arg32: memref<128x128xbf16, #tpu.memory_space<vmem>>, %arg33: memref<1x128xf32, #tpu.memory_space<vmem>>, %arg34: memref<1x32x128xf32, #tpu.memory_space<vmem>>, %arg35: memref<48x128xf32, #tpu.memory_space<vmem>>) attributes {dimension_semantics = [#tpu.dimension_semantics<parallel>], iteration_bounds = array<i64: 2>, scalar_prefetch = 0 : i64, scratch_operands = 1 : i64, tpu.core_type = #tpu.core_type<tc>, window_params = [{transform_indices = @transform_0, window_bounds = array<i64: 1, 8, 32>}, {pipeline_mode = #tpu.pipeline_mode<synchronous>, transform_indices = @transform_1, window_bounds = array<i64: 32, 128>}, {pipeline_mode = #tpu.pipeline_mode<synchronous>, transform_indices = @transform_2, window_bounds = array<i64: 1, 128>}, {pipeline_mode = #tpu.pipeline_mode<synchronous>, transform_indices = @transform_3, window_bounds = array<i64: 384, 256>}, {pipeline_mode = #tpu.pipeline_mode<synchronous>, transform_indices = @transform_4, window_bounds = array<i64: 1, 256>}, {pipeline_mode = #tpu.pipeline_mode<synchronous>, transform_indices = @transform_5, window_bounds = array<i64: 384, 256>}, {pipeline_mode = #tpu.pipeline_mode<synchronous>, transform_indices = @transform_6, window_bounds = array<i64: 1, 256>}, {pipeline_mode = #tpu.pipeline_mode<synchronous>, transform_indices = @transform_7, window_bounds = array<i64: 128, 256>}, {pipeline_mode = #tpu.pipeline_mode<synchronous>, transform_indices = @transform_8, window_bounds = array<i64: 1, 256>}, {pipeline_mode = #tpu.pipeline_mode<synchronous>, transform_indices = @transform_9, window_bounds = array<i64: 384, 256>}, {pipeline_mode = #tpu.pipeline_mode<synchronous>, transform_indices = @transform_10, window_bounds = array<i64: 1, 256>}, {pipeline_mode = #tpu.pipeline_mode<synchronous>, transform_indices = @transform_11, window_bounds = array<i64: 384, 256>}, {pipeline_mode = #tpu.pipeline_mode<synchronous>, transform_indices = @transform_12, window_bounds = array<i64: 1, 256>}, {pipeline_mode = #tpu.pipeline_mode<synchronous>, transform_indices = @transform_13, window_bounds = array<i64: 128, 256>}, {pipeline_mode = #tpu.pipeline_mode<synchronous>, transform_indices = @transform_14, window_bounds = array<i64: 1, 256>}, {pipeline_mode = #tpu.pipeline_mode<synchronous>, transform_indices = @transform_15, window_bounds = array<i64: 384, 256>}, {pipeline_mode = #tpu.pipeline_mode<synchronous>, transform_indices = @transform_16, window_bounds = array<i64: 1, 256>}, {pipeline_mode = #tpu.pipeline_mode<synchronous>, transform_indices = @transform_17, window_bounds = array<i64: 384, 256>}, {pipeline_mode = #tpu.pipeline_mode<synchronous>, transform_indices = @transform_18, window_bounds = array<i64: 1, 256>}, {pipeline_mode = #tpu.pipeline_mode<synchronous>, transform_indices = @transform_19, window_bounds = array<i64: 128, 128>}, {pipeline_mode = #tpu.pipeline_mode<synchronous>, transform_indices = @transform_20, window_bounds = array<i64: 1, 128>}, {pipeline_mode = #tpu.pipeline_mode<synchronous>, transform_indices = @transform_21, window_bounds = array<i64: 384, 256>}, {pipeline_mode = #tpu.pipeline_mode<synchronous>, transform_indices = @transform_22, window_bounds = array<i64: 1, 256>}, {pipeline_mode = #tpu.pipeline_mode<synchronous>, transform_indices = @transform_23, window_bounds = array<i64: 384, 256>}, {pipeline_mode = #tpu.pipeline_mode<synchronous>, transform_indices = @transform_24, window_bounds = array<i64: 1, 256>}, {pipeline_mode = #tpu.pipeline_mode<synchronous>, transform_indices = @transform_25, window_bounds = array<i64: 128, 128>}, {pipeline_mode = #tpu.pipeline_mode<synchronous>, transform_indices = @transform_26, window_bounds = array<i64: 1, 128>}, {pipeline_mode = #tpu.pipeline_mode<synchronous>, transform_indices = @transform_27, window_bounds = array<i64: 128, 128>}, {pipeline_mode = #tpu.pipeline_mode<synchronous>, transform_indices = @transform_28, window_bounds = array<i64: 1, 128>}, {pipeline_mode = #tpu.pipeline_mode<synchronous>, transform_indices = @transform_29, window_bounds = array<i64: 128, 128>}, {pipeline_mode = #tpu.pipeline_mode<synchronous>, transform_indices = @transform_30, window_bounds = array<i64: 1, 128>}, {pipeline_mode = #tpu.pipeline_mode<synchronous>, transform_indices = @transform_31, window_bounds = array<i64: 128, 128>}, {pipeline_mode = #tpu.pipeline_mode<synchronous>, transform_indices = @transform_32, window_bounds = array<i64: 1, 128>}, {transform_indices = @transform_33, window_bounds = array<i64: 1, 32, 128>}]} {
    %cst = arith.constant 0.000000e+00 : f32
    %0 = vector.broadcast %cst : f32 to vector<48x128xf32>
    %c0 = arith.constant 0 : index
    %c0_0 = arith.constant 0 : index
    %1 = vector.load %arg35[%c0, %c0_0] : memref<48x128xf32, #tpu.memory_space<vmem>>, vector<48x128xf32>
    tpu.vector_store %arg35[%c0, %c0_0], %0 {strides = array<i32>} : memref<48x128xf32, #tpu.memory_space<vmem>>, vector<48x128xf32>,
    %c0_1 = arith.constant 0 : index
    %c0_2 = arith.constant 0 : index
    %c0_3 = arith.constant 0 : index
    %2 = vector.load %arg1[%c0_1, %c0_2, %c0_3] : memref<1x8x32xf32, #tpu.memory_space<vmem>>, vector<1x8x32xf32>
    %3 = vector.shape_cast %2 : vector<1x8x32xf32> to vector<8x32xf32>
    %c0_4 = arith.constant 0 : index
    %c0_5 = arith.constant 0 : index
    %4 = vector.load %arg2[%c0_4, %c0_5] : memref<32x128xbf16, #tpu.memory_space<vmem>>, vector<32x128xbf16>
    %c0_6 = arith.constant 0 : index
    %c0_7 = arith.constant 0 : index
    %5 = vector.load %arg3[%c0_6, %c0_7] : memref<1x128xf32, #tpu.memory_space<vmem>>, vector<1x128xf32>
    %6 = arith.truncf %3 : vector<8x32xf32> to vector<8x32xbf16>
    %cst_8 = arith.constant dense<0.000000e+00> : vector<8x128xf32>
    %7 = tpu.matmul %6, %4, %cst_8 {dimension_numbers = #tpu.dot_dimension_numbers<[1], [0], [0], [1], [0, 0, 1, 1], [], []>} : vector<8x32xbf16>, vector<32x128xbf16>, vector<8x128xf32> -> vector<8x128xf32>
    %8 = vector.broadcast %5 : vector<1x128xf32> to vector<8x128xf32>
    %9 = arith.addf %7, %8 : vector<8x128xf32>
    %c0_9 = arith.constant 0 : index
    %c0_10 = arith.constant 0 : index
    %10 = vector.load %arg4[%c0_9, %c0_10] : memref<384x256xbf16, #tpu.memory_space<vmem>>, vector<384x256xbf16>
    %c0_11 = arith.constant 0 : index
    %c0_12 = arith.constant 0 : index
    %11 = vector.load %arg5[%c0_11, %c0_12] : memref<1x256xf32, #tpu.memory_space<vmem>>, vector<1x256xf32>
    %c8 = arith.constant 8 : index
    %c0_13 = arith.constant 0 : index
    %12 = vector.load %arg35[%c8, %c0_13] : memref<48x128xf32, #tpu.memory_space<vmem>>, vector<8x128xf32>
    tpu.vector_store %arg35[%c8, %c0_13], %9 {strides = array<i32>} : memref<48x128xf32, #tpu.memory_space<vmem>>, vector<8x128xf32>,
    %c7 = arith.constant 7 : index
    %c0_14 = arith.constant 0 : index
    %13 = vector.load %arg35[%c7, %c0_14] : memref<48x128xf32, #tpu.memory_space<vmem>>, vector<8x128xf32>
    %c9 = arith.constant 9 : index
    %c0_15 = arith.constant 0 : index
    %14 = vector.load %arg35[%c9, %c0_15] : memref<48x128xf32, #tpu.memory_space<vmem>>, vector<8x128xf32>
    %15 = tpu.concatenate %13, %9, %14 in 1 : vector<8x128xf32>, vector<8x128xf32>, vector<8x128xf32> -> vector<8x384xf32>
    %16 = arith.truncf %15 : vector<8x384xf32> to vector<8x384xbf16>
    %cst_16 = arith.constant dense<0.000000e+00> : vector<8x256xf32>
    %17 = tpu.matmul %16, %10, %cst_16 {dimension_numbers = #tpu.dot_dimension_numbers<[1], [0], [0], [1], [0, 0, 1, 1], [], []>} : vector<8x384xbf16>, vector<384x256xbf16>, vector<8x256xf32> -> vector<8x256xf32>
    %18 = vector.broadcast %11 : vector<1x256xf32> to vector<8x256xf32>
    %19 = arith.addf %17, %18 : vector<8x256xf32>
    %20 = vector.extract_strided_slice %19 {offsets = [0, 0], sizes = [8, 128], strides = [1, 1]} : vector<8x256xf32> to vector<8x128xf32>
    %21 = vector.extract_strided_slice %19 {offsets = [0, 128], sizes = [8, 128], strides = [1, 1]} : vector<8x256xf32> to vector<8x128xf32>
    %22 = arith.negf %21 : vector<8x128xf32>
    %23 = math.exp %22 : vector<8x128xf32>
    %cst_17 = arith.constant 1.000000e+00 : f32
    %24 = vector.broadcast %cst_17 : f32 to vector<8x128xf32>
    %25 = arith.addf %24, %23 : vector<8x128xf32>
    %26 = arith.divf %24, %25 : vector<8x128xf32>
    %27 = arith.subf %20, %9 : vector<8x128xf32>
    %28 = arith.mulf %26, %27 : vector<8x128xf32>
    %29 = arith.addf %9, %28 : vector<8x128xf32>
    %c0_18 = arith.constant 0 : index
    %c0_19 = arith.constant 0 : index
    %30 = vector.load %arg6[%c0_18, %c0_19] : memref<384x256xbf16, #tpu.memory_space<vmem>>, vector<384x256xbf16>
    %c0_20 = arith.constant 0 : index
    %c0_21 = arith.constant 0 : index
    %31 = vector.load %arg7[%c0_20, %c0_21] : memref<1x256xf32, #tpu.memory_space<vmem>>, vector<1x256xf32>
    %c8_22 = arith.constant 8 : index
    %c0_23 = arith.constant 0 : index
    %32 = vector.load %arg35[%c8_22, %c0_23] : memref<48x128xf32, #tpu.memory_space<vmem>>, vector<8x128xf32>
    tpu.vector_store %arg35[%c8_22, %c0_23], %29 {strides = array<i32>} : memref<48x128xf32, #tpu.memory_space<vmem>>, vector<8x128xf32>,
    %c5 = arith.constant 5 : index
    %c0_24 = arith.constant 0 : index
    %33 = vector.load %arg35[%c5, %c0_24] : memref<48x128xf32, #tpu.memory_space<vmem>>, vector<8x128xf32>
    %c11 = arith.constant 11 : index
    %c0_25 = arith.constant 0 : index
    %34 = vector.load %arg35[%c11, %c0_25] : memref<48x128xf32, #tpu.memory_space<vmem>>, vector<8x128xf32>
    %35 = tpu.concatenate %33, %29, %34 in 1 : vector<8x128xf32>, vector<8x128xf32>, vector<8x128xf32> -> vector<8x384xf32>
    %36 = arith.truncf %35 : vector<8x384xf32> to vector<8x384xbf16>
    %cst_26 = arith.constant dense<0.000000e+00> : vector<8x256xf32>
    %37 = tpu.matmul %36, %30, %cst_26 {dimension_numbers = #tpu.dot_dimension_numbers<[1], [0], [0], [1], [0, 0, 1, 1], [], []>} : vector<8x384xbf16>, vector<384x256xbf16>, vector<8x256xf32> -> vector<8x256xf32>
    %38 = vector.broadcast %31 : vector<1x256xf32> to vector<8x256xf32>
    %39 = arith.addf %37, %38 : vector<8x256xf32>
    %40 = vector.extract_strided_slice %39 {offsets = [0, 0], sizes = [8, 128], strides = [1, 1]} : vector<8x256xf32> to vector<8x128xf32>
    %41 = vector.extract_strided_slice %39 {offsets = [0, 128], sizes = [8, 128], strides = [1, 1]} : vector<8x256xf32> to vector<8x128xf32>
    %42 = arith.negf %41 : vector<8x128xf32>
    %43 = math.exp %42 : vector<8x128xf32>
    %cst_27 = arith.constant 1.000000e+00 : f32
    %44 = vector.broadcast %cst_27 : f32 to vector<8x128xf32>
    %45 = arith.addf %44, %43 : vector<8x128xf32>
    %46 = arith.divf %44, %45 : vector<8x128xf32>
    %47 = arith.subf %40, %29 : vector<8x128xf32>
    %48 = arith.mulf %46, %47 : vector<8x128xf32>
    %49 = arith.addf %29, %48 : vector<8x128xf32>
    %c0_28 = arith.constant 0 : index
    %c0_29 = arith.constant 0 : index
    %50 = vector.load %arg8[%c0_28, %c0_29] : memref<128x256xbf16, #tpu.memory_space<vmem>>, vector<128x256xbf16>
    %c0_30 = arith.constant 0 : index
    %c0_31 = arith.constant 0 : index
    %51 = vector.load %arg9[%c0_30, %c0_31] : memref<1x256xf32, #tpu.memory_space<vmem>>, vector<1x256xf32>
    %52 = arith.truncf %49 : vector<8x128xf32> to vector<8x128xbf16>
    %cst_32 = arith.constant dense<0.000000e+00> : vector<8x256xf32>
    %53 = tpu.matmul %52, %50, %cst_32 {dimension_numbers = #tpu.dot_dimension_numbers<[1], [0], [0], [1], [0, 0, 1, 1], [], []>} : vector<8x128xbf16>, vector<128x256xbf16>, vector<8x256xf32> -> vector<8x256xf32>
    %54 = vector.broadcast %51 : vector<1x256xf32> to vector<8x256xf32>
    %55 = arith.addf %53, %54 : vector<8x256xf32>
    %56 = vector.extract_strided_slice %55 {offsets = [0, 0], sizes = [8, 128], strides = [1, 1]} : vector<8x256xf32> to vector<8x128xf32>
    %57 = vector.extract_strided_slice %55 {offsets = [0, 128], sizes = [8, 128], strides = [1, 1]} : vector<8x256xf32> to vector<8x128xf32>
    %c8_33 = arith.constant 8 : index
    %c0_34 = arith.constant 0 : index
    %58 = tpu.strided_load %arg35[%c8_33, %c0_34] {strides = array<i32: 2, 1>} : memref<48x128xf32, #tpu.memory_space<vmem>>, vector<8x128xf32>
    tpu.strided_store %arg35[%c8_33, %c0_34], %56 {strides = array<i32: 2, 1>} : memref<48x128xf32, #tpu.memory_space<vmem>>, vector<8x128xf32>
    %c9_35 = arith.constant 9 : index
    %c0_36 = arith.constant 0 : index
    %59 = tpu.strided_load %arg35[%c9_35, %c0_36] {strides = array<i32: 2, 1>} : memref<48x128xf32, #tpu.memory_space<vmem>>, vector<8x128xf32>
    tpu.strided_store %arg35[%c9_35, %c0_36], %57 {strides = array<i32: 2, 1>} : memref<48x128xf32, #tpu.memory_space<vmem>>, vector<8x128xf32>
    %c8_37 = arith.constant 8 : index
    %c0_38 = arith.constant 0 : index
    %60 = vector.load %arg35[%c8_37, %c0_38] : memref<48x128xf32, #tpu.memory_space<vmem>>, vector<16x128xf32>
    %c0_39 = arith.constant 0 : index
    %c0_40 = arith.constant 0 : index
    %61 = vector.load %arg10[%c0_39, %c0_40] : memref<384x256xbf16, #tpu.memory_space<vmem>>, vector<384x256xbf16>
    %c0_41 = arith.constant 0 : index
    %c0_42 = arith.constant 0 : index
    %62 = vector.load %arg11[%c0_41, %c0_42] : memref<1x256xf32, #tpu.memory_space<vmem>>, vector<1x256xf32>
    %c7_43 = arith.constant 7 : index
    %c0_44 = arith.constant 0 : index
    %63 = vector.load %arg35[%c7_43, %c0_44] : memref<48x128xf32, #tpu.memory_space<vmem>>, vector<16x128xf32>
    %c9_45 = arith.constant 9 : index
    %c0_46 = arith.constant 0 : index
    %64 = vector.load %arg35[%c9_45, %c0_46] : memref<48x128xf32, #tpu.memory_space<vmem>>, vector<16x128xf32>
    %65 = tpu.concatenate %63, %60, %64 in 1 : vector<16x128xf32>, vector<16x128xf32>, vector<16x128xf32> -> vector<16x384xf32>
    %66 = arith.truncf %65 : vector<16x384xf32> to vector<16x384xbf16>
    %cst_47 = arith.constant dense<0.000000e+00> : vector<16x256xf32>
    %67 = tpu.matmul %66, %61, %cst_47 {dimension_numbers = #tpu.dot_dimension_numbers<[1], [0], [0], [1], [0, 0, 1, 1], [], []>} : vector<16x384xbf16>, vector<384x256xbf16>, vector<16x256xf32> -> vector<16x256xf32>
    %68 = vector.broadcast %62 : vector<1x256xf32> to vector<16x256xf32>
    %69 = arith.addf %67, %68 : vector<16x256xf32>
    %70 = vector.extract_strided_slice %69 {offsets = [0, 0], sizes = [16, 128], strides = [1, 1]} : vector<16x256xf32> to vector<16x128xf32>
    %71 = vector.extract_strided_slice %69 {offsets = [0, 128], sizes = [16, 128], strides = [1, 1]} : vector<16x256xf32> to vector<16x128xf32>
    %72 = arith.negf %71 : vector<16x128xf32>
    %73 = math.exp %72 : vector<16x128xf32>
    %cst_48 = arith.constant 1.000000e+00 : f32
    %74 = vector.broadcast %cst_48 : f32 to vector<16x128xf32>
    %75 = arith.addf %74, %73 : vector<16x128xf32>
    %76 = arith.divf %74, %75 : vector<16x128xf32>
    %77 = arith.subf %70, %60 : vector<16x128xf32>
    %78 = arith.mulf %76, %77 : vector<16x128xf32>
    %79 = arith.addf %60, %78 : vector<16x128xf32>
    %c0_49 = arith.constant 0 : index
    %c0_50 = arith.constant 0 : index
    %80 = vector.load %arg12[%c0_49, %c0_50] : memref<384x256xbf16, #tpu.memory_space<vmem>>, vector<384x256xbf16>
    %c0_51 = arith.constant 0 : index
    %c0_52 = arith.constant 0 : index
    %81 = vector.load %arg13[%c0_51, %c0_52] : memref<1x256xf32, #tpu.memory_space<vmem>>, vector<1x256xf32>
    %c8_53 = arith.constant 8 : index
    %c0_54 = arith.constant 0 : index
    %82 = vector.load %arg35[%c8_53, %c0_54] : memref<48x128xf32, #tpu.memory_space<vmem>>, vector<16x128xf32>
    tpu.vector_store %arg35[%c8_53, %c0_54], %79 {strides = array<i32>} : memref<48x128xf32, #tpu.memory_space<vmem>>, vector<16x128xf32>,
    %c5_55 = arith.constant 5 : index
    %c0_56 = arith.constant 0 : index
    %83 = vector.load %arg35[%c5_55, %c0_56] : memref<48x128xf32, #tpu.memory_space<vmem>>, vector<16x128xf32>
    %c11_57 = arith.constant 11 : index
    %c0_58 = arith.constant 0 : index
    %84 = vector.load %arg35[%c11_57, %c0_58] : memref<48x128xf32, #tpu.memory_space<vmem>>, vector<16x128xf32>
    %85 = tpu.concatenate %83, %79, %84 in 1 : vector<16x128xf32>, vector<16x128xf32>, vector<16x128xf32> -> vector<16x384xf32>
    %86 = arith.truncf %85 : vector<16x384xf32> to vector<16x384xbf16>
    %cst_59 = arith.constant dense<0.000000e+00> : vector<16x256xf32>
    %87 = tpu.matmul %86, %80, %cst_59 {dimension_numbers = #tpu.dot_dimension_numbers<[1], [0], [0], [1], [0, 0, 1, 1], [], []>} : vector<16x384xbf16>, vector<384x256xbf16>, vector<16x256xf32> -> vector<16x256xf32>
    %88 = vector.broadcast %81 : vector<1x256xf32> to vector<16x256xf32>
    %89 = arith.addf %87, %88 : vector<16x256xf32>
    %90 = vector.extract_strided_slice %89 {offsets = [0, 0], sizes = [16, 128], strides = [1, 1]} : vector<16x256xf32> to vector<16x128xf32>
    %91 = vector.extract_strided_slice %89 {offsets = [0, 128], sizes = [16, 128], strides = [1, 1]} : vector<16x256xf32> to vector<16x128xf32>
    %92 = arith.negf %91 : vector<16x128xf32>
    %93 = math.exp %92 : vector<16x128xf32>
    %cst_60 = arith.constant 1.000000e+00 : f32
    %94 = vector.broadcast %cst_60 : f32 to vector<16x128xf32>
    %95 = arith.addf %94, %93 : vector<16x128xf32>
    %96 = arith.divf %94, %95 : vector<16x128xf32>
    %97 = arith.subf %90, %79 : vector<16x128xf32>
    %98 = arith.mulf %96, %97 : vector<16x128xf32>
    %99 = arith.addf %79, %98 : vector<16x128xf32>
    %c0_61 = arith.constant 0 : index
    %c0_62 = arith.constant 0 : index
    %100 = vector.load %arg14[%c0_61, %c0_62] : memref<128x256xbf16, #tpu.memory_space<vmem>>, vector<128x256xbf16>
    %c0_63 = arith.constant 0 : index
    %c0_64 = arith.constant 0 : index
    %101 = vector.load %arg15[%c0_63, %c0_64] : memref<1x256xf32, #tpu.memory_space<vmem>>, vector<1x256xf32>
    %102 = arith.truncf %99 : vector<16x128xf32> to vector<16x128xbf16>
    %cst_65 = arith.constant dense<0.000000e+00> : vector<16x256xf32>
    %103 = tpu.matmul %102, %100, %cst_65 {dimension_numbers = #tpu.dot_dimension_numbers<[1], [0], [0], [1], [0, 0, 1, 1], [], []>} : vector<16x128xbf16>, vector<128x256xbf16>, vector<16x256xf32> -> vector<16x256xf32>
    %104 = vector.broadcast %101 : vector<1x256xf32> to vector<16x256xf32>
    %105 = arith.addf %103, %104 : vector<16x256xf32>
    %106 = vector.extract_strided_slice %105 {offsets = [0, 0], sizes = [16, 128], strides = [1, 1]} : vector<16x256xf32> to vector<16x128xf32>
    %107 = vector.extract_strided_slice %105 {offsets = [0, 128], sizes = [16, 128], strides = [1, 1]} : vector<16x256xf32> to vector<16x128xf32>
    %c8_66 = arith.constant 8 : index
    %c0_67 = arith.constant 0 : index
    %108 = tpu.strided_load %arg35[%c8_66, %c0_67] {strides = array<i32: 2, 1>} : memref<48x128xf32, #tpu.memory_space<vmem>>, vector<16x128xf32>
    tpu.strided_store %arg35[%c8_66, %c0_67], %106 {strides = array<i32: 2, 1>} : memref<48x128xf32, #tpu.memory_space<vmem>>, vector<16x128xf32>
    %c9_68 = arith.constant 9 : index
    %c0_69 = arith.constant 0 : index
    %109 = tpu.strided_load %arg35[%c9_68, %c0_69] {strides = array<i32: 2, 1>} : memref<48x128xf32, #tpu.memory_space<vmem>>, vector<16x128xf32>
    tpu.strided_store %arg35[%c9_68, %c0_69], %107 {strides = array<i32: 2, 1>} : memref<48x128xf32, #tpu.memory_space<vmem>>, vector<16x128xf32>
    %c8_70 = arith.constant 8 : index
    %c0_71 = arith.constant 0 : index
    %110 = vector.load %arg35[%c8_70, %c0_71] : memref<48x128xf32, #tpu.memory_space<vmem>>, vector<32x128xf32>
    %c0_72 = arith.constant 0 : index
    %c0_73 = arith.constant 0 : index
    %111 = vector.load %arg16[%c0_72, %c0_73] : memref<384x256xbf16, #tpu.memory_space<vmem>>, vector<384x256xbf16>
    %c0_74 = arith.constant 0 : index
    %c0_75 = arith.constant 0 : index
    %112 = vector.load %arg17[%c0_74, %c0_75] : memref<1x256xf32, #tpu.memory_space<vmem>>, vector<1x256xf32>
    %c7_76 = arith.constant 7 : index
    %c0_77 = arith.constant 0 : index
    %113 = vector.load %arg35[%c7_76, %c0_77] : memref<48x128xf32, #tpu.memory_space<vmem>>, vector<32x128xf32>
    %c9_78 = arith.constant 9 : index
    %c0_79 = arith.constant 0 : index
    %114 = vector.load %arg35[%c9_78, %c0_79] : memref<48x128xf32, #tpu.memory_space<vmem>>, vector<32x128xf32>
    %115 = tpu.concatenate %113, %110, %114 in 1 : vector<32x128xf32>, vector<32x128xf32>, vector<32x128xf32> -> vector<32x384xf32>
    %116 = arith.truncf %115 : vector<32x384xf32> to vector<32x384xbf16>
    %cst_80 = arith.constant dense<0.000000e+00> : vector<32x256xf32>
    %117 = tpu.matmul %116, %111, %cst_80 {dimension_numbers = #tpu.dot_dimension_numbers<[1], [0], [0], [1], [0, 0, 1, 1], [], []>} : vector<32x384xbf16>, vector<384x256xbf16>, vector<32x256xf32> -> vector<32x256xf32>
    %118 = vector.broadcast %112 : vector<1x256xf32> to vector<32x256xf32>
    %119 = arith.addf %117, %118 : vector<32x256xf32>
    %120 = vector.extract_strided_slice %119 {offsets = [0, 0], sizes = [32, 128], strides = [1, 1]} : vector<32x256xf32> to vector<32x128xf32>
    %121 = vector.extract_strided_slice %119 {offsets = [0, 128], sizes = [32, 128], strides = [1, 1]} : vector<32x256xf32> to vector<32x128xf32>
    %122 = arith.negf %121 : vector<32x128xf32>
    %123 = math.exp %122 : vector<32x128xf32>
    %cst_81 = arith.constant 1.000000e+00 : f32
    %124 = vector.broadcast %cst_81 : f32 to vector<32x128xf32>
    %125 = arith.addf %124, %123 : vector<32x128xf32>
    %126 = arith.divf %124, %125 : vector<32x128xf32>
    %127 = arith.subf %120, %110 : vector<32x128xf32>
    %128 = arith.mulf %126, %127 : vector<32x128xf32>
    %129 = arith.addf %110, %128 : vector<32x128xf32>
    %c0_82 = arith.constant 0 : index
    %c0_83 = arith.constant 0 : index
    %130 = vector.load %arg18[%c0_82, %c0_83] : memref<384x256xbf16, #tpu.memory_space<vmem>>, vector<384x256xbf16>
    %c0_84 = arith.constant 0 : index
    %c0_85 = arith.constant 0 : index
    %131 = vector.load %arg19[%c0_84, %c0_85] : memref<1x256xf32, #tpu.memory_space<vmem>>, vector<1x256xf32>
    %c8_86 = arith.constant 8 : index
    %c0_87 = arith.constant 0 : index
    %132 = vector.load %arg35[%c8_86, %c0_87] : memref<48x128xf32, #tpu.memory_space<vmem>>, vector<32x128xf32>
    tpu.vector_store %arg35[%c8_86, %c0_87], %129 {strides = array<i32>} : memref<48x128xf32, #tpu.memory_space<vmem>>, vector<32x128xf32>,
    %c5_88 = arith.constant 5 : index
    %c0_89 = arith.constant 0 : index
    %133 = vector.load %arg35[%c5_88, %c0_89] : memref<48x128xf32, #tpu.memory_space<vmem>>, vector<32x128xf32>
    %c11_90 = arith.constant 11 : index
    %c0_91 = arith.constant 0 : index
    %134 = vector.load %arg35[%c11_90, %c0_91] : memref<48x128xf32, #tpu.memory_space<vmem>>, vector<32x128xf32>
    %135 = tpu.concatenate %133, %129, %134 in 1 : vector<32x128xf32>, vector<32x128xf32>, vector<32x128xf32> -> vector<32x384xf32>
    %136 = arith.truncf %135 : vector<32x384xf32> to vector<32x384xbf16>
    %cst_92 = arith.constant dense<0.000000e+00> : vector<32x256xf32>
    %137 = tpu.matmul %136, %130, %cst_92 {dimension_numbers = #tpu.dot_dimension_numbers<[1], [0], [0], [1], [0, 0, 1, 1], [], []>} : vector<32x384xbf16>, vector<384x256xbf16>, vector<32x256xf32> -> vector<32x256xf32>
    %138 = vector.broadcast %131 : vector<1x256xf32> to vector<32x256xf32>
    %139 = arith.addf %137, %138 : vector<32x256xf32>
    %140 = vector.extract_strided_slice %139 {offsets = [0, 0], sizes = [32, 128], strides = [1, 1]} : vector<32x256xf32> to vector<32x128xf32>
    %141 = vector.extract_strided_slice %139 {offsets = [0, 128], sizes = [32, 128], strides = [1, 1]} : vector<32x256xf32> to vector<32x128xf32>
    %142 = arith.negf %141 : vector<32x128xf32>
    %143 = math.exp %142 : vector<32x128xf32>
    %cst_93 = arith.constant 1.000000e+00 : f32
    %144 = vector.broadcast %cst_93 : f32 to vector<32x128xf32>
    %145 = arith.addf %144, %143 : vector<32x128xf32>
    %146 = arith.divf %144, %145 : vector<32x128xf32>
    %147 = arith.subf %140, %129 : vector<32x128xf32>
    %148 = arith.mulf %146, %147 : vector<32x128xf32>
    %149 = arith.addf %129, %148 : vector<32x128xf32>
    %c0_94 = arith.constant 0 : index
    %c0_95 = arith.constant 0 : index
    %150 = vector.load %arg20[%c0_94, %c0_95] : memref<128x128xbf16, #tpu.memory_space<vmem>>, vector<128x128xbf16>
    %c0_96 = arith.constant 0 : index
    %c0_97 = arith.constant 0 : index
    %151 = vector.load %arg21[%c0_96, %c0_97] : memref<1x128xf32, #tpu.memory_space<vmem>>, vector<1x128xf32>
    %152 = arith.truncf %149 : vector<32x128xf32> to vector<32x128xbf16>
    %cst_98 = arith.constant dense<0.000000e+00> : vector<32x128xf32>
    %153 = tpu.matmul %152, %150, %cst_98 {dimension_numbers = #tpu.dot_dimension_numbers<[1], [0], [0], [1], [0, 0, 1, 1], [], []>} : vector<32x128xbf16>, vector<128x128xbf16>, vector<32x128xf32> -> vector<32x128xf32>
    %154 = vector.broadcast %151 : vector<1x128xf32> to vector<32x128xf32>
    %155 = arith.addf %153, %154 : vector<32x128xf32>
    %c0_99 = arith.constant 0 : index
    %c0_100 = arith.constant 0 : index
    %156 = vector.load %arg22[%c0_99, %c0_100] : memref<384x256xbf16, #tpu.memory_space<vmem>>, vector<384x256xbf16>
    %c0_101 = arith.constant 0 : index
    %c0_102 = arith.constant 0 : index
    %157 = vector.load %arg23[%c0_101, %c0_102] : memref<1x256xf32, #tpu.memory_space<vmem>>, vector<1x256xf32>
    %c8_103 = arith.constant 8 : index
    %c0_104 = arith.constant 0 : index
    %158 = vector.load %arg35[%c8_103, %c0_104] : memref<48x128xf32, #tpu.memory_space<vmem>>, vector<32x128xf32>
    tpu.vector_store %arg35[%c8_103, %c0_104], %155 {strides = array<i32>} : memref<48x128xf32, #tpu.memory_space<vmem>>, vector<32x128xf32>,
    %c7_105 = arith.constant 7 : index
    %c0_106 = arith.constant 0 : index
    %159 = vector.load %arg35[%c7_105, %c0_106] : memref<48x128xf32, #tpu.memory_space<vmem>>, vector<32x128xf32>
    %c9_107 = arith.constant 9 : index
    %c0_108 = arith.constant 0 : index
    %160 = vector.load %arg35[%c9_107, %c0_108] : memref<48x128xf32, #tpu.memory_space<vmem>>, vector<32x128xf32>
    %161 = tpu.concatenate %159, %155, %160 in 1 : vector<32x128xf32>, vector<32x128xf32>, vector<32x128xf32> -> vector<32x384xf32>
    %162 = arith.truncf %161 : vector<32x384xf32> to vector<32x384xbf16>
    %cst_109 = arith.constant dense<0.000000e+00> : vector<32x256xf32>
    %163 = tpu.matmul %162, %156, %cst_109 {dimension_numbers = #tpu.dot_dimension_numbers<[1], [0], [0], [1], [0, 0, 1, 1], [], []>} : vector<32x384xbf16>, vector<384x256xbf16>, vector<32x256xf32> -> vector<32x256xf32>
    %164 = vector.broadcast %157 : vector<1x256xf32> to vector<32x256xf32>
    %165 = arith.addf %163, %164 : vector<32x256xf32>
    %166 = vector.extract_strided_slice %165 {offsets = [0, 0], sizes = [32, 128], strides = [1, 1]} : vector<32x256xf32> to vector<32x128xf32>
    %167 = vector.extract_strided_slice %165 {offsets = [0, 128], sizes = [32, 128], strides = [1, 1]} : vector<32x256xf32> to vector<32x128xf32>
    %168 = arith.negf %167 : vector<32x128xf32>
    %169 = math.exp %168 : vector<32x128xf32>
    %cst_110 = arith.constant 1.000000e+00 : f32
    %170 = vector.broadcast %cst_110 : f32 to vector<32x128xf32>
    %171 = arith.addf %170, %169 : vector<32x128xf32>
    %172 = arith.divf %170, %171 : vector<32x128xf32>
    %173 = arith.subf %166, %155 : vector<32x128xf32>
    %174 = arith.mulf %172, %173 : vector<32x128xf32>
    %175 = arith.addf %155, %174 : vector<32x128xf32>
    %c0_111 = arith.constant 0 : index
    %c0_112 = arith.constant 0 : index
    %176 = vector.load %arg24[%c0_111, %c0_112] : memref<384x256xbf16, #tpu.memory_space<vmem>>, vector<384x256xbf16>
    %c0_113 = arith.constant 0 : index
    %c0_114 = arith.constant 0 : index
    %177 = vector.load %arg25[%c0_113, %c0_114] : memref<1x256xf32, #tpu.memory_space<vmem>>, vector<1x256xf32>
    %c8_115 = arith.constant 8 : index
    %c0_116 = arith.constant 0 : index
    %178 = vector.load %arg35[%c8_115, %c0_116] : memref<48x128xf32, #tpu.memory_space<vmem>>, vector<32x128xf32>
    tpu.vector_store %arg35[%c8_115, %c0_116], %175 {strides = array<i32>} : memref<48x128xf32, #tpu.memory_space<vmem>>, vector<32x128xf32>,
    %c7_117 = arith.constant 7 : index
    %c0_118 = arith.constant 0 : index
    %179 = vector.load %arg35[%c7_117, %c0_118] : memref<48x128xf32, #tpu.memory_space<vmem>>, vector<32x128xf32>
    %c9_119 = arith.constant 9 : index
    %c0_120 = arith.constant 0 : index
    %180 = vector.load %arg35[%c9_119, %c0_120] : memref<48x128xf32, #tpu.memory_space<vmem>>, vector<32x128xf32>
    %181 = tpu.concatenate %179, %175, %180 in 1 : vector<32x128xf32>, vector<32x128xf32>, vector<32x128xf32> -> vector<32x384xf32>
    %182 = arith.truncf %181 : vector<32x384xf32> to vector<32x384xbf16>
    %cst_121 = arith.constant dense<0.000000e+00> : vector<32x256xf32>
    %183 = tpu.matmul %182, %176, %cst_121 {dimension_numbers = #tpu.dot_dimension_numbers<[1], [0], [0], [1], [0, 0, 1, 1], [], []>} : vector<32x384xbf16>, vector<384x256xbf16>, vector<32x256xf32> -> vector<32x256xf32>
    %184 = vector.broadcast %177 : vector<1x256xf32> to vector<32x256xf32>
    %185 = arith.addf %183, %184 : vector<32x256xf32>
    %186 = vector.extract_strided_slice %185 {offsets = [0, 0], sizes = [32, 128], strides = [1, 1]} : vector<32x256xf32> to vector<32x128xf32>
    %187 = vector.extract_strided_slice %185 {offsets = [0, 128], sizes = [32, 128], strides = [1, 1]} : vector<32x256xf32> to vector<32x128xf32>
    %188 = arith.negf %187 : vector<32x128xf32>
    %189 = math.exp %188 : vector<32x128xf32>
    %cst_122 = arith.constant 1.000000e+00 : f32
    %190 = vector.broadcast %cst_122 : f32 to vector<32x128xf32>
    %191 = arith.addf %190, %189 : vector<32x128xf32>
    %192 = arith.divf %190, %191 : vector<32x128xf32>
    %193 = arith.subf %186, %175 : vector<32x128xf32>
    %194 = arith.mulf %192, %193 : vector<32x128xf32>
    %195 = arith.addf %175, %194 : vector<32x128xf32>
    %c0_123 = arith.constant 0 : index
    %c0_124 = arith.constant 0 : index
    %196 = vector.load %arg26[%c0_123, %c0_124] : memref<128x128xbf16, #tpu.memory_space<vmem>>, vector<128x128xbf16>
    %c0_125 = arith.constant 0 : index
    %c0_126 = arith.constant 0 : index
    %197 = vector.load %arg27[%c0_125, %c0_126] : memref<1x128xf32, #tpu.memory_space<vmem>>, vector<1x128xf32>
    %198 = arith.truncf %195 : vector<32x128xf32> to vector<32x128xbf16>
    %cst_127 = arith.constant dense<0.000000e+00> : vector<32x128xf32>
    %199 = tpu.matmul %198, %196, %cst_127 {dimension_numbers = #tpu.dot_dimension_numbers<[1], [0], [0], [1], [0, 0, 1, 1], [], []>} : vector<32x128xbf16>, vector<128x128xbf16>, vector<32x128xf32> -> vector<32x128xf32>
    %200 = vector.broadcast %197 : vector<1x128xf32> to vector<32x128xf32>
    %201 = arith.addf %199, %200 : vector<32x128xf32>
    %c0_128 = arith.constant 0 : index
    %c0_129 = arith.constant 0 : index
    %202 = vector.load %arg28[%c0_128, %c0_129] : memref<128x128xbf16, #tpu.memory_space<vmem>>, vector<128x128xbf16>
    %c0_130 = arith.constant 0 : index
    %c0_131 = arith.constant 0 : index
    %203 = vector.load %arg29[%c0_130, %c0_131] : memref<1x128xf32, #tpu.memory_space<vmem>>, vector<1x128xf32>
    %204 = arith.truncf %201 : vector<32x128xf32> to vector<32x128xbf16>
    %cst_132 = arith.constant dense<0.000000e+00> : vector<32x128xf32>
    %205 = tpu.matmul %204, %202, %cst_132 {dimension_numbers = #tpu.dot_dimension_numbers<[1], [0], [0], [1], [0, 0, 1, 1], [], []>} : vector<32x128xbf16>, vector<128x128xbf16>, vector<32x128xf32> -> vector<32x128xf32>
    %206 = vector.broadcast %203 : vector<1x128xf32> to vector<32x128xf32>
    %207 = arith.addf %205, %206 : vector<32x128xf32>
    %cst_133 = arith.constant 0.000000e+00 : f32
    %208 = vector.broadcast %cst_133 : f32 to vector<32x128xf32>
    %209 = arith.maximumf %207, %208 : vector<32x128xf32>
    %c0_134 = arith.constant 0 : index
    %c0_135 = arith.constant 0 : index
    %210 = vector.load %arg30[%c0_134, %c0_135] : memref<128x128xbf16, #tpu.memory_space<vmem>>, vector<128x128xbf16>
    %c0_136 = arith.constant 0 : index
    %c0_137 = arith.constant 0 : index
    %211 = vector.load %arg31[%c0_136, %c0_137] : memref<1x128xf32, #tpu.memory_space<vmem>>, vector<1x128xf32>
    %212 = arith.truncf %209 : vector<32x128xf32> to vector<32x128xbf16>
    %cst_138 = arith.constant dense<0.000000e+00> : vector<32x128xf32>
    %213 = tpu.matmul %212, %210, %cst_138 {dimension_numbers = #tpu.dot_dimension_numbers<[1], [0], [0], [1], [0, 0, 1, 1], [], []>} : vector<32x128xbf16>, vector<128x128xbf16>, vector<32x128xf32> -> vector<32x128xf32>
    %214 = vector.broadcast %211 : vector<1x128xf32> to vector<32x128xf32>
    %215 = arith.addf %213, %214 : vector<32x128xf32>
    %cst_139 = arith.constant 0.000000e+00 : f32
    %216 = vector.broadcast %cst_139 : f32 to vector<32x128xf32>
    %217 = arith.maximumf %215, %216 : vector<32x128xf32>
    %c0_140 = arith.constant 0 : index
    %c0_141 = arith.constant 0 : index
    %218 = vector.load %arg32[%c0_140, %c0_141] : memref<128x128xbf16, #tpu.memory_space<vmem>>, vector<128x128xbf16>
    %c0_142 = arith.constant 0 : index
    %c0_143 = arith.constant 0 : index
    %219 = vector.load %arg33[%c0_142, %c0_143] : memref<1x128xf32, #tpu.memory_space<vmem>>, vector<1x128xf32>
    %220 = arith.truncf %217 : vector<32x128xf32> to vector<32x128xbf16>
    %cst_144 = arith.constant dense<0.000000e+00> : vector<32x128xf32>
    %221 = tpu.matmul %220, %218, %cst_144 {dimension_numbers = #tpu.dot_dimension_numbers<[1], [0], [0], [1], [0, 0, 1, 1], [], []>} : vector<32x128xbf16>, vector<128x128xbf16>, vector<32x128xf32> -> vector<32x128xf32>
    %222 = vector.broadcast %219 : vector<1x128xf32> to vector<32x128xf32>
    %223 = arith.addf %221, %222 : vector<32x128xf32>
    %224 = arith.negf %223 : vector<32x128xf32>
    %225 = math.exp %224 : vector<32x128xf32>
    %cst_145 = arith.constant 1.000000e+00 : f32
    %226 = vector.broadcast %cst_145 : f32 to vector<32x128xf32>
    %227 = arith.addf %226, %225 : vector<32x128xf32>
    %228 = arith.divf %226, %227 : vector<32x128xf32>
    %c0_146 = arith.constant 0 : index
    %c0_147 = arith.constant 0 : index
    %c0_148 = arith.constant 0 : index
    %229 = vector.load %arg34[%c0_146, %c0_147, %c0_148] : memref<1x32x128xf32, #tpu.memory_space<vmem>>, vector<1x32x128xf32>
    %230 = vector.shape_cast %229 : vector<1x32x128xf32> to vector<32x128xf32>
    %231 = vector.shape_cast %228 : vector<32x128xf32> to vector<1x32x128xf32>
    tpu.vector_store %arg34[%c0_146, %c0_147, %c0_148], %231 {strides = array<i32>} : memref<1x32x128xf32, #tpu.memory_space<vmem>>, vector<1x32x128xf32>,
    return
  }
  func.func @transform_0(%arg0: i32) -> (i32, i32, i32) {
    %c0_i32 = arith.constant 0 : i32
    %c0_i32_0 = arith.constant 0 : i32
    %c0_i32_1 = arith.constant 0 : i32
    return %arg0, %c0_i32, %c0_i32_0 : i32, i32, i32
  }
  func.func @transform_1(%arg0: i32) -> (i32, i32) {
    %c0_i32 = arith.constant 0 : i32
    %c0_i32_0 = arith.constant 0 : i32
    %c0_i32_1 = arith.constant 0 : i32
    return %c0_i32, %c0_i32_0 : i32, i32
  }
  func.func @transform_2(%arg0: i32) -> (i32, i32) {
    %c0_i32 = arith.constant 0 : i32
    %c0_i32_0 = arith.constant 0 : i32
    %c0_i32_1 = arith.constant 0 : i32
    return %c0_i32, %c0_i32_0 : i32, i32
  }
  func.func @transform_3(%arg0: i32) -> (i32, i32) {
    %c0_i32 = arith.constant 0 : i32
    %c0_i32_0 = arith.constant 0 : i32
    %c0_i32_1 = arith.constant 0 : i32
    return %c0_i32, %c0_i32_0 : i32, i32
  }
  func.func @transform_4(%arg0: i32) -> (i32, i32) {
    %c0_i32 = arith.constant 0 : i32
    %c0_i32_0 = arith.constant 0 : i32
    %c0_i32_1 = arith.constant 0 : i32
    return %c0_i32, %c0_i32_0 : i32, i32
  }
  func.func @transform_5(%arg0: i32) -> (i32, i32) {
    %c0_i32 = arith.constant 0 : i32
    %c0_i32_0 = arith.constant 0 : i32
    %c0_i32_1 = arith.constant 0 : i32
    return %c0_i32, %c0_i32_0 : i32, i32
  }
  func.func @transform_6(%arg0: i32) -> (i32, i32) {
    %c0_i32 = arith.constant 0 : i32
    %c0_i32_0 = arith.constant 0 : i32
    %c0_i32_1 = arith.constant 0 : i32
    return %c0_i32, %c0_i32_0 : i32, i32
  }
  func.func @transform_7(%arg0: i32) -> (i32, i32) {
    %c0_i32 = arith.constant 0 : i32
    %c0_i32_0 = arith.constant 0 : i32
    %c0_i32_1 = arith.constant 0 : i32
    return %c0_i32, %c0_i32_0 : i32, i32
  }
  func.func @transform_8(%arg0: i32) -> (i32, i32) {
    %c0_i32 = arith.constant 0 : i32
    %c0_i32_0 = arith.constant 0 : i32
    %c0_i32_1 = arith.constant 0 : i32
    return %c0_i32, %c0_i32_0 : i32, i32
  }
  func.func @transform_9(%arg0: i32) -> (i32, i32) {
    %c0_i32 = arith.constant 0 : i32
    %c0_i32_0 = arith.constant 0 : i32
    %c0_i32_1 = arith.constant 0 : i32
    return %c0_i32, %c0_i32_0 : i32, i32
  }
  func.func @transform_10(%arg0: i32) -> (i32, i32) {
    %c0_i32 = arith.constant 0 : i32
    %c0_i32_0 = arith.constant 0 : i32
    %c0_i32_1 = arith.constant 0 : i32
    return %c0_i32, %c0_i32_0 : i32, i32
  }
  func.func @transform_11(%arg0: i32) -> (i32, i32) {
    %c0_i32 = arith.constant 0 : i32
    %c0_i32_0 = arith.constant 0 : i32
    %c0_i32_1 = arith.constant 0 : i32
    return %c0_i32, %c0_i32_0 : i32, i32
  }
  func.func @transform_12(%arg0: i32) -> (i32, i32) {
    %c0_i32 = arith.constant 0 : i32
    %c0_i32_0 = arith.constant 0 : i32
    %c0_i32_1 = arith.constant 0 : i32
    return %c0_i32, %c0_i32_0 : i32, i32
  }
  func.func @transform_13(%arg0: i32) -> (i32, i32) {
    %c0_i32 = arith.constant 0 : i32
    %c0_i32_0 = arith.constant 0 : i32
    %c0_i32_1 = arith.constant 0 : i32
    return %c0_i32, %c0_i32_0 : i32, i32
  }
  func.func @transform_14(%arg0: i32) -> (i32, i32) {
    %c0_i32 = arith.constant 0 : i32
    %c0_i32_0 = arith.constant 0 : i32
    %c0_i32_1 = arith.constant 0 : i32
    return %c0_i32, %c0_i32_0 : i32, i32
  }
  func.func @transform_15(%arg0: i32) -> (i32, i32) {
    %c0_i32 = arith.constant 0 : i32
    %c0_i32_0 = arith.constant 0 : i32
    %c0_i32_1 = arith.constant 0 : i32
    return %c0_i32, %c0_i32_0 : i32, i32
  }
  func.func @transform_16(%arg0: i32) -> (i32, i32) {
    %c0_i32 = arith.constant 0 : i32
    %c0_i32_0 = arith.constant 0 : i32
    %c0_i32_1 = arith.constant 0 : i32
    return %c0_i32, %c0_i32_0 : i32, i32
  }
  func.func @transform_17(%arg0: i32) -> (i32, i32) {
    %c0_i32 = arith.constant 0 : i32
    %c0_i32_0 = arith.constant 0 : i32
    %c0_i32_1 = arith.constant 0 : i32
    return %c0_i32, %c0_i32_0 : i32, i32
  }
  func.func @transform_18(%arg0: i32) -> (i32, i32) {
    %c0_i32 = arith.constant 0 : i32
    %c0_i32_0 = arith.constant 0 : i32
    %c0_i32_1 = arith.constant 0 : i32
    return %c0_i32, %c0_i32_0 : i32, i32
  }
  func.func @transform_19(%arg0: i32) -> (i32, i32) {
    %c0_i32 = arith.constant 0 : i32
    %c0_i32_0 = arith.constant 0 : i32
    %c0_i32_1 = arith.constant 0 : i32
    return %c0_i32, %c0_i32_0 : i32, i32
  }
  func.func @transform_20(%arg0: i32) -> (i32, i32) {
    %c0_i32 = arith.constant 0 : i32
    %c0_i32_0 = arith.constant 0 : i32
    %c0_i32_1 = arith.constant 0 : i32
    return %c0_i32, %c0_i32_0 : i32, i32
  }
  func.func @transform_21(%arg0: i32) -> (i32, i32) {
    %c0_i32 = arith.constant 0 : i32
    %c0_i32_0 = arith.constant 0 : i32
    %c0_i32_1 = arith.constant 0 : i32
    return %c0_i32, %c0_i32_0 : i32, i32
  }
  func.func @transform_22(%arg0: i32) -> (i32, i32) {
    %c0_i32 = arith.constant 0 : i32
    %c0_i32_0 = arith.constant 0 : i32
    %c0_i32_1 = arith.constant 0 : i32
    return %c0_i32, %c0_i32_0 : i32, i32
  }
  func.func @transform_23(%arg0: i32) -> (i32, i32) {
    %c0_i32 = arith.constant 0 : i32
    %c0_i32_0 = arith.constant 0 : i32
    %c0_i32_1 = arith.constant 0 : i32
    return %c0_i32, %c0_i32_0 : i32, i32
  }
  func.func @transform_24(%arg0: i32) -> (i32, i32) {
    %c0_i32 = arith.constant 0 : i32
    %c0_i32_0 = arith.constant 0 : i32
    %c0_i32_1 = arith.constant 0 : i32
    return %c0_i32, %c0_i32_0 : i32, i32
  }
  func.func @transform_25(%arg0: i32) -> (i32, i32) {
    %c0_i32 = arith.constant 0 : i32
    %c0_i32_0 = arith.constant 0 : i32
    %c0_i32_1 = arith.constant 0 : i32
    return %c0_i32, %c0_i32_0 : i32, i32
  }
  func.func @transform_26(%arg0: i32) -> (i32, i32) {
    %c0_i32 = arith.constant 0 : i32
    %c0_i32_0 = arith.constant 0 : i32
    %c0_i32_1 = arith.constant 0 : i32
    return %c0_i32, %c0_i32_0 : i32, i32
  }
  func.func @transform_27(%arg0: i32) -> (i32, i32) {
    %c0_i32 = arith.constant 0 : i32
    %c0_i32_0 = arith.constant 0 : i32
    %c0_i32_1 = arith.constant 0 : i32
    return %c0_i32, %c0_i32_0 : i32, i32
  }
  func.func @transform_28(%arg0: i32) -> (i32, i32) {
    %c0_i32 = arith.constant 0 : i32
    %c0_i32_0 = arith.constant 0 : i32
    %c0_i32_1 = arith.constant 0 : i32
    return %c0_i32, %c0_i32_0 : i32, i32
  }
  func.func @transform_29(%arg0: i32) -> (i32, i32) {
    %c0_i32 = arith.constant 0 : i32
    %c0_i32_0 = arith.constant 0 : i32
    %c0_i32_1 = arith.constant 0 : i32
    return %c0_i32, %c0_i32_0 : i32, i32
  }
  func.func @transform_30(%arg0: i32) -> (i32, i32) {
    %c0_i32 = arith.constant 0 : i32
    %c0_i32_0 = arith.constant 0 : i32
    %c0_i32_1 = arith.constant 0 : i32
    return %c0_i32, %c0_i32_0 : i32, i32
  }
  func.func @transform_31(%arg0: i32) -> (i32, i32) {
    %c0_i32 = arith.constant 0 : i32
    %c0_i32_0 = arith.constant 0 : i32
    %c0_i32_1 = arith.constant 0 : i32
    return %c0_i32, %c0_i32_0 : i32, i32
  }
  func.func @transform_32(%arg0: i32) -> (i32, i32) {
    %c0_i32 = arith.constant 0 : i32
    %c0_i32_0 = arith.constant 0 : i32
    %c0_i32_1 = arith.constant 0 : i32
    return %c0_i32, %c0_i32_0 : i32, i32
  }
  func.func @transform_33(%arg0: i32) -> (i32, i32, i32) {
    %c0_i32 = arith.constant 0 : i32
    %c0_i32_0 = arith.constant 0 : i32
    %c0_i32_1 = arith.constant 0 : i32
    return %arg0, %c0_i32, %c0_i32_0 : i32, i32, i32
  }
}

</mosaic_0001>

<llo_original>
// kernel: converter_forward.1
$region0: #{converter_forward.1}
  #allocation0 [shape = 'u32[]', space=smem, size = 0x4, offset = 0x4, fixed_abs, tag = 'smem constant byte address 0x4 - core index']
  #allocation1 [shape = 'u32[144,128]{1,0:T(1,128)}', space=vmem, size = 0x12000, scoped, tag = 'internal scratch']
  #allocation2 [shape = 'f32[48,128]{1,0:T(8,128)}', space=vmem, size = 0x6000, scoped, tag = 'scratch operand']
  %s0 = inlined_call_operand.smem [shape: u32[34], index: -1, kind: input, shape index: {}]
  %s1 = sld [smem:[%s0]]
  %s2 = scalar_lea.smem %s0, 1
  %s3 = sld [smem:[%s2]]
  %s4 = scalar_lea.smem %s0, 2
  %s5 = sld [smem:[%s4]]
  %s6 = scalar_lea.smem %s0, 3
  %s7 = sld [smem:[%s6]]
  %s8 = scalar_lea.smem %s0, 4
  %s9 = sld [smem:[%s8]]
  %s10 = scalar_lea.smem %s0, 5
  %s11 = sld [smem:[%s10]]
  %s12 = scalar_lea.smem %s0, 6
  %s13 = sld [smem:[%s12]]
  %s14 = scalar_lea.smem %s0, 7
  %s15 = sld [smem:[%s14]]
  %s16 = scalar_lea.smem %s0, 8
  %s17 = sld [smem:[%s16]]
  %s18 = scalar_lea.smem %s0, 9
  %s19 = sld [smem:[%s18]]
  %s20 = scalar_lea.smem %s0, 10
  %s21 = sld [smem:[%s20]]
  %s22 = scalar_lea.smem %s0, 11
  %s23 = sld [smem:[%s22]]
  %s24 = scalar_lea.smem %s0, 12
  %s25 = sld [smem:[%s24]]
  %s26 = scalar_lea.smem %s0, 13
  %s27 = sld [smem:[%s26]]
  %s28 = scalar_lea.smem %s0, 14
  %s29 = sld [smem:[%s28]]
  %s30 = scalar_lea.smem %s0, 15
  %s31 = sld [smem:[%s30]]
  %s32 = scalar_lea.smem %s0, 16
  %s33 = sld [smem:[%s32]]
  %s34 = scalar_lea.smem %s0, 17
  %s35 = sld [smem:[%s34]]
  %s36 = scalar_lea.smem %s0, 18
  %s37 = sld [smem:[%s36]]
  %s38 = scalar_lea.smem %s0, 19
  %s39 = sld [smem:[%s38]]
  %s40 = scalar_lea.smem %s0, 20
  %s41 = sld [smem:[%s40]]
  %s42 = scalar_lea.smem %s0, 21
  %s43 = sld [smem:[%s42]]
  %s44 = scalar_lea.smem %s0, 22
  %s45 = sld [smem:[%s44]]
  %s46 = scalar_lea.smem %s0, 23
  %s47 = sld [smem:[%s46]]
  %s48 = scalar_lea.smem %s0, 24
  %s49 = sld [smem:[%s48]]
  %s50 = scalar_lea.smem %s0, 25
  %s51 = sld [smem:[%s50]]
  %s52 = scalar_lea.smem %s0, 26
  %s53 = sld [smem:[%s52]]
  %s54 = scalar_lea.smem %s0, 27
  %s55 = sld [smem:[%s54]]
  %s56 = scalar_lea.smem %s0, 28
  %s57 = sld [smem:[%s56]]
  %s58 = scalar_lea.smem %s0, 29
  %s59 = sld [smem:[%s58]]
  %s60 = scalar_lea.smem %s0, 30
  %s61 = sld [smem:[%s60]]
  %s62 = scalar_lea.smem %s0, 31
  %s63 = sld [smem:[%s62]]
  %s64 = scalar_lea.smem %s0, 32
  %s65 = sld [smem:[%s64]]
  %s66 = scalar_lea.smem %s0, 33
  %s67 = sld [smem:[%s66]]
  %s68 = sld [smem:[#allocation0]]
  $region237: #{converter_forward.1} parent=0
    _
  %s70 = ssub.s32 1, %s68
  %s71 = scalar_select 0, %s70, %s68
  $region1: #{converter_forward.1} parent=0
    #allocation3 [shape = 'u8[8192]{0}', space=vmem, size = 0x2000, scoped, tag = 'input window, operand 0']
    #allocation4 [shape = 's32[2]{0}', space=sflag, size = 0x8, scoped, tag = 'scoped memory for converter_forward.1']
    #allocation5 [shape = 'u8[8192]{0}', space=vmem, size = 0x2000, scoped, tag = 'input window, operand 1, single buffered']
    #allocation6 [shape = 's32[1]{0}', space=sflag, size = 0x4, scoped, tag = 'scoped memory for converter_forward.1']
    #allocation7 [shape = 'u8[512]{0}', space=vmem, size = 0x400, scoped, tag = 'input window, operand 2, single buffered']
    #allocation8 [shape = 'u8[196608]{0}', space=vmem, size = 0x30000, scoped, tag = 'input window, operand 3, single buffered']
    #allocation9 [shape = 's32[1]{0}', space=sflag, size = 0x4, scoped, tag = 'scoped memory for converter_forward.1']
    #allocation10 [shape = 'u8[196608]{0}', space=vmem, size = 0x30000, scoped, tag = 'input window, operand 5, single buffered']
    #allocation11 [shape = 'u8[65536]{0}', space=vmem, size = 0x10000, scoped, tag = 'input window, operand 7, single buffered']
    #allocation12 [shape = 's32[1]{0}', space=sflag, size = 0x4, scoped, tag = 'scoped memory for converter_forward.1']
    #allocation13 [shape = 'u8[196608]{0}', space=vmem, size = 0x30000, scoped, tag = 'input window, operand 9, single buffered']
    #allocation14 [shape = 'u8[196608]{0}', space=vmem, size = 0x30000, scoped, tag = 'input window, operand 11, single buffered']
    #allocation15 [shape = 's32[1]{0}', space=sflag, size = 0x4, scoped, tag = 'scoped memory for converter_forward.1']
    #allocation16 [shape = 'u8[65536]{0}', space=vmem, size = 0x10000, scoped, tag = 'input window, operand 13, single buffered']
    #allocation17 [shape = 'u8[196608]{0}', space=vmem, size = 0x30000, scoped, tag = 'input window, operand 15, single buffered']
    #allocation18 [shape = 's32[1]{0}', space=sflag, size = 0x4, scoped, tag = 'scoped memory for converter_forward.1']
    #allocation19 [shape = 'u8[196608]{0}', space=vmem, size = 0x30000, scoped, tag = 'input window, operand 17, single buffered']
    #allocation20 [shape = 'u8[32768]{0}', space=vmem, size = 0x8000, scoped, tag = 'input window, operand 19, single buffered']
    #allocation21 [shape = 's32[1]{0}', space=sflag, size = 0x4, scoped, tag = 'scoped memory for converter_forward.1']
    #allocation22 [shape = 'u8[196608]{0}', space=vmem, size = 0x30000, scoped, tag = 'input window, operand 21, single buffered']
    #allocation23 [shape = 'u8[196608]{0}', space=vmem, size = 0x30000, scoped, tag = 'input window, operand 23, single buffered']
    #allocation24 [shape = 's32[1]{0}', space=sflag, size = 0x4, scoped, tag = 'scoped memory for converter_forward.1']
    #allocation25 [shape = 'u8[32768]{0}', space=vmem, size = 0x8000, scoped, tag = 'input window, operand 25, single buffered']
    #allocation26 [shape = 'u8[32768]{0}', space=vmem, size = 0x8000, scoped, tag = 'input window, operand 27, single buffered']
    #allocation27 [shape = 's32[1]{0}', space=sflag, size = 0x4, scoped, tag = 'scoped memory for converter_forward.1']
    #allocation28 [shape = 'u8[32768]{0}', space=vmem, size = 0x8000, scoped, tag = 'input window, operand 29, single buffered']
    #allocation29 [shape = 'u8[32768]{0}', space=vmem, size = 0x8000, scoped, tag = 'input window, operand 31, single buffered']
    #allocation30 [shape = 's32[1]{0}', space=sflag, size = 0x4, scoped, tag = 'scoped memory for converter_forward.1']
    %72 = vsyncpa [#allocation4], 0
    %s73 = scalar_lea.sflag [#allocation4], 1
    %74 = vsyncpa %s73, 0
    %75 = vsyncpa [#allocation6], 0
    %76 = vsyncpa [#allocation9], 0
    %77 = vsyncpa [#allocation12], 0
    %78 = vsyncpa [#allocation15], 0
    %79 = vsyncpa [#allocation18], 0
    %80 = vsyncpa [#allocation21], 0
    %81 = vsyncpa [#allocation24], 0
    %82 = vsyncpa [#allocation27], 0
    %83 = vsyncpa [#allocation30], 0
    loop: start=0, step=1, limit=4
    $region2: #{converter_forward.1} parent=1 // loop_pre_header
      _
    $region3: #{converter_forward.1} parent=1 // loop_header
      %s85 = sphi 0, %s89
      %p86 = scmp.ge.s32.totalorder %s85, 4
      %s95 = sphi 0, %s97
      %s98 = sphi 0, %s95
      %s99 = sphi 0, %s98
      %s115 = sphi 0, %s99
      %s119 = sphi 0, %s119
      %s121 = sphi 0, %s119
      %s122 = sphi 0, %s121
      %s136 = sphi 0, %s122
      %s140 = sphi 0, %s140
      %s142 = sphi 0, %s140
      %s143 = sphi 0, %s142
      %s157 = sphi 0, %s143
      %s161 = sphi 0, %s161
      %s163 = sphi 0, %s161
      %s164 = sphi 0, %s163
      %s178 = sphi 0, %s164
      %s182 = sphi 0, %s182
      %s184 = sphi 0, %s182
      %s185 = sphi 0, %s184
      %s199 = sphi 0, %s185
      %s203 = sphi 0, %s203
      %s205 = sphi 0, %s203
      %s206 = sphi 0, %s205
      %s220 = sphi 0, %s206
      %s224 = sphi 0, %s224
      %s226 = sphi 0, %s224
      %s227 = sphi 0, %s226
      %s241 = sphi 0, %s227
      %s245 = sphi 0, %s245
      %s247 = sphi 0, %s245
      %s248 = sphi 0, %s247
      %s262 = sphi 0, %s248
      %s266 = sphi 0, %s266
      %s268 = sphi 0, %s266
      %s269 = sphi 0, %s268
      %s283 = sphi 0, %s269
      %s287 = sphi 0, %s287
      %s289 = sphi 0, %s287
      %s290 = sphi 0, %s289
      %s304 = sphi 0, %s290
      %s308 = sphi 0, %s308
      %s310 = sphi 0, %s308
      %s311 = sphi 0, %s310
      %s325 = sphi 0, %s311
      %s329 = sphi 0, %s329
      %s331 = sphi 0, %s329
      %s332 = sphi 0, %s331
      %s346 = sphi 0, %s332
      %s350 = sphi 0, %s350
      %s352 = sphi 0, %s350
      %s353 = sphi 0, %s352
      %s367 = sphi 0, %s353
      %s371 = sphi 0, %s371
      %s373 = sphi 0, %s371
      %s374 = sphi 0, %s373
      %s388 = sphi 0, %s374
      %s392 = sphi 0, %s392
      %s394 = sphi 0, %s392
      %s395 = sphi 0, %s394
      %s409 = sphi 0, %s395
      %s413 = sphi 0, %s413
      %s415 = sphi 0, %s413
      %s416 = sphi 0, %s415
      %s430 = sphi 0, %s416
      %s434 = sphi 0, %s434
      %s436 = sphi 0, %s434
      %s437 = sphi 0, %s436
      %s451 = sphi 0, %s437
      %s455 = sphi 0, %s455
      %s457 = sphi 0, %s455
      %s458 = sphi 0, %s457
      %s472 = sphi 0, %s458
      %s476 = sphi 0, %s476
      %s478 = sphi 0, %s476
      %s479 = sphi 0, %s478
      %s493 = sphi 0, %s479
      %s497 = sphi 0, %s497
      %s499 = sphi 0, %s497
      %s500 = sphi 0, %s499
      %s514 = sphi 0, %s500
      %s518 = sphi 0, %s518
      %s520 = sphi 0, %s518
      %s521 = sphi 0, %s520
      %s535 = sphi 0, %s521
      %s539 = sphi 0, %s539
      %s541 = sphi 0, %s539
      %s542 = sphi 0, %s541
      %s556 = sphi 0, %s542
      %s560 = sphi 0, %s560
      %s562 = sphi 0, %s560
      %s563 = sphi 0, %s562
      %s577 = sphi 0, %s563
      %s581 = sphi 0, %s581
      %s583 = sphi 0, %s581
      %s584 = sphi 0, %s583
      %s598 = sphi 0, %s584
      %s602 = sphi 0, %s602
      %s604 = sphi 0, %s602
      %s605 = sphi 0, %s604
      %s619 = sphi 0, %s605
      %s623 = sphi 0, %s623
      %s625 = sphi 0, %s623
      %s626 = sphi 0, %s625
      %s640 = sphi 0, %s626
      %s644 = sphi 0, %s644
      %s646 = sphi 0, %s644
      %s647 = sphi 0, %s646
      %s661 = sphi 0, %s647
      %s665 = sphi 0, %s665
      %s667 = sphi 0, %s665
      %s668 = sphi 0, %s667
      %s682 = sphi 0, %s668
      %s686 = sphi 0, %s686
      %s688 = sphi 0, %s686
      %s689 = sphi 0, %s688
      %s703 = sphi 0, %s689
      %s707 = sphi 0, %s707
      %s709 = sphi 0, %s707
      %s710 = sphi 0, %s709
      %s724 = sphi 0, %s710
      %s728 = sphi 0, %s728
      %s730 = sphi 0, %s728
      %s731 = sphi 0, %s730
      %s745 = sphi 0, %s731
      %s749 = sphi 0, %s749
      %s751 = sphi 0, %s749
      %s752 = sphi 0, %s751
      %s766 = sphi 0, %s752
      %s770 = sphi 0, %s770
      %s772 = sphi 0, %s770
      %s773 = sphi 0, %s772
      %s787 = sphi 0, %s773
      %s793 = sphi 0, %s795
      %s796 = sphi 0, %s793
      %s797 = sphi 0, %s796
      %s813 = sphi 0, %s797
    $region4: #{converter_forward.1} parent=1 // loop_header_branch
      %88 = sbr.rel (%p86) target = $region8
    $region5: #{converter_forward.1} parent=1 // loop_body
      %s90 = ssub.s32 %s85, 1
      %s91 = ssub.s32 %s85, 2
      %s92 = sadd.s32 %s85, 1
      %s93 = ssub.s32 %s85, %s92
      %p94 = scmp.eq.s32.totalorder %s93, 0
      %s96 = sadd.s32 %s95, 1
      %s97 = scalar_select %p94, %s95, %s96
      %p100 = pneg %p94
      %p101 = scmp.eq.s32.totalorder %s85, 1
      %p102 = por %p100, %p101
      %p103 = scmp.ne.s32.totalorder %s95, %s98
      %p104 = scmp.eq.s32.totalorder %s85, 0
      %p105 = por %p103, %p104
      %p106 = scmp.ne.s32.totalorder %s95, %s98
      %p107 = scmp.eq.s32.totalorder %s90, 1
      %p108 = por %p106, %p107
      %p109 = scmp.ne.s32.totalorder %s98, %s99
      %p110 = scmp.eq.s32.totalorder %s90, 0
      %p111 = por %p109, %p110
      %p112 = scmp.ne.s32.totalorder %s98, %s99
      %p113 = scmp.eq.s32.totalorder %s91, 1
      %p114 = por %p112, %p113
      %p116 = scmp.ne.s32.totalorder %s99, %s115
      %p117 = scmp.eq.s32.totalorder %s91, 0
      %p118 = por %p116, %p117
      %s120 = sadd.s32 %s119, 1
      %p123 = scmp.eq.s32.totalorder %s85, 1
      %p124 = scmp.ne.s32.totalorder %s119, %s121
      %p125 = scmp.eq.s32.totalorder %s85, 0
      %p126 = por %p124, %p125
      %p127 = scmp.ne.s32.totalorder %s119, %s121
      %p128 = scmp.eq.s32.totalorder %s90, 1
      %p129 = por %p127, %p128
      %p130 = scmp.ne.s32.totalorder %s121, %s122
      %p131 = scmp.eq.s32.totalorder %s90, 0
      %p132 = por %p130, %p131
      %p133 = scmp.ne.s32.totalorder %s121, %s122
      %p134 = scmp.eq.s32.totalorder %s91, 1
      %p135 = por %p133, %p134
      %p137 = scmp.ne.s32.totalorder %s122, %s136
      %p138 = scmp.eq.s32.totalorder %s91, 0
      %p139 = por %p137, %p138
      %s141 = sadd.s32 %s140, 1
      %p144 = scmp.eq.s32.totalorder %s85, 1
      %p145 = scmp.ne.s32.totalorder %s140, %s142
      %p146 = scmp.eq.s32.totalorder %s85, 0
      %p147 = por %p145, %p146
      %p148 = scmp.ne.s32.totalorder %s140, %s142
      %p149 = scmp.eq.s32.totalorder %s90, 1
      %p150 = por %p148, %p149
      %p151 = scmp.ne.s32.totalorder %s142, %s143
      %p152 = scmp.eq.s32.totalorder %s90, 0
      %p153 = por %p151, %p152
      %p154 = scmp.ne.s32.totalorder %s142, %s143
      %p155 = scmp.eq.s32.totalorder %s91, 1
      %p156 = por %p154, %p155
      %p158 = scmp.ne.s32.totalorder %s143, %s157
      %p159 = scmp.eq.s32.totalorder %s91, 0
      %p160 = por %p158, %p159
      %s162 = sadd.s32 %s161, 1
      %p165 = scmp.eq.s32.totalorder %s85, 1
      %p166 = scmp.ne.s32.totalorder %s161, %s163
      %p167 = scmp.eq.s32.totalorder %s85, 0
      %p168 = por %p166, %p167
      %p169 = scmp.ne.s32.totalorder %s161, %s163
      %p170 = scmp.eq.s32.totalorder %s90, 1
      %p171 = por %p169, %p170
      %p172 = scmp.ne.s32.totalorder %s163, %s164
      %p173 = scmp.eq.s32.totalorder %s90, 0
      %p174 = por %p172, %p173
      %p175 = scmp.ne.s32.totalorder %s163, %s164
      %p176 = scmp.eq.s32.totalorder %s91, 1
      %p177 = por %p175, %p176
      %p179 = scmp.ne.s32.totalorder %s164, %s178
      %p180 = scmp.eq.s32.totalorder %s91, 0
      %p181 = por %p179, %p180
      %s183 = sadd.s32 %s182, 1
      %p186 = scmp.eq.s32.totalorder %s85, 1
      %p187 = scmp.ne.s32.totalorder %s182, %s184
      %p188 = scmp.eq.s32.totalorder %s85, 0
      %p189 = por %p187, %p188
      %p190 = scmp.ne.s32.totalorder %s182, %s184
      %p191 = scmp.eq.s32.totalorder %s90, 1
      %p192 = por %p190, %p191
      %p193 = scmp.ne.s32.totalorder %s184, %s185
      %p194 = scmp.eq.s32.totalorder %s90, 0
      %p195 = por %p193, %p194
      %p196 = scmp.ne.s32.totalorder %s184, %s185
      %p197 = scmp.eq.s32.totalorder %s91, 1
      %p198 = por %p196, %p197
      %p200 = scmp.ne.s32.totalorder %s185, %s199
      %p201 = scmp.eq.s32.totalorder %s91, 0
      %p202 = por %p200, %p201
      %s204 = sadd.s32 %s203, 1
      %p207 = scmp.eq.s32.totalorder %s85, 1
      %p208 = scmp.ne.s32.totalorder %s203, %s205
      %p209 = scmp.eq.s32.totalorder %s85, 0
      %p210 = por %p208, %p209
      %p211 = scmp.ne.s32.totalorder %s203, %s205
      %p212 = scmp.eq.s32.totalorder %s90, 1
      %p213 = por %p211, %p212
      %p214 = scmp.ne.s32.totalorder %s205, %s206
      %p215 = scmp.eq.s32.totalorder %s90, 0
      %p216 = por %p214, %p215
      %p217 = scmp.ne.s32.totalorder %s205, %s206
      %p218 = scmp.eq.s32.totalorder %s91, 1
      %p219 = por %p217, %p218
      %p221 = scmp.ne.s32.totalorder %s206, %s220
      %p222 = scmp.eq.s32.totalorder %s91, 0
      %p223 = por %p221, %p222
      %s225 = sadd.s32 %s224, 1
      %p228 = scmp.eq.s32.totalorder %s85, 1
      %p229 = scmp.ne.s32.totalorder %s224, %s226
      %p230 = scmp.eq.s32.totalorder %s85, 0
      %p231 = por %p229, %p230
      %p232 = scmp.ne.s32.totalorder %s224, %s226
      %p233 = scmp.eq.s32.totalorder %s90, 1
      %p234 = por %p232, %p233
      %p235 = scmp.ne.s32.totalorder %s226, %s227
      %p236 = scmp.eq.s32.totalorder %s90, 0
      %p237 = por %p235, %p236
      %p238 = scmp.ne.s32.totalorder %s226, %s227
      %p239 = scmp.eq.s32.totalorder %s91, 1
      %p240 = por %p238, %p239
      %p242 = scmp.ne.s32.totalorder %s227, %s241
      %p243 = scmp.eq.s32.totalorder %s91, 0
      %p244 = por %p242, %p243
      %s246 = sadd.s32 %s245, 1
      %p249 = scmp.eq.s32.totalorder %s85, 1
      %p250 = scmp.ne.s32.totalorder %s245, %s247
      %p251 = scmp.eq.s32.totalorder %s85, 0
      %p252 = por %p250, %p251
      %p253 = scmp.ne.s32.totalorder %s245, %s247
      %p254 = scmp.eq.s32.totalorder %s90, 1
      %p255 = por %p253, %p254
      %p256 = scmp.ne.s32.totalorder %s247, %s248
      %p257 = scmp.eq.s32.totalorder %s90, 0
      %p258 = por %p256, %p257
      %p259 = scmp.ne.s32.totalorder %s247, %s248
      %p260 = scmp.eq.s32.totalorder %s91, 1
      %p261 = por %p259, %p260
      %p263 = scmp.ne.s32.totalorder %s248, %s262
      %p264 = scmp.eq.s32.totalorder %s91, 0
      %p265 = por %p263, %p264
      %s267 = sadd.s32 %s266, 1
      %p270 = scmp.eq.s32.totalorder %s85, 1
      %p271 = scmp.ne.s32.totalorder %s266, %s268
      %p272 = scmp.eq.s32.totalorder %s85, 0
      %p273 = por %p271, %p272
      %p274 = scmp.ne.s32.totalorder %s266, %s268
      %p275 = scmp.eq.s32.totalorder %s90, 1
      %p276 = por %p274, %p275
      %p277 = scmp.ne.s32.totalorder %s268, %s269
      %p278 = scmp.eq.s32.totalorder %s90, 0
      %p279 = por %p277, %p278
      %p280 = scmp.ne.s32.totalorder %s268, %s269
      %p281 = scmp.eq.s32.totalorder %s91, 1
      %p282 = por %p280, %p281
      %p284 = scmp.ne.s32.totalorder %s269, %s283
      %p285 = scmp.eq.s32.totalorder %s91, 0
      %p286 = por %p284, %p285
      %s288 = sadd.s32 %s287, 1
      %p291 = scmp.eq.s32.totalorder %s85, 1
      %p292 = scmp.ne.s32.totalorder %s287, %s289
      %p293 = scmp.eq.s32.totalorder %s85, 0
      %p294 = por %p292, %p293
      %p295 = scmp.ne.s32.totalorder %s287, %s289
      %p296 = scmp.eq.s32.totalorder %s90, 1
      %p297 = por %p295, %p296
      %p298 = scmp.ne.s32.totalorder %s289, %s290
      %p299 = scmp.eq.s32.totalorder %s90, 0
      %p300 = por %p298, %p299
      %p301 = scmp.ne.s32.totalorder %s289, %s290
      %p302 = scmp.eq.s32.totalorder %s91, 1
      %p303 = por %p301, %p302
      %p305 = scmp.ne.s32.totalorder %s290, %s304
      %p306 = scmp.eq.s32.totalorder %s91, 0
      %p307 = por %p305, %p306
      %s309 = sadd.s32 %s308, 1
      %p312 = scmp.eq.s32.totalorder %s85, 1
      %p313 = scmp.ne.s32.totalorder %s308, %s310
      %p314 = scmp.eq.s32.totalorder %s85, 0
      %p315 = por %p313, %p314
      %p316 = scmp.ne.s32.totalorder %s308, %s310
      %p317 = scmp.eq.s32.totalorder %s90, 1
      %p318 = por %p316, %p317
      %p319 = scmp.ne.s32.totalorder %s310, %s311
      %p320 = scmp.eq.s32.totalorder %s90, 0
      %p321 = por %p319, %p320
      %p322 = scmp.ne.s32.totalorder %s310, %s311
      %p323 = scmp.eq.s32.totalorder %s91, 1
      %p324 = por %p322, %p323
      %p326 = scmp.ne.s32.totalorder %s311, %s325
      %p327 = scmp.eq.s32.totalorder %s91, 0
      %p328 = por %p326, %p327
      %s330 = sadd.s32 %s329, 1
      %p333 = scmp.eq.s32.totalorder %s85, 1
      %p334 = scmp.ne.s32.totalorder %s329, %s331
      %p335 = scmp.eq.s32.totalorder %s85, 0
      %p336 = por %p334, %p335
      %p337 = scmp.ne.s32.totalorder %s329, %s331
      %p338 = scmp.eq.s32.totalorder %s90, 1
      %p339 = por %p337, %p338
      %p340 = scmp.ne.s32.totalorder %s331, %s332
      %p341 = scmp.eq.s32.totalorder %s90, 0
      %p342 = por %p340, %p341
      %p343 = scmp.ne.s32.totalorder %s331, %s332
      %p344 = scmp.eq.s32.totalorder %s91, 1
      %p345 = por %p343, %p344
      %p347 = scmp.ne.s32.totalorder %s332, %s346
      %p348 = scmp.eq.s32.totalorder %s91, 0
      %p349 = por %p347, %p348
      %s351 = sadd.s32 %s350, 1
      %p354 = scmp.eq.s32.totalorder %s85, 1
      %p355 = scmp.ne.s32.totalorder %s350, %s352
      %p356 = scmp.eq.s32.totalorder %s85, 0
      %p357 = por %p355, %p356
      %p358 = scmp.ne.s32.totalorder %s350, %s352
      %p359 = scmp.eq.s32.totalorder %s90, 1
      %p360 = por %p358, %p359
      %p361 = scmp.ne.s32.totalorder %s352, %s353
      %p362 = scmp.eq.s32.totalorder %s90, 0
      %p363 = por %p361, %p362
      %p364 = scmp.ne.s32.totalorder %s352, %s353
      %p365 = scmp.eq.s32.totalorder %s91, 1
      %p366 = por %p364, %p365
      %p368 = scmp.ne.s32.totalorder %s353, %s367
      %p369 = scmp.eq.s32.totalorder %s91, 0
      %p370 = por %p368, %p369
      %s372 = sadd.s32 %s371, 1
      %p375 = scmp.eq.s32.totalorder %s85, 1
      %p376 = scmp.ne.s32.totalorder %s371, %s373
      %p377 = scmp.eq.s32.totalorder %s85, 0
      %p378 = por %p376, %p377
      %p379 = scmp.ne.s32.totalorder %s371, %s373
      %p380 = scmp.eq.s32.totalorder %s90, 1
      %p381 = por %p379, %p380
      %p382 = scmp.ne.s32.totalorder %s373, %s374
      %p383 = scmp.eq.s32.totalorder %s90, 0
      %p384 = por %p382, %p383
      %p385 = scmp.ne.s32.totalorder %s373, %s374
      %p386 = scmp.eq.s32.totalorder %s91, 1
      %p387 = por %p385, %p386
      %p389 = scmp.ne.s32.totalorder %s374, %s388
      %p390 = scmp.eq.s32.totalorder %s91, 0
      %p391 = por %p389, %p390
      %s393 = sadd.s32 %s392, 1
      %p396 = scmp.eq.s32.totalorder %s85, 1
      %p397 = scmp.ne.s32.totalorder %s392, %s394
      %p398 = scmp.eq.s32.totalorder %s85, 0
      %p399 = por %p397, %p398
      %p400 = scmp.ne.s32.totalorder %s392, %s394
      %p401 = scmp.eq.s32.totalorder %s90, 1
      %p402 = por %p400, %p401
      %p403 = scmp.ne.s32.totalorder %s394, %s395
      %p404 = scmp.eq.s32.totalorder %s90, 0
      %p405 = por %p403, %p404
      %p406 = scmp.ne.s32.totalorder %s394, %s395
      %p407 = scmp.eq.s32.totalorder %s91, 1
      %p408 = por %p406, %p407
      %p410 = scmp.ne.s32.totalorder %s395, %s409
      %p411 = scmp.eq.s32.totalorder %s91, 0
      %p412 = por %p410, %p411
      %s414 = sadd.s32 %s413, 1
      %p417 = scmp.eq.s32.totalorder %s85, 1
      %p418 = scmp.ne.s32.totalorder %s413, %s415
      %p419 = scmp.eq.s32.totalorder %s85, 0
      %p420 = por %p418, %p419
      %p421 = scmp.ne.s32.totalorder %s413, %s415
      %p422 = scmp.eq.s32.totalorder %s90, 1
      %p423 = por %p421, %p422
      %p424 = scmp.ne.s32.totalorder %s415, %s416
      %p425 = scmp.eq.s32.totalorder %s90, 0
      %p426 = por %p424, %p425
      %p427 = scmp.ne.s32.totalorder %s415, %s416
      %p428 = scmp.eq.s32.totalorder %s91, 1
      %p429 = por %p427, %p428
      %p431 = scmp.ne.s32.totalorder %s416, %s430
      %p432 = scmp.eq.s32.totalorder %s91, 0
      %p433 = por %p431, %p432
      %s435 = sadd.s32 %s434, 1
      %p438 = scmp.eq.s32.totalorder %s85, 1
      %p439 = scmp.ne.s32.totalorder %s434, %s436
      %p440 = scmp.eq.s32.totalorder %s85, 0
      %p441 = por %p439, %p440
      %p442 = scmp.ne.s32.totalorder %s434, %s436
      %p443 = scmp.eq.s32.totalorder %s90, 1
      %p444 = por %p442, %p443
      %p445 = scmp.ne.s32.totalorder %s436, %s437
      %p446 = scmp.eq.s32.totalorder %s90, 0
      %p447 = por %p445, %p446
      %p448 = scmp.ne.s32.totalorder %s436, %s437
      %p449 = scmp.eq.s32.totalorder %s91, 1
      %p450 = por %p448, %p449
      %p452 = scmp.ne.s32.totalorder %s437, %s451
      %p453 = scmp.eq.s32.totalorder %s91, 0
      %p454 = por %p452, %p453
      %s456 = sadd.s32 %s455, 1
      %p459 = scmp.eq.s32.totalorder %s85, 1
      %p460 = scmp.ne.s32.totalorder %s455, %s457
      %p461 = scmp.eq.s32.totalorder %s85, 0
      %p462 = por %p460, %p461
      %p463 = scmp.ne.s32.totalorder %s455, %s457
      %p464 = scmp.eq.s32.totalorder %s90, 1
      %p465 = por %p463, %p464
      %p466 = scmp.ne.s32.totalorder %s457, %s458
      %p467 = scmp.eq.s32.totalorder %s90, 0
      %p468 = por %p466, %p467
      %p469 = scmp.ne.s32.totalorder %s457, %s458
      %p470 = scmp.eq.s32.totalorder %s91, 1
      %p471 = por %p469, %p470
      %p473 = scmp.ne.s32.totalorder %s458, %s472
      %p474 = scmp.eq.s32.totalorder %s91, 0
      %p475 = por %p473, %p474
      %s477 = sadd.s32 %s476, 1
      %p480 = scmp.eq.s32.totalorder %s85, 1
      %p481 = scmp.ne.s32.totalorder %s476, %s478
      %p482 = scmp.eq.s32.totalorder %s85, 0
      %p483 = por %p481, %p482
      %p484 = scmp.ne.s32.totalorder %s476, %s478
      %p485 = scmp.eq.s32.totalorder %s90, 1
      %p486 = por %p484, %p485
      %p487 = scmp.ne.s32.totalorder %s478, %s479
      %p488 = scmp.eq.s32.totalorder %s90, 0
      %p489 = por %p487, %p488
      %p490 = scmp.ne.s32.totalorder %s478, %s479
      %p491 = scmp.eq.s32.totalorder %s91, 1
      %p492 = por %p490, %p491
      %p494 = scmp.ne.s32.totalorder %s479, %s493
      %p495 = scmp.eq.s32.totalorder %s91, 0
      %p496 = por %p494, %p495
      %s498 = sadd.s32 %s497, 1
      %p501 = scmp.eq.s32.totalorder %s85, 1
      %p502 = scmp.ne.s32.totalorder %s497, %s499
      %p503 = scmp.eq.s32.totalorder %s85, 0
      %p504 = por %p502, %p503
      %p505 = scmp.ne.s32.totalorder %s497, %s499
      %p506 = scmp.eq.s32.totalorder %s90, 1
      %p507 = por %p505, %p506
      %p508 = scmp.ne.s32.totalorder %s499, %s500
      %p509 = scmp.eq.s32.totalorder %s90, 0
      %p510 = por %p508, %p509
      %p511 = scmp.ne.s32.totalorder %s499, %s500
      %p512 = scmp.eq.s32.totalorder %s91, 1
      %p513 = por %p511, %p512
      %p515 = scmp.ne.s32.totalorder %s500, %s514
      %p516 = scmp.eq.s32.totalorder %s91, 0
      %p517 = por %p515, %p516
      %s519 = sadd.s32 %s518, 1
      %p522 = scmp.eq.s32.totalorder %s85, 1
      %p523 = scmp.ne.s32.totalorder %s518, %s520
      %p524 = scmp.eq.s32.totalorder %s85, 0
      %p525 = por %p523, %p524
      %p526 = scmp.ne.s32.totalorder %s518, %s520
      %p527 = scmp.eq.s32.totalorder %s90, 1
      %p528 = por %p526, %p527
      %p529 = scmp.ne.s32.totalorder %s520, %s521
      %p530 = scmp.eq.s32.totalorder %s90, 0
      %p531 = por %p529, %p530
      %p532 = scmp.ne.s32.totalorder %s520, %s521
      %p533 = scmp.eq.s32.totalorder %s91, 1
      %p534 = por %p532, %p533
      %p536 = scmp.ne.s32.totalorder %s521, %s535
      %p537 = scmp.eq.s32.totalorder %s91, 0
      %p538 = por %p536, %p537
      %s540 = sadd.s32 %s539, 1
      %p543 = scmp.eq.s32.totalorder %s85, 1
      %p544 = scmp.ne.s32.totalorder %s539, %s541
      %p545 = scmp.eq.s32.totalorder %s85, 0
      %p546 = por %p544, %p545
      %p547 = scmp.ne.s32.totalorder %s539, %s541
      %p548 = scmp.eq.s32.totalorder %s90, 1
      %p549 = por %p547, %p548
      %p550 = scmp.ne.s32.totalorder %s541, %s542
      %p551 = scmp.eq.s32.totalorder %s90, 0
      %p552 = por %p550, %p551
      %p553 = scmp.ne.s32.totalorder %s541, %s542
      %p554 = scmp.eq.s32.totalorder %s91, 1
      %p555 = por %p553, %p554
      %p557 = scmp.ne.s32.totalorder %s542, %s556
      %p558 = scmp.eq.s32.totalorder %s91, 0
      %p559 = por %p557, %p558
      %s561 = sadd.s32 %s560, 1
      %p564 = scmp.eq.s32.totalorder %s85, 1
      %p565 = scmp.ne.s32.totalorder %s560, %s562
      %p566 = scmp.eq.s32.totalorder %s85, 0
      %p567 = por %p565, %p566
      %p568 = scmp.ne.s32.totalorder %s560, %s562
      %p569 = scmp.eq.s32.totalorder %s90, 1
      %p570 = por %p568, %p569
      %p571 = scmp.ne.s32.totalorder %s562, %s563
      %p572 = scmp.eq.s32.totalorder %s90, 0
      %p573 = por %p571, %p572
      %p574 = scmp.ne.s32.totalorder %s562, %s563
      %p575 = scmp.eq.s32.totalorder %s91, 1
      %p576 = por %p574, %p575
      %p578 = scmp.ne.s32.totalorder %s563, %s577
      %p579 = scmp.eq.s32.totalorder %s91, 0
      %p580 = por %p578, %p579
      %s582 = sadd.s32 %s581, 1
      %p585 = scmp.eq.s32.totalorder %s85, 1
      %p586 = scmp.ne.s32.totalorder %s581, %s583
      %p587 = scmp.eq.s32.totalorder %s85, 0
      %p588 = por %p586, %p587
      %p589 = scmp.ne.s32.totalorder %s581, %s583
      %p590 = scmp.eq.s32.totalorder %s90, 1
      %p591 = por %p589, %p590
      %p592 = scmp.ne.s32.totalorder %s583, %s584
      %p593 = scmp.eq.s32.totalorder %s90, 0
      %p594 = por %p592, %p593
      %p595 = scmp.ne.s32.totalorder %s583, %s584
      %p596 = scmp.eq.s32.totalorder %s91, 1
      %p597 = por %p595, %p596
      %p599 = scmp.ne.s32.totalorder %s584, %s598
      %p600 = scmp.eq.s32.totalorder %s91, 0
      %p601 = por %p599, %p600
      %s603 = sadd.s32 %s602, 1
      %p606 = scmp.eq.s32.totalorder %s85, 1
      %p607 = scmp.ne.s32.totalorder %s602, %s604
      %p608 = scmp.eq.s32.totalorder %s85, 0
      %p609 = por %p607, %p608
      %p610 = scmp.ne.s32.totalorder %s602, %s604
      %p611 = scmp.eq.s32.totalorder %s90, 1
      %p612 = por %p610, %p611
      %p613 = scmp.ne.s32.totalorder %s604, %s605
      %p614 = scmp.eq.s32.totalorder %s90, 0
      %p615 = por %p613, %p614
      %p616 = scmp.ne.s32.totalorder %s604, %s605
      %p617 = scmp.eq.s32.totalorder %s91, 1
      %p618 = por %p616, %p617
      %p620 = scmp.ne.s32.totalorder %s605, %s619
      %p621 = scmp.eq.s32.totalorder %s91, 0
      %p622 = por %p620, %p621
      %s624 = sadd.s32 %s623, 1
      %p627 = scmp.eq.s32.totalorder %s85, 1
      %p628 = scmp.ne.s32.totalorder %s623, %s625
      %p629 = scmp.eq.s32.totalorder %s85, 0
      %p630 = por %p628, %p629
      %p631 = scmp.ne.s32.totalorder %s623, %s625
      %p632 = scmp.eq.s32.totalorder %s90, 1
      %p633 = por %p631, %p632
      %p634 = scmp.ne.s32.totalorder %s625, %s626
      %p635 = scmp.eq.s32.totalorder %s90, 0
      %p636 = por %p634, %p635
      %p637 = scmp.ne.s32.totalorder %s625, %s626
      %p638 = scmp.eq.s32.totalorder %s91, 1
      %p639 = por %p637, %p638
      %p641 = scmp.ne.s32.totalorder %s626, %s640
      %p642 = scmp.eq.s32.totalorder %s91, 0
      %p643 = por %p641, %p642
      %s645 = sadd.s32 %s644, 1
      %p648 = scmp.eq.s32.totalorder %s85, 1
      %p649 = scmp.ne.s32.totalorder %s644, %s646
      %p650 = scmp.eq.s32.totalorder %s85, 0
      %p651 = por %p649, %p650
      %p652 = scmp.ne.s32.totalorder %s644, %s646
      %p653 = scmp.eq.s32.totalorder %s90, 1
      %p654 = por %p652, %p653
      %p655 = scmp.ne.s32.totalorder %s646, %s647
      %p656 = scmp.eq.s32.totalorder %s90, 0
      %p657 = por %p655, %p656
      %p658 = scmp.ne.s32.totalorder %s646, %s647
      %p659 = scmp.eq.s32.totalorder %s91, 1
      %p660 = por %p658, %p659
      %p662 = scmp.ne.s32.totalorder %s647, %s661
      %p663 = scmp.eq.s32.totalorder %s91, 0
      %p664 = por %p662, %p663
      %s666 = sadd.s32 %s665, 1
      %p669 = scmp.eq.s32.totalorder %s85, 1
      %p670 = scmp.ne.s32.totalorder %s665, %s667
      %p671 = scmp.eq.s32.totalorder %s85, 0
      %p672 = por %p670, %p671
      %p673 = scmp.ne.s32.totalorder %s665, %s667
      %p674 = scmp.eq.s32.totalorder %s90, 1
      %p675 = por %p673, %p674
      %p676 = scmp.ne.s32.totalorder %s667, %s668
      %p677 = scmp.eq.s32.totalorder %s90, 0
      %p678 = por %p676, %p677
      %p679 = scmp.ne.s32.totalorder %s667, %s668
      %p680 = scmp.eq.s32.totalorder %s91, 1
      %p681 = por %p679, %p680
      %p683 = scmp.ne.s32.totalorder %s668, %s682
      %p684 = scmp.eq.s32.totalorder %s91, 0
      %p685 = por %p683, %p684
      %s687 = sadd.s32 %s686, 1
      %p690 = scmp.eq.s32.totalorder %s85, 1
      %p691 = scmp.ne.s32.totalorder %s686, %s688
      %p692 = scmp.eq.s32.totalorder %s85, 0
      %p693 = por %p691, %p692
      %p694 = scmp.ne.s32.totalorder %s686, %s688
      %p695 = scmp.eq.s32.totalorder %s90, 1
      %p696 = por %p694, %p695
      %p697 = scmp.ne.s32.totalorder %s688, %s689
      %p698 = scmp.eq.s32.totalorder %s90, 0
      %p699 = por %p697, %p698
      %p700 = scmp.ne.s32.totalorder %s688, %s689
      %p701 = scmp.eq.s32.totalorder %s91, 1
      %p702 = por %p700, %p701
      %p704 = scmp.ne.s32.totalorder %s689, %s703
      %p705 = scmp.eq.s32.totalorder %s91, 0
      %p706 = por %p704, %p705
      %s708 = sadd.s32 %s707, 1
      %p711 = scmp.eq.s32.totalorder %s85, 1
      %p712 = scmp.ne.s32.totalorder %s707, %s709
      %p713 = scmp.eq.s32.totalorder %s85, 0
      %p714 = por %p712, %p713
      %p715 = scmp.ne.s32.totalorder %s707, %s709
      %p716 = scmp.eq.s32.totalorder %s90, 1
      %p717 = por %p715, %p716
      %p718 = scmp.ne.s32.totalorder %s709, %s710
      %p719 = scmp.eq.s32.totalorder %s90, 0
      %p720 = por %p718, %p719
      %p721 = scmp.ne.s32.totalorder %s709, %s710
      %p722 = scmp.eq.s32.totalorder %s91, 1
      %p723 = por %p721, %p722
      %p725 = scmp.ne.s32.totalorder %s710, %s724
      %p726 = scmp.eq.s32.totalorder %s91, 0
      %p727 = por %p725, %p726
      %s729 = sadd.s32 %s728, 1
      %p732 = scmp.eq.s32.totalorder %s85, 1
      %p733 = scmp.ne.s32.totalorder %s728, %s730
      %p734 = scmp.eq.s32.totalorder %s85, 0
      %p735 = por %p733, %p734
      %p736 = scmp.ne.s32.totalorder %s728, %s730
      %p737 = scmp.eq.s32.totalorder %s90, 1
      %p738 = por %p736, %p737
      %p739 = scmp.ne.s32.totalorder %s730, %s731
      %p740 = scmp.eq.s32.totalorder %s90, 0
      %p741 = por %p739, %p740
      %p742 = scmp.ne.s32.totalorder %s730, %s731
      %p743 = scmp.eq.s32.totalorder %s91, 1
      %p744 = por %p742, %p743
      %p746 = scmp.ne.s32.totalorder %s731, %s745
      %p747 = scmp.eq.s32.totalorder %s91, 0
      %p748 = por %p746, %p747
      %s750 = sadd.s32 %s749, 1
      %p753 = scmp.eq.s32.totalorder %s85, 1
      %p754 = scmp.ne.s32.totalorder %s749, %s751
      %p755 = scmp.eq.s32.totalorder %s85, 0
      %p756 = por %p754, %p755
      %p757 = scmp.ne.s32.totalorder %s749, %s751
      %p758 = scmp.eq.s32.totalorder %s90, 1
      %p759 = por %p757, %p758
      %p760 = scmp.ne.s32.totalorder %s751, %s752
      %p761 = scmp.eq.s32.totalorder %s90, 0
      %p762 = por %p760, %p761
      %p763 = scmp.ne.s32.totalorder %s751, %s752
      %p764 = scmp.eq.s32.totalorder %s91, 1
      %p765 = por %p763, %p764
      %p767 = scmp.ne.s32.totalorder %s752, %s766
      %p768 = scmp.eq.s32.totalorder %s91, 0
      %p769 = por %p767, %p768
      %s771 = sadd.s32 %s770, 1
      %p774 = scmp.eq.s32.totalorder %s85, 1
      %p775 = scmp.ne.s32.totalorder %s770, %s772
      %p776 = scmp.eq.s32.totalorder %s85, 0
      %p777 = por %p775, %p776
      %p778 = scmp.ne.s32.totalorder %s770, %s772
      %p779 = scmp.eq.s32.totalorder %s90, 1
      %p780 = por %p778, %p779
      %p781 = scmp.ne.s32.totalorder %s772, %s773
      %p782 = scmp.eq.s32.totalorder %s90, 0
      %p783 = por %p781, %p782
      %p784 = scmp.ne.s32.totalorder %s772, %s773
      %p785 = scmp.eq.s32.totalorder %s91, 1
      %p786 = por %p784, %p785
      %p788 = scmp.ne.s32.totalorder %s773, %s787
      %p789 = scmp.eq.s32.totalorder %s91, 0
      %p790 = por %p788, %p789
      %s791 = ssub.s32 %s85, %s92
      %p792 = scmp.eq.s32.totalorder %s791, 0
      %s794 = sadd.s32 %s793, 1
      %s795 = scalar_select %p792, %s793, %s794
      %p798 = pneg %p792
      %p799 = scmp.eq.s32.totalorder %s85, 1
      %p800 = por %p798, %p799
      %p801 = scmp.ne.s32.totalorder %s793, %s796
      %p802 = scmp.eq.s32.totalorder %s85, 0
      %p803 = por %p801, %p802
      %p804 = scmp.ne.s32.totalorder %s793, %s796
      %p805 = scmp.eq.s32.totalorder %s90, 1
      %p806 = por %p804, %p805
      %p807 = scmp.ne.s32.totalorder %s796, %s797
      %p808 = scmp.eq.s32.totalorder %s90, 0
      %p809 = por %p807, %p808
      %p810 = scmp.ne.s32.totalorder %s796, %s797
      %p811 = scmp.eq.s32.totalorder %s91, 1
      %p812 = por %p810, %p811
      %p814 = scmp.ne.s32.totalorder %s797, %s813
      %p815 = scmp.eq.s32.totalorder %s91, 0
      %p816 = por %p814, %p815
      %p817 = scmp.le.s32.totalorder 1, %s85
      %p818 = scmp.lt.s32.totalorder %s85, 3
      %p819 = pnand %p817, %p818
      %p820 = pneg %p819
      // Predicated region
      $region9: #{converter_forward.1} parent=5 // pred_check
        _
      $region10: #{converter_forward.1} parent=5 // pred_check_branch
        %822 = sbr.rel (%p819) target = $region12
      $region11: #{converter_forward.1} parent=5 // pred_region
        %s823 = ssub.s32 %s85, 1
        // Predicated region
        $region13: #{converter_forward.1} parent=11 // pred_check
          %p824 = pneg %p132
        $region14: #{converter_forward.1} parent=11 // pred_check_branch
          %826 = sbr.rel (%p824) target = $region16
        $region15: #{converter_forward.1} parent=11 // pred_region
          %s828 = ssub.s32 256, 256
          %829 = vsyncadd [#allocation6], %s828
          %s830 = sshll.u32 [#allocation5], 4
          %s831 = int_to_ptr.vmem [resolvable:$true] %s830
          %836 = dma.hbm_to_vmem [thread:$0]  %s3, 256, %s831, [#allocation6], 64, 64, 4
        $region16: #{converter_forward.1} parent=11 // pred_fallthru
          _
        // Predicated region
        $region17: #{converter_forward.1} parent=11 // pred_check
          %p837 = pneg %p153
        $region18: #{converter_forward.1} parent=11 // pred_check_branch
          %839 = sbr.rel (%p837) target = $region20
        $region19: #{converter_forward.1} parent=11 // pred_region
          %s841 = ssub.s32 16, 16
          %842 = vsyncadd [#allocation6], %s841
          %s844 = sshll.u32 [#allocation7], 4
          %s845 = int_to_ptr.vmem [resolvable:$true] %s844
          %847 = dma.hbm_to_vmem [thread:$0]  %s5, 16, %s845, [#allocation6]
        $region20: #{converter_forward.1} parent=11 // pred_fallthru
          _
        // Predicated region
        $region21: #{converter_forward.1} parent=11 // pred_check
          %p848 = pneg %p174
        $region22: #{converter_forward.1} parent=11 // pred_check_branch
          %850 = sbr.rel (%p848) target = $region24
        $region23: #{converter_forward.1} parent=11 // pred_region
          %s852 = ssub.s32 6144, 6144
          %853 = vsyncadd [#allocation9], %s852
          %s854 = sshll.u32 [#allocation8], 4
          %s855 = int_to_ptr.vmem [resolvable:$true] %s854
          %860 = dma.hbm_to_vmem [thread:$0]  %s7, 6144, %s855, [#allocation9], 128, 128, 8
        $region24: #{converter_forward.1} parent=11 // pred_fallthru
          _
        // Predicated region
        $region25: #{converter_forward.1} parent=11 // pred_check
          %p861 = pneg %p195
        $region26: #{converter_forward.1} parent=11 // pred_check_branch
          %863 = sbr.rel (%p861) target = $region28
        $region27: #{converter_forward.1} parent=11 // pred_region
          _
        $region28: #{converter_forward.1} parent=11 // pred_fallthru
          _
        // Predicated region
        $region29: #{converter_forward.1} parent=11 // pred_check
          %p864 = pneg %p216
        $region30: #{converter_forward.1} parent=11 // pred_check_branch
          %866 = sbr.rel (%p864) target = $region32
        $region31: #{converter_forward.1} parent=11 // pred_region
          %s868 = ssub.s32 6144, 6144
          %869 = vsyncadd [#allocation9], %s868
          %s870 = sshll.u32 [#allocation10], 4
          %s871 = int_to_ptr.vmem [resolvable:$true] %s870
          %876 = dma.hbm_to_vmem [thread:$0]  %s11, 6144, %s871, [#allocation9], 128, 128, 8
        $region32: #{converter_forward.1} parent=11 // pred_fallthru
          _
        // Predicated region
        $region33: #{converter_forward.1} parent=11 // pred_check
          %p877 = pneg %p237
        $region34: #{converter_forward.1} parent=11 // pred_check_branch
          %879 = sbr.rel (%p877) target = $region36
        $region35: #{converter_forward.1} parent=11 // pred_region
          _
        $region36: #{converter_forward.1} parent=11 // pred_fallthru
          _
        // Predicated region
        $region37: #{converter_forward.1} parent=11 // pred_check
          %p880 = pneg %p258
        $region38: #{converter_forward.1} parent=11 // pred_check_branch
          %882 = sbr.rel (%p880) target = $region40
        $region39: #{converter_forward.1} parent=11 // pred_region
          %s884 = ssub.s32 2048, 2048
          %885 = vsyncadd [#allocation12], %s884
          %s886 = sshll.u32 [#allocation11], 4
          %s887 = int_to_ptr.vmem [resolvable:$true] %s886
          %892 = dma.hbm_to_vmem [thread:$0]  %s15, 2048, %s887, [#allocation12], 128, 128, 8
        $region40: #{converter_forward.1} parent=11 // pred_fallthru
          _
        // Predicated region
        $region41: #{converter_forward.1} parent=11 // pred_check
          %p893 = pneg %p279
        $region42: #{converter_forward.1} parent=11 // pred_check_branch
          %895 = sbr.rel (%p893) target = $region44
        $region43: #{converter_forward.1} parent=11 // pred_region
          _
        $region44: #{converter_forward.1} parent=11 // pred_fallthru
          _
        // Predicated region
        $region45: #{converter_forward.1} parent=11 // pred_check
          %p896 = pneg %p300
        $region46: #{converter_forward.1} parent=11 // pred_check_branch
          %898 = sbr.rel (%p896) target = $region48
        $region47: #{converter_forward.1} parent=11 // pred_region
          %s900 = ssub.s32 6144, 6144
          %901 = vsyncadd [#allocation12], %s900
          %s902 = sshll.u32 [#allocation13], 4
          %s903 = int_to_ptr.vmem [resolvable:$true] %s902
          %908 = dma.hbm_to_vmem [thread:$0]  %s19, 6144, %s903, [#allocation12], 128, 128, 8
        $region48: #{converter_forward.1} parent=11 // pred_fallthru
          _
        // Predicated region
        $region49: #{converter_forward.1} parent=11 // pred_check
          %p909 = pneg %p321
        $region50: #{converter_forward.1} parent=11 // pred_check_branch
          %911 = sbr.rel (%p909) target = $region52
        $region51: #{converter_forward.1} parent=11 // pred_region
          _
        $region52: #{converter_forward.1} parent=11 // pred_fallthru
          _
        // Predicated region
        $region53: #{converter_forward.1} parent=11 // pred_check
          %p912 = pneg %p342
        $region54: #{converter_forward.1} parent=11 // pred_check_branch
          %914 = sbr.rel (%p912) target = $region56
        $region55: #{converter_forward.1} parent=11 // pred_region
          %s916 = ssub.s32 6144, 6144
          %917 = vsyncadd [#allocation15], %s916
          %s918 = sshll.u32 [#allocation14], 4
          %s919 = int_to_ptr.vmem [resolvable:$true] %s918
          %924 = dma.hbm_to_vmem [thread:$0]  %s23, 6144, %s919, [#allocation15], 128, 128, 8
        $region56: #{converter_forward.1} parent=11 // pred_fallthru
          _
        // Predicated region
        $region57: #{converter_forward.1} parent=11 // pred_check
          %p925 = pneg %p363
        $region58: #{converter_forward.1} parent=11 // pred_check_branch
          %927 = sbr.rel (%p925) target = $region60
        $region59: #{converter_forward.1} parent=11 // pred_region
          _
        $region60: #{converter_forward.1} parent=11 // pred_fallthru
          _
        // Predicated region
        $region61: #{converter_forward.1} parent=11 // pred_check
          %p928 = pneg %p384
        $region62: #{converter_forward.1} parent=11 // pred_check_branch
          %930 = sbr.rel (%p928) target = $region64
        $region63: #{converter_forward.1} parent=11 // pred_region
          %s932 = ssub.s32 2048, 2048
          %933 = vsyncadd [#allocation15], %s932
          %s934 = sshll.u32 [#allocation16], 4
          %s935 = int_to_ptr.vmem [resolvable:$true] %s934
          %940 = dma.hbm_to_vmem [thread:$0]  %s27, 2048, %s935, [#allocation15], 128, 128, 8
        $region64: #{converter_forward.1} parent=11 // pred_fallthru
          _
        // Predicated region
        $region65: #{converter_forward.1} parent=11 // pred_check
          %p941 = pneg %p405
        $region66: #{converter_forward.1} parent=11 // pred_check_branch
          %943 = sbr.rel (%p941) target = $region68
        $region67: #{converter_forward.1} parent=11 // pred_region
          _
        $region68: #{converter_forward.1} parent=11 // pred_fallthru
          _
        // Predicated region
        $region69: #{converter_forward.1} parent=11 // pred_check
          %p944 = pneg %p426
        $region70: #{converter_forward.1} parent=11 // pred_check_branch
          %946 = sbr.rel (%p944) target = $region72
        $region71: #{converter_forward.1} parent=11 // pred_region
          %s948 = ssub.s32 6144, 6144
          %949 = vsyncadd [#allocation18], %s948
          %s950 = sshll.u32 [#allocation17], 4
          %s951 = int_to_ptr.vmem [resolvable:$true] %s950
          %956 = dma.hbm_to_vmem [thread:$0]  %s31, 6144, %s951, [#allocation18], 128, 128, 8
        $region72: #{converter_forward.1} parent=11 // pred_fallthru
          _
        // Predicated region
        $region73: #{converter_forward.1} parent=11 // pred_check
          %p957 = pneg %p447
        $region74: #{converter_forward.1} parent=11 // pred_check_branch
          %959 = sbr.rel (%p957) target = $region76
        $region75: #{converter_forward.1} parent=11 // pred_region
          _
        $region76: #{converter_forward.1} parent=11 // pred_fallthru
          _
        // Predicated region
        $region77: #{converter_forward.1} parent=11 // pred_check
          %p960 = pneg %p468
        $region78: #{converter_forward.1} parent=11 // pred_check_branch
          %962 = sbr.rel (%p960) target = $region80
        $region79: #{converter_forward.1} parent=11 // pred_region
          %s964 = ssub.s32 6144, 6144
          %965 = vsyncadd [#allocation18], %s964
          %s966 = sshll.u32 [#allocation19], 4
          %s967 = int_to_ptr.vmem [resolvable:$true] %s966
          %972 = dma.hbm_to_vmem [thread:$0]  %s35, 6144, %s967, [#allocation18], 128, 128, 8
        $region80: #{converter_forward.1} parent=11 // pred_fallthru
          _
        // Predicated region
        $region81: #{converter_forward.1} parent=11 // pred_check
          %p973 = pneg %p489
        $region82: #{converter_forward.1} parent=11 // pred_check_branch
          %975 = sbr.rel (%p973) target = $region84
        $region83: #{converter_forward.1} parent=11 // pred_region
          _
        $region84: #{converter_forward.1} parent=11 // pred_fallthru
          _
        // Predicated region
        $region85: #{converter_forward.1} parent=11 // pred_check
          %p976 = pneg %p510
        $region86: #{converter_forward.1} parent=11 // pred_check_branch
          %978 = sbr.rel (%p976) target = $region88
        $region87: #{converter_forward.1} parent=11 // pred_region
          %s980 = ssub.s32 1024, 1024
          %981 = vsyncadd [#allocation21], %s980
          %s982 = sshll.u32 [#allocation20], 4
          %s983 = int_to_ptr.vmem [resolvable:$true] %s982
          %988 = dma.hbm_to_vmem [thread:$0]  %s39, 1024, %s983, [#allocation21], 64, 64, 4
        $region88: #{converter_forward.1} parent=11 // pred_fallthru
          _
        // Predicated region
        $region89: #{converter_forward.1} parent=11 // pred_check
          %p989 = pneg %p531
        $region90: #{converter_forward.1} parent=11 // pred_check_branch
          %991 = sbr.rel (%p989) target = $region92
        $region91: #{converter_forward.1} parent=11 // pred_region
          _
        $region92: #{converter_forward.1} parent=11 // pred_fallthru
          _
        // Predicated region
        $region93: #{converter_forward.1} parent=11 // pred_check
          %p992 = pneg %p552
        $region94: #{converter_forward.1} parent=11 // pred_check_branch
          %994 = sbr.rel (%p992) target = $region96
        $region95: #{converter_forward.1} parent=11 // pred_region
          %s996 = ssub.s32 6144, 6144
          %997 = vsyncadd [#allocation21], %s996
          %s998 = sshll.u32 [#allocation22], 4
          %s999 = int_to_ptr.vmem [resolvable:$true] %s998
          %1004 = dma.hbm_to_vmem [thread:$0]  %s43, 6144, %s999, [#allocation21], 128, 128, 8
        $region96: #{converter_forward.1} parent=11 // pred_fallthru
          _
        // Predicated region
        $region97: #{converter_forward.1} parent=11 // pred_check
          %p1005 = pneg %p573
        $region98: #{converter_forward.1} parent=11 // pred_check_branch
          %1007 = sbr.rel (%p1005) target = $region100
        $region99: #{converter_forward.1} parent=11 // pred_region
          _
        $region100: #{converter_forward.1} parent=11 // pred_fallthru
          _
        // Predicated region
        $region101: #{converter_forward.1} parent=11 // pred_check
          %p1008 = pneg %p594
        $region102: #{converter_forward.1} parent=11 // pred_check_branch
          %1010 = sbr.rel (%p1008) target = $region104
        $region103: #{converter_forward.1} parent=11 // pred_region
          %s1012 = ssub.s32 6144, 6144
          %1013 = vsyncadd [#allocation24], %s1012
          %s1014 = sshll.u32 [#allocation23], 4
          %s1015 = int_to_ptr.vmem [resolvable:$true] %s1014
          %1020 = dma.hbm_to_vmem [thread:$0]  %s47, 6144, %s1015, [#allocation24], 128, 128, 8
        $region104: #{converter_forward.1} parent=11 // pred_fallthru
          _
        // Predicated region
        $region105: #{converter_forward.1} parent=11 // pred_check
          %p1021 = pneg %p615
        $region106: #{converter_forward.1} parent=11 // pred_check_branch
          %1023 = sbr.rel (%p1021) target = $region108
        $region107: #{converter_forward.1} parent=11 // pred_region
          _
        $region108: #{converter_forward.1} parent=11 // pred_fallthru
          _
        // Predicated region
        $region109: #{converter_forward.1} parent=11 // pred_check
          %p1024 = pneg %p636
        $region110: #{converter_forward.1} parent=11 // pred_check_branch
          %1026 = sbr.rel (%p1024) target = $region112
        $region111: #{converter_forward.1} parent=11 // pred_region
          %s1028 = ssub.s32 1024, 1024
          %1029 = vsyncadd [#allocation24], %s1028
          %s1030 = sshll.u32 [#allocation25], 4
          %s1031 = int_to_ptr.vmem [resolvable:$true] %s1030
          %1036 = dma.hbm_to_vmem [thread:$0]  %s51, 1024, %s1031, [#allocation24], 64, 64, 4
        $region112: #{converter_forward.1} parent=11 // pred_fallthru
          _
        // Predicated region
        $region113: #{converter_forward.1} parent=11 // pred_check
          %p1037 = pneg %p657
        $region114: #{converter_forward.1} parent=11 // pred_check_branch
          %1039 = sbr.rel (%p1037) target = $region116
        $region115: #{converter_forward.1} parent=11 // pred_region
          _
        $region116: #{converter_forward.1} parent=11 // pred_fallthru
          _
        // Predicated region
        $region117: #{converter_forward.1} parent=11 // pred_check
          %p1040 = pneg %p678
        $region118: #{converter_forward.1} parent=11 // pred_check_branch
          %1042 = sbr.rel (%p1040) target = $region120
        $region119: #{converter_forward.1} parent=11 // pred_region
          %s1044 = ssub.s32 1024, 1024
          %1045 = vsyncadd [#allocation27], %s1044
          %s1046 = sshll.u32 [#allocation26], 4
          %s1047 = int_to_ptr.vmem [resolvable:$true] %s1046
          %1052 = dma.hbm_to_vmem [thread:$0]  %s55, 1024, %s1047, [#allocation27], 64, 64, 4
        $region120: #{converter_forward.1} parent=11 // pred_fallthru
          _
        // Predicated region
        $region121: #{converter_forward.1} parent=11 // pred_check
          %p1053 = pneg %p699
        $region122: #{converter_forward.1} parent=11 // pred_check_branch
          %1055 = sbr.rel (%p1053) target = $region124
        $region123: #{converter_forward.1} parent=11 // pred_region
          _
        $region124: #{converter_forward.1} parent=11 // pred_fallthru
          _
        // Predicated region
        $region125: #{converter_forward.1} parent=11 // pred_check
          %p1056 = pneg %p720
        $region126: #{converter_forward.1} parent=11 // pred_check_branch
          %1058 = sbr.rel (%p1056) target = $region128
        $region127: #{converter_forward.1} parent=11 // pred_region
          %s1060 = ssub.s32 1024, 1024
          %1061 = vsyncadd [#allocation27], %s1060
          %s1062 = sshll.u32 [#allocation28], 4
          %s1063 = int_to_ptr.vmem [resolvable:$true] %s1062
          %1068 = dma.hbm_to_vmem [thread:$0]  %s59, 1024, %s1063, [#allocation27], 64, 64, 4
        $region128: #{converter_forward.1} parent=11 // pred_fallthru
          _
        // Predicated region
        $region129: #{converter_forward.1} parent=11 // pred_check
          %p1069 = pneg %p741
        $region130: #{converter_forward.1} parent=11 // pred_check_branch
          %1071 = sbr.rel (%p1069) target = $region132
        $region131: #{converter_forward.1} parent=11 // pred_region
          _
        $region132: #{converter_forward.1} parent=11 // pred_fallthru
          _
        // Predicated region
        $region133: #{converter_forward.1} parent=11 // pred_check
          %p1072 = pneg %p762
        $region134: #{converter_forward.1} parent=11 // pred_check_branch
          %1074 = sbr.rel (%p1072) target = $region136
        $region135: #{converter_forward.1} parent=11 // pred_region
          %s1076 = ssub.s32 1024, 1024
          %1077 = vsyncadd [#allocation30], %s1076
          %s1078 = sshll.u32 [#allocation29], 4
          %s1079 = int_to_ptr.vmem [resolvable:$true] %s1078
          %1084 = dma.hbm_to_vmem [thread:$0]  %s63, 1024, %s1079, [#allocation30], 64, 64, 4
        $region136: #{converter_forward.1} parent=11 // pred_fallthru
          _
        // Predicated region
        $region137: #{converter_forward.1} parent=11 // pred_check
          %p1085 = pneg %p783
        $region138: #{converter_forward.1} parent=11 // pred_check_branch
          %1087 = sbr.rel (%p1085) target = $region140
        $region139: #{converter_forward.1} parent=11 // pred_region
          _
        $region140: #{converter_forward.1} parent=11 // pred_fallthru
          _
      $region12: #{converter_forward.1} parent=5 // pred_fallthru
        _
      %p1088 = scmp.lt.s32.totalorder %s85, 2
      // Predicated region
      $region141: #{converter_forward.1} parent=5 // pred_check
        %p1089 = pneg %p1088
      $region142: #{converter_forward.1} parent=5 // pred_check_branch
        %1091 = sbr.rel (%p1089) target = $region144
      $region143: #{converter_forward.1} parent=5 // pred_region
        // Predicated region
        $region145: #{converter_forward.1} parent=143 // pred_check
          %p1092 = pneg %p105
        $region146: #{converter_forward.1} parent=143 // pred_check_branch
          %1094 = sbr.rel (%p1092) target = $region148
        $region147: #{converter_forward.1} parent=143 // pred_region
          %s1095 = sand.u32 %s95, 1
          %s1096 = scalar_lea.sflag [#allocation4], %s1095
          %s1097 = sand.u32 %s95, 1
          %s1098 = smul.addr %s1097, 8
          %s1099 = scalar_lea.vmem [#allocation3], %s1098
          %s1101 = ssub.s32 128, 128
          %1102 = vsyncadd %s1096, %s1101
          %s1103 = smul.addr %s85, 128
          %s1104 = scalar_lea.hbm %s1, %s1103
          %s1106 = sshll.u32 %s1099, 4
          %s1107 = int_to_ptr.vmem [resolvable:$true] %s1106
          %1109 = dma.hbm_to_vmem [thread:$0]  %s1104, 128, %s1107, %s1096
        $region148: #{converter_forward.1} parent=143 // pred_fallthru
          _
      $region144: #{converter_forward.1} parent=5 // pred_fallthru
        _
      %p1110 = scmp.le.s32.totalorder 1, %s85
      %p1111 = scmp.lt.s32.totalorder %s85, 3
      %p1112 = pnand %p1110, %p1111
      %p1113 = pneg %p1112
      // Predicated region
      $region149: #{converter_forward.1} parent=5 // pred_check
        _
      $region150: #{converter_forward.1} parent=5 // pred_check_branch
        %1115 = sbr.rel (%p1112) target = $region152
      $region151: #{converter_forward.1} parent=5 // pred_region
        %s1116 = ssub.s32 %s85, 1
        %s1117 = sand.u32 %s98, 1
        %s1118 = scalar_lea.sflag [#allocation4], %s1117
        %s1119 = sand.u32 %s98, 1
        %s1120 = smul.addr %s1119, 8
        %s1121 = scalar_lea.vmem [#allocation3], %s1120
        // Predicated region
        $region153: #{converter_forward.1} parent=151 // pred_check
          %p1122 = pneg %p111
        $region154: #{converter_forward.1} parent=151 // pred_check_branch
          %1124 = sbr.rel (%p1122) target = $region156
        $region155: #{converter_forward.1} parent=151 // pred_region
          %1125 = dma.done %s1118, 128
        $region156: #{converter_forward.1} parent=151 // pred_fallthru
          _
        // Predicated region
        $region157: #{converter_forward.1} parent=151 // pred_check
          %p1126 = pneg %p132
        $region158: #{converter_forward.1} parent=151 // pred_check_branch
          %1128 = sbr.rel (%p1126) target = $region160
        $region159: #{converter_forward.1} parent=151 // pred_region
          %1129 = dma.done [#allocation6], 256
        $region160: #{converter_forward.1} parent=151 // pred_fallthru
          _
        // Predicated region
        $region161: #{converter_forward.1} parent=151 // pred_check
          %p1130 = pneg %p153
        $region162: #{converter_forward.1} parent=151 // pred_check_branch
          %1132 = sbr.rel (%p1130) target = $region164
        $region163: #{converter_forward.1} parent=151 // pred_region
          %1133 = dma.done [#allocation6], 16
        $region164: #{converter_forward.1} parent=151 // pred_fallthru
          _
        // Predicated region
        $region165: #{converter_forward.1} parent=151 // pred_check
          %p1134 = pneg %p174
        $region166: #{converter_forward.1} parent=151 // pred_check_branch
          %1136 = sbr.rel (%p1134) target = $region168
        $region167: #{converter_forward.1} parent=151 // pred_region
          %1137 = dma.done [#allocation9], 6144
        $region168: #{converter_forward.1} parent=151 // pred_fallthru
          _
        // Predicated region
        $region169: #{converter_forward.1} parent=151 // pred_check
          %p1138 = pneg %p216
        $region170: #{converter_forward.1} parent=151 // pred_check_branch
          %1140 = sbr.rel (%p1138) target = $region172
        $region171: #{converter_forward.1} parent=151 // pred_region
          %1141 = dma.done [#allocation9], 6144
        $region172: #{converter_forward.1} parent=151 // pred_fallthru
          _
        // Predicated region
        $region173: #{converter_forward.1} parent=151 // pred_check
          %p1142 = pneg %p258
        $region174: #{converter_forward.1} parent=151 // pred_check_branch
          %1144 = sbr.rel (%p1142) target = $region176
        $region175: #{converter_forward.1} parent=151 // pred_region
          %1145 = dma.done [#allocation12], 2048
        $region176: #{converter_forward.1} parent=151 // pred_fallthru
          _
        // Predicated region
        $region177: #{converter_forward.1} parent=151 // pred_check
          %p1146 = pneg %p300
        $region178: #{converter_forward.1} parent=151 // pred_check_branch
          %1148 = sbr.rel (%p1146) target = $region180
        $region179: #{converter_forward.1} parent=151 // pred_region
          %1149 = dma.done [#allocation12], 6144
        $region180: #{converter_forward.1} parent=151 // pred_fallthru
          _
        // Predicated region
        $region181: #{converter_forward.1} parent=151 // pred_check
          %p1150 = pneg %p342
        $region182: #{converter_forward.1} parent=151 // pred_check_branch
          %1152 = sbr.rel (%p1150) target = $region184
        $region183: #{converter_forward.1} parent=151 // pred_region
          %1153 = dma.done [#allocation15], 6144
        $region184: #{converter_forward.1} parent=151 // pred_fallthru
          _
        // Predicated region
        $region185: #{converter_forward.1} parent=151 // pred_check
          %p1154 = pneg %p384
        $region186: #{converter_forward.1} parent=151 // pred_check_branch
          %1156 = sbr.rel (%p1154) target = $region188
        $region187: #{converter_forward.1} parent=151 // pred_region
          %1157 = dma.done [#allocation15], 2048
        $region188: #{converter_forward.1} parent=151 // pred_fallthru
          _
        // Predicated region
        $region189: #{converter_forward.1} parent=151 // pred_check
          %p1158 = pneg %p426
        $region190: #{converter_forward.1} parent=151 // pred_check_branch
          %1160 = sbr.rel (%p1158) target = $region192
        $region191: #{converter_forward.1} parent=151 // pred_region
          %1161 = dma.done [#allocation18], 6144
        $region192: #{converter_forward.1} parent=151 // pred_fallthru
          _
        // Predicated region
        $region193: #{converter_forward.1} parent=151 // pred_check
          %p1162 = pneg %p468
        $region194: #{converter_forward.1} parent=151 // pred_check_branch
          %1164 = sbr.rel (%p1162) target = $region196
        $region195: #{converter_forward.1} parent=151 // pred_region
          %1165 = dma.done [#allocation18], 6144
        $region196: #{converter_forward.1} parent=151 // pred_fallthru
          _
        // Predicated region
        $region197: #{converter_forward.1} parent=151 // pred_check
          %p1166 = pneg %p510
        $region198: #{converter_forward.1} parent=151 // pred_check_branch
          %1168 = sbr.rel (%p1166) target = $region200
        $region199: #{converter_forward.1} parent=151 // pred_region
          %1169 = dma.done [#allocation21], 1024
        $region200: #{converter_forward.1} parent=151 // pred_fallthru
          _
        // Predicated region
        $region201: #{converter_forward.1} parent=151 // pred_check
          %p1170 = pneg %p552
        $region202: #{converter_forward.1} parent=151 // pred_check_branch
          %1172 = sbr.rel (%p1170) target = $region204
        $region203: #{converter_forward.1} parent=151 // pred_region
          %1173 = dma.done [#allocation21], 6144
        $region204: #{converter_forward.1} parent=151 // pred_fallthru
          _
        // Predicated region
        $region205: #{converter_forward.1} parent=151 // pred_check
          %p1174 = pneg %p594
        $region206: #{converter_forward.1} parent=151 // pred_check_branch
          %1176 = sbr.rel (%p1174) target = $region208
        $region207: #{converter_forward.1} parent=151 // pred_region
          %1177 = dma.done [#allocation24], 6144
        $region208: #{converter_forward.1} parent=151 // pred_fallthru
          _
        // Predicated region
        $region209: #{converter_forward.1} parent=151 // pred_check
          %p1178 = pneg %p636
        $region210: #{converter_forward.1} parent=151 // pred_check_branch
          %1180 = sbr.rel (%p1178) target = $region212
        $region211: #{converter_forward.1} parent=151 // pred_region
          %1181 = dma.done [#allocation24], 1024
        $region212: #{converter_forward.1} parent=151 // pred_fallthru
          _
        // Predicated region
        $region213: #{converter_forward.1} parent=151 // pred_check
          %p1182 = pneg %p678
        $region214: #{converter_forward.1} parent=151 // pred_check_branch
          %1184 = sbr.rel (%p1182) target = $region216
        $region215: #{converter_forward.1} parent=151 // pred_region
          %1185 = dma.done [#allocation27], 1024
        $region216: #{converter_forward.1} parent=151 // pred_fallthru
          _
        // Predicated region
        $region217: #{converter_forward.1} parent=151 // pred_check
          %p1186 = pneg %p720
        $region218: #{converter_forward.1} parent=151 // pred_check_branch
          %1188 = sbr.rel (%p1186) target = $region220
        $region219: #{converter_forward.1} parent=151 // pred_region
          %1189 = dma.done [#allocation27], 1024
        $region220: #{converter_forward.1} parent=151 // pred_fallthru
          _
        // Predicated region
        $region221: #{converter_forward.1} parent=151 // pred_check
          %p1190 = pneg %p762
        $region222: #{converter_forward.1} parent=151 // pred_check_branch
          %1192 = sbr.rel (%p1190) target = $region224
        $region223: #{converter_forward.1} parent=151 // pred_region
          %1193 = dma.done [#allocation30], 1024
        $region224: #{converter_forward.1} parent=151 // pred_fallthru
          _
        %s1194 = sand.u32 %s98, 1
        %s1195 = scalar_lea.sflag [#allocation4], %s1194
        %s1196 = sand.u32 %s98, 1
        %s1197 = smul.addr %s1196, 8
        %s1198 = scalar_lea.vmem [#allocation3], %s1197
        %p1199 = pneg %p111
        %p1200 = pneg %p108
        %p1201 = pneg %p132
        %p1202 = pneg %p129
        %p1203 = pneg %p153
        %p1204 = pneg %p150
        %p1205 = pneg %p174
        %p1206 = pneg %p171
        %p1207 = pneg %p195
        %p1208 = pneg %p192
        %p1209 = pneg %p216
        %p1210 = pneg %p213
        %p1211 = pneg %p237
        %p1212 = pneg %p234
        %p1213 = pneg %p258
        %p1214 = pneg %p255
        %p1215 = pneg %p279
        %p1216 = pneg %p276
        %p1217 = pneg %p300
        %p1218 = pneg %p297
        %p1219 = pneg %p321
        %p1220 = pneg %p318
        %p1221 = pneg %p342
        %p1222 = pneg %p339
        %p1223 = pneg %p363
        %p1224 = pneg %p360
        %p1225 = pneg %p384
        %p1226 = pneg %p381
        %p1227 = pneg %p405
        %p1228 = pneg %p402
        %p1229 = pneg %p426
        %p1230 = pneg %p423
        %p1231 = pneg %p447
        %p1232 = pneg %p444
        %p1233 = pneg %p468
        %p1234 = pneg %p465
        %p1235 = pneg %p489
        %p1236 = pneg %p486
        %p1237 = pneg %p510
        %p1238 = pneg %p507
        %p1239 = pneg %p531
        %p1240 = pneg %p528
        %p1241 = pneg %p552
        %p1242 = pneg %p549
        %p1243 = pneg %p573
        %p1244 = pneg %p570
        %p1245 = pneg %p594
        %p1246 = pneg %p591
        %p1247 = pneg %p615
        %p1248 = pneg %p612
        %p1249 = pneg %p636
        %p1250 = pneg %p633
        %p1251 = pneg %p657
        %p1252 = pneg %p654
        %p1253 = pneg %p678
        %p1254 = pneg %p675
        %p1255 = pneg %p699
        %p1256 = pneg %p696
        %p1257 = pneg %p720
        %p1258 = pneg %p717
        %p1259 = pneg %p741
        %p1260 = pneg %p738
        %p1261 = pneg %p762
        %p1262 = pneg %p759
        %p1263 = pneg %p783
        %p1264 = pneg %p780
        %p1265 = pneg %p809
        %p1266 = pneg %p806
        %p1267 = scmp.lt.s32.totalorder %s90, 1
        %s1268 = scalar_select %p1267, %s90, 1
        %s1269 = smul.addr %s1268, 4
        %s1270 = smul.addr %s1269, 8
        %s1271 = scalar_lea.vmem %s67, %s1270
        %p1272 = scmp.lt.s32.totalorder %s90, 1
        %s1273 = scalar_select %p1272, %s90, 1
        %s1274 = smul.addr %s1273, 4
        %s1275 = smul.addr %s1274, 8
        %s1276 = scalar_lea.vmem %s67, %s1275
        %1278 = vst [vmem:[#allocation2] sm:$0xff] 0.0
        %1279 = vst [vmem:[#allocation2 + $0x8] sm:$0xff] 0.0
        %1280 = vst [vmem:[#allocation2 + $0x10] sm:$0xff] 0.0
        %1281 = vst [vmem:[#allocation2 + $0x18] sm:$0xff] 0.0
        %1282 = vst [vmem:[#allocation2 + $0x20] sm:$0xff] 0.0
        %1283 = vst [vmem:[#allocation2 + $0x28] sm:$0xff] 0.0
        %v1284 = vld [vmem:[%s1121] sm:$0xff]
        %v1285 = vld [vmem:[#allocation5] sm:$0xf]
        %v1286 = vld [vmem:[#allocation5 + $0x4] sm:$0xf]
        %v1287 = vld [vmem:[#allocation5 + $0x8] sm:$0xf]
        %v1288 = vld [vmem:[#allocation5 + $0xc] sm:$0xf]
        %v1289 = vld [vmem:[#allocation7] sm:$0x1]
        %v1290 = vpack.c.bf16 %v1284, %v1284
        %v1292 = vlaneseq
        %v1293 = vshrl.u32 %v1292, 7
        %v1294 = vsub.s32 0, %v1293
        %v1295 = vrot.slane %v1289, %v1294
        %v1301 = vunpack.c.l.b16 %v1285
        %v1302 = vunpack.c.l.b16 %v1286
        %v1303 = vunpack.c.l.b16 %v1287
        %v1304 = vunpack.c.l.b16 %v1288
        %v1305 = vpack.c.b16 %v1302, %v1301
        %v1306 = vpack.c.b16 %v1304, %v1303
        %vm1309 = vcmask 261120
        %v1311 = vsel %vm1309, %v1290, 0
        %1313 = vmatprep.subr.bf16.mxu0 0
        %1314 = vmatpush1.bf16.msra.mxu0 0
        %1315 = vmatprep.subr.bf16.mxu0 0
        %1316 = vmatpush1.bf16.msra.mxu0 0
        %1317 = vmatprep.subr.bf16.mxu0 0
        %1318 = vmatpush1.bf16.msra.mxu0 0
        %1319 = vmatprep.subr.bf16.mxu0 0
        %1320 = vmatpush1.bf16.msra.mxu0 0
        %1321 = vmatprep.subr.bf16.mxu0 0
        %1322 = vmatpush1.bf16.msra.mxu0 0
        %1323 = vmatprep.subr.bf16.mxu0 0
        %1324 = vmatpush1.bf16.msra.mxu0 0
        %1325 = vmatprep.subr.bf16.mxu0 0
        %1326 = vmatpush1.bf16.msra.mxu0 %v1306
        %1327 = vmatprep.subr.bf16.mxu0 0
        %1328 = vmatpush1.bf16.msra.mxu0 %v1305
        %1329 = vmatprep.subr.bf16.mxu0 0
        %1330 = vmatpush2.bf16.msra.mxu0 0
        %1331 = vmatprep.subr.bf16.mxu0 0
        %1332 = vmatpush2.bf16.msra.mxu0 0
        %1333 = vmatprep.subr.bf16.mxu0 0
        %1334 = vmatpush2.bf16.msra.mxu0 0
        %1335 = vmatprep.subr.bf16.mxu0 0
        %1336 = vmatpush2.bf16.msra.mxu0 0
        %1337 = vmatprep.subr.bf16.mxu0 0
        %1338 = vmatpush2.bf16.msra.mxu0 0
        %1339 = vmatprep.subr.bf16.mxu0 0
        %1340 = vmatpush2.bf16.msra.mxu0 0
        %1341 = vmatprep.subr.bf16.mxu0 0
        %1342 = vmatpush2.bf16.msra.mxu0 0
        %1343 = vmatprep.subr.bf16.mxu0 0
        %1344 = vmatpush2.bf16.msra.mxu0 0
        %1345 = vmatprep.mubr.bf16.mxu0 0
        %1346 = vmatmul.mubr.bf16.gmra.mxu0 %v1311
        %v1347 = vpop.f32.mrf.mxu0
        %v1348 = vadd.f32 %v1295, %v1347
        %v1349 = vpop.f32.mrf.mxu0
        %v1350 = vpop.f32.mrf.mxu0
        %v1351 = vpop.f32.mrf.mxu0
        %1352 = vdwg.mxu0
        %v1353 = vld [vmem:[#allocation8] sm:$0xff]
        %v1354 = vld [vmem:[#allocation8 + $0x8] sm:$0xff]
        %v1355 = vld [vmem:[#allocation8 + $0x10] sm:$0xff]
        %v1356 = vld [vmem:[#allocation8 + $0x18] sm:$0xff]
        %v1357 = vld [vmem:[#allocation8 + $0x20] sm:$0xff]
        %v1358 = vld [vmem:[#allocation8 + $0x28] sm:$0xff]
        %v1359 = vld [vmem:[#allocation8 + $0x30] sm:$0xff]
        %v1360 = vld [vmem:[#allocation8 + $0x38] sm:$0xff]
        %v1361 = vld [vmem:[#allocation8 + $0x40] sm:$0xff]
        %v1362 = vld [vmem:[#allocation8 + $0x48] sm:$0xff]
        %v1363 = vld [vmem:[#allocation8 + $0x50] sm:$0xff]
        %v1364 = vld [vmem:[#allocation8 + $0x58] sm:$0xff]
        %v1365 = vld [vmem:[#allocation8 + $0x60] sm:$0xff]
        %v1366 = vld [vmem:[#allocation8 + $0x68] sm:$0xff]
        %v1367 = vld [vmem:[#allocation8 + $0x70] sm:$0xff]
        %v1368 = vld [vmem:[#allocation8 + $0x78] sm:$0xff]
        %v1369 = vld [vmem:[#allocation8 + $0x80] sm:$0xff]
        %v1370 = vld [vmem:[#allocation8 + $0x88] sm:$0xff]
        %v1371 = vld [vmem:[#allocation8 + $0x90] sm:$0xff]
        %v1372 = vld [vmem:[#allocation8 + $0x98] sm:$0xff]
        %v1373 = vld [vmem:[#allocation8 + $0xa0] sm:$0xff]
        %v1374 = vld [vmem:[#allocation8 + $0xa8] sm:$0xff]
        %v1375 = vld [vmem:[#allocation8 + $0xb0] sm:$0xff]
        %v1376 = vld [vmem:[#allocation8 + $0xb8] sm:$0xff]
        %v1377 = vld [vmem:[#allocation8 + $0xc0] sm:$0xff]
        %v1378 = vld [vmem:[#allocation8 + $0xc8] sm:$0xff]
        %v1379 = vld [vmem:[#allocation8 + $0xd0] sm:$0xff]
        %v1380 = vld [vmem:[#allocation8 + $0xd8] sm:$0xff]
        %v1381 = vld [vmem:[#allocation8 + $0xe0] sm:$0xff]
        %v1382 = vld [vmem:[#allocation8 + $0xe8] sm:$0xff]
        %v1383 = vld [vmem:[#allocation8 + $0xf0] sm:$0xff]
        %v1384 = vld [vmem:[#allocation8 + $0xf8] sm:$0xff]
        %v1385 = vld [vmem:[#allocation8 + $0x100] sm:$0xff]
        %v1386 = vld [vmem:[#allocation8 + $0x108] sm:$0xff]
        %v1387 = vld [vmem:[#allocation8 + $0x110] sm:$0xff]
        %v1388 = vld [vmem:[#allocation8 + $0x118] sm:$0xff]
        %v1389 = vld [vmem:[#allocation8 + $0x120] sm:$0xff]
        %v1390 = vld [vmem:[#allocation8 + $0x128] sm:$0xff]
        %v1391 = vld [vmem:[#allocation8 + $0x130] sm:$0xff]
        %v1392 = vld [vmem:[#allocation8 + $0x138] sm:$0xff]
        %v1393 = vld [vmem:[#allocation8 + $0x140] sm:$0xff]
        %v1394 = vld [vmem:[#allocation8 + $0x148] sm:$0xff]
        %v1395 = vld [vmem:[#allocation8 + $0x150] sm:$0xff]
        %v1396 = vld [vmem:[#allocation8 + $0x158] sm:$0xff]
        %v1397 = vld [vmem:[#allocation8 + $0x160] sm:$0xff]
        %v1398 = vld [vmem:[#allocation8 + $0x168] sm:$0xff]
        %v1399 = vld [vmem:[#allocation8 + $0x170] sm:$0xff]
        %v1400 = vld [vmem:[#allocation8 + $0x178] sm:$0xff]
        %v1401 = vld [vmem:[%s9] sm:$0x3]
        %1402 = vst [vmem:[#allocation2 + $0x8] sm:$0xff] %v1348
        %v1403 = vld [vmem:[#allocation2 + $0x7] sm:$0xff]
        %v1404 = vld [vmem:[#allocation2 + $0x9] sm:$0xff]
        %v1405 = vpack.c.bf16 %v1403, %v1403
        %v1406 = vpack.c.bf16 %v1348, %v1348
        %v1407 = vpack.c.bf16 %v1404, %v1404
        %v1409 = vlaneseq
        %v1410 = vshrl.u32 %v1409, 7
        %v1411 = vsub.s32 0, %v1410
        %v1412 = vrot.slane %v1401, %v1411
        %v1413 = vlaneseq
        %v1414 = vshrl.u32 %v1413, 7
        %v1415 = vsub.s32 1, %v1414
        %v1416 = vrot.slane %v1401, %v1415
        %v1467 = vunpack.c.l.b16 %v1353
        %v1468 = vunpack.c.h.b16 %v1353
        %v1469 = vunpack.c.l.b16 %v1354
        %v1470 = vunpack.c.h.b16 %v1354
        %v1471 = vunpack.c.l.b16 %v1355
        %v1472 = vunpack.c.h.b16 %v1355
        %v1473 = vunpack.c.l.b16 %v1356
        %v1474 = vunpack.c.h.b16 %v1356
        %v1475 = vunpack.c.l.b16 %v1357
        %v1476 = vunpack.c.h.b16 %v1357
        %v1477 = vunpack.c.l.b16 %v1358
        %v1478 = vunpack.c.h.b16 %v1358
        %v1479 = vunpack.c.l.b16 %v1359
        %v1480 = vunpack.c.h.b16 %v1359
        %v1481 = vunpack.c.l.b16 %v1360
        %v1482 = vunpack.c.h.b16 %v1360
        %v1483 = vunpack.c.l.b16 %v1361
        %v1484 = vunpack.c.h.b16 %v1361
        %v1485 = vunpack.c.l.b16 %v1362
        %v1486 = vunpack.c.h.b16 %v1362
        %v1487 = vunpack.c.l.b16 %v1363
        %v1488 = vunpack.c.h.b16 %v1363
        %v1489 = vunpack.c.l.b16 %v1364
        %v1490 = vunpack.c.h.b16 %v1364
        %v1491 = vunpack.c.l.b16 %v1365
        %v1492 = vunpack.c.h.b16 %v1365
        %v1493 = vunpack.c.l.b16 %v1366
        %v1494 = vunpack.c.h.b16 %v1366
        %v1495 = vunpack.c.l.b16 %v1367
        %v1496 = vunpack.c.h.b16 %v1367
        %v1497 = vunpack.c.l.b16 %v1368
        %v1498 = vunpack.c.h.b16 %v1368
        %v1499 = vunpack.c.l.b16 %v1369
        %v1500 = vunpack.c.h.b16 %v1369
        %v1501 = vunpack.c.l.b16 %v1370
        %v1502 = vunpack.c.h.b16 %v1370
        %v1503 = vunpack.c.l.b16 %v1371
        %v1504 = vunpack.c.h.b16 %v1371
        %v1505 = vunpack.c.l.b16 %v1372
        %v1506 = vunpack.c.h.b16 %v1372
        %v1507 = vunpack.c.l.b16 %v1373
        %v1508 = vunpack.c.h.b16 %v1373
        %v1509 = vunpack.c.l.b16 %v1374
        %v1510 = vunpack.c.h.b16 %v1374
        %v1511 = vunpack.c.l.b16 %v1375
        %v1512 = vunpack.c.h.b16 %v1375
        %v1513 = vunpack.c.l.b16 %v1376
        %v1514 = vunpack.c.h.b16 %v1376
        %v1515 = vunpack.c.l.b16 %v1377
        %v1516 = vunpack.c.h.b16 %v1377
        %v1517 = vunpack.c.l.b16 %v1378
        %v1518 = vunpack.c.h.b16 %v1378
        %v1519 = vunpack.c.l.b16 %v1379
        %v1520 = vunpack.c.h.b16 %v1379
        %v1521 = vunpack.c.l.b16 %v1380
        %v1522 = vunpack.c.h.b16 %v1380
        %v1523 = vunpack.c.l.b16 %v1381
        %v1524 = vunpack.c.h.b16 %v1381
        %v1525 = vunpack.c.l.b16 %v1382
        %v1526 = vunpack.c.h.b16 %v1382
        %v1527 = vunpack.c.l.b16 %v1383
        %v1528 = vunpack.c.h.b16 %v1383
        %v1529 = vunpack.c.l.b16 %v1384
        %v1530 = vunpack.c.h.b16 %v1384
        %v1531 = vunpack.c.l.b16 %v1385
        %v1532 = vunpack.c.h.b16 %v1385
        %v1533 = vunpack.c.l.b16 %v1386
        %v1534 = vunpack.c.h.b16 %v1386
        %v1535 = vunpack.c.l.b16 %v1387
        %v1536 = vunpack.c.h.b16 %v1387
        %v1537 = vunpack.c.l.b16 %v1388
        %v1538 = vunpack.c.h.b16 %v1388
        %v1539 = vunpack.c.l.b16 %v1389
        %v1540 = vunpack.c.h.b16 %v1389
        %v1541 = vunpack.c.l.b16 %v1390
        %v1542 = vunpack.c.h.b16 %v1390
        %v1543 = vunpack.c.l.b16 %v1391
        %v1544 = vunpack.c.h.b16 %v1391
        %v1545 = vunpack.c.l.b16 %v1392
        %v1546 = vunpack.c.h.b16 %v1392
        %v1547 = vunpack.c.l.b16 %v1393
        %v1548 = vunpack.c.h.b16 %v1393
        %v1549 = vunpack.c.l.b16 %v1394
        %v1550 = vunpack.c.h.b16 %v1394
        %v1551 = vunpack.c.l.b16 %v1395
        %v1552 = vunpack.c.h.b16 %v1395
        %v1553 = vunpack.c.l.b16 %v1396
        %v1554 = vunpack.c.h.b16 %v1396
        %v1555 = vunpack.c.l.b16 %v1397
        %v1556 = vunpack.c.h.b16 %v1397
        %v1557 = vunpack.c.l.b16 %v1398
        %v1558 = vunpack.c.h.b16 %v1398
        %v1559 = vunpack.c.l.b16 %v1399
        %v1560 = vunpack.c.h.b16 %v1399
        %v1561 = vunpack.c.l.b16 %v1400
        %v1562 = vunpack.c.h.b16 %v1400
        %v1563 = vpack.c.b16 %v1469, %v1467
        %v1564 = vpack.c.b16 %v1470, %v1468
        %v1565 = vpack.c.b16 %v1473, %v1471
        %v1566 = vpack.c.b16 %v1474, %v1472
        %v1567 = vpack.c.b16 %v1477, %v1475
        %v1568 = vpack.c.b16 %v1478, %v1476
        %v1569 = vpack.c.b16 %v1481, %v1479
        %v1570 = vpack.c.b16 %v1482, %v1480
        %v1571 = vpack.c.b16 %v1485, %v1483
        %v1572 = vpack.c.b16 %v1486, %v1484
        %v1573 = vpack.c.b16 %v1489, %v1487
        %v1574 = vpack.c.b16 %v1490, %v1488
        %v1575 = vpack.c.b16 %v1493, %v1491
        %v1576 = vpack.c.b16 %v1494, %v1492
        %v1577 = vpack.c.b16 %v1497, %v1495
        %v1578 = vpack.c.b16 %v1498, %v1496
        %v1579 = vpack.c.b16 %v1501, %v1499
        %v1580 = vpack.c.b16 %v1502, %v1500
        %v1581 = vpack.c.b16 %v1505, %v1503
        %v1582 = vpack.c.b16 %v1506, %v1504
        %v1583 = vpack.c.b16 %v1509, %v1507
        %v1584 = vpack.c.b16 %v1510, %v1508
        %v1585 = vpack.c.b16 %v1513, %v1511
        %v1586 = vpack.c.b16 %v1514, %v1512
        %v1587 = vpack.c.b16 %v1517, %v1515
        %v1588 = vpack.c.b16 %v1518, %v1516
        %v1589 = vpack.c.b16 %v1521, %v1519
        %v1590 = vpack.c.b16 %v1522, %v1520
        %v1591 = vpack.c.b16 %v1525, %v1523
        %v1592 = vpack.c.b16 %v1526, %v1524
        %v1593 = vpack.c.b16 %v1529, %v1527
        %v1594 = vpack.c.b16 %v1530, %v1528
        %v1595 = vpack.c.b16 %v1533, %v1531
        %v1596 = vpack.c.b16 %v1534, %v1532
        %v1597 = vpack.c.b16 %v1537, %v1535
        %v1598 = vpack.c.b16 %v1538, %v1536
        %v1599 = vpack.c.b16 %v1541, %v1539
        %v1600 = vpack.c.b16 %v1542, %v1540
        %v1601 = vpack.c.b16 %v1545, %v1543
        %v1602 = vpack.c.b16 %v1546, %v1544
        %v1603 = vpack.c.b16 %v1549, %v1547
        %v1604 = vpack.c.b16 %v1550, %v1548
        %v1605 = vpack.c.b16 %v1553, %v1551
        %v1606 = vpack.c.b16 %v1554, %v1552
        %v1607 = vpack.c.b16 %v1557, %v1555
        %v1608 = vpack.c.b16 %v1558, %v1556
        %v1609 = vpack.c.b16 %v1561, %v1559
        %v1610 = vpack.c.b16 %v1562, %v1560
        %1659 = vmatprep.subr.bf16.mxu0 %v1578
        %1660 = vmatpush1.bf16.msra.mxu0 %v1577
        %1661 = vmatprep.subr.bf16.mxu0 %v1576
        %1662 = vmatpush1.bf16.msra.mxu0 %v1575
        %1663 = vmatprep.subr.bf16.mxu0 %v1574
        %1664 = vmatpush1.bf16.msra.mxu0 %v1573
        %1665 = vmatprep.subr.bf16.mxu0 %v1572
        %1666 = vmatpush1.bf16.msra.mxu0 %v1571
        %1667 = vmatprep.subr.bf16.mxu0 %v1570
        %1668 = vmatpush1.bf16.msra.mxu0 %v1569
        %1669 = vmatprep.subr.bf16.mxu0 %v1568
        %1670 = vmatpush1.bf16.msra.mxu0 %v1567
        %1671 = vmatprep.subr.bf16.mxu0 %v1566
        %1672 = vmatpush1.bf16.msra.mxu0 %v1565
        %1673 = vmatprep.subr.bf16.mxu0 %v1564
        %1674 = vmatpush1.bf16.msra.mxu0 %v1563
        %1675 = vmatprep.subr.bf16.mxu0 %v1594
        %1676 = vmatpush2.bf16.msra.mxu0 %v1593
        %1677 = vmatprep.subr.bf16.mxu0 %v1592
        %1678 = vmatpush2.bf16.msra.mxu0 %v1591
        %1679 = vmatprep.subr.bf16.mxu0 %v1590
        %1680 = vmatpush2.bf16.msra.mxu0 %v1589
        %1681 = vmatprep.subr.bf16.mxu0 %v1588
        %1682 = vmatpush2.bf16.msra.mxu0 %v1587
        %1683 = vmatprep.subr.bf16.mxu0 %v1586
        %1684 = vmatpush2.bf16.msra.mxu0 %v1585
        %1685 = vmatprep.subr.bf16.mxu0 %v1584
        %1686 = vmatpush2.bf16.msra.mxu0 %v1583
        %1687 = vmatprep.subr.bf16.mxu0 %v1582
        %1688 = vmatpush2.bf16.msra.mxu0 %v1581
        %1689 = vmatprep.subr.bf16.mxu0 %v1580
        %1690 = vmatpush2.bf16.msra.mxu0 %v1579
        %1691 = vmatprep.mubr.bf16.mxu0 %v1406
        %1692 = vmatmul.mubr.bf16.gmra.mxu0 %v1405
        %v1693 = vpop.f32.mrf.mxu0
        %v1694 = vadd.f32 %v1412, %v1693
        %v1695 = vpop.f32.mrf.mxu0
        %v1696 = vadd.f32 %v1416, %v1695
        %v1697 = vpop.f32.mrf.mxu0
        %v1698 = vpop.f32.mrf.mxu0
        %1699 = vdwg.mxu0
        %1700 = vmatprep.subr.bf16.mxu0 %v1610
        %1701 = vmatpush1.bf16.msra.mxu0 %v1609
        %1702 = vmatprep.subr.bf16.mxu0 %v1608
        %1703 = vmatpush1.bf16.msra.mxu0 %v1607
        %1704 = vmatprep.subr.bf16.mxu0 %v1606
        %1705 = vmatpush1.bf16.msra.mxu0 %v1605
        %1706 = vmatprep.subr.bf16.mxu0 %v1604
        %1707 = vmatpush1.bf16.msra.mxu0 %v1603
        %1708 = vmatprep.subr.bf16.mxu0 %v1602
        %1709 = vmatpush1.bf16.msra.mxu0 %v1601
        %1710 = vmatprep.subr.bf16.mxu0 %v1600
        %1711 = vmatpush1.bf16.msra.mxu0 %v1599
        %1712 = vmatprep.subr.bf16.mxu0 %v1598
        %1713 = vmatpush1.bf16.msra.mxu0 %v1597
        %1714 = vmatprep.subr.bf16.mxu0 %v1596
        %1715 = vmatpush1.bf16.msra.mxu0 %v1595
        %1716 = vmatprep.subr.bf16.mxu0 0
        %1717 = vmatpush2.bf16.msra.mxu0 0
        %1718 = vmatprep.subr.bf16.mxu0 0
        %1719 = vmatpush2.bf16.msra.mxu0 0
        %1720 = vmatprep.subr.bf16.mxu0 0
        %1721 = vmatpush2.bf16.msra.mxu0 0
        %1722 = vmatprep.subr.bf16.mxu0 0
        %1723 = vmatpush2.bf16.msra.mxu0 0
        %1724 = vmatprep.subr.bf16.mxu0 0
        %1725 = vmatpush2.bf16.msra.mxu0 0
        %1726 = vmatprep.subr.bf16.mxu0 0
        %1727 = vmatpush2.bf16.msra.mxu0 0
        %1728 = vmatprep.subr.bf16.mxu0 0
        %1729 = vmatpush2.bf16.msra.mxu0 0
        %1730 = vmatprep.subr.bf16.mxu0 0
        %1731 = vmatpush2.bf16.msra.mxu0 0
        %1732 = vmatprep.mubr.bf16.mxu0 0
        %1733 = vmatmul.mubr.bf16.gmra.mxu0 %v1407
        %v1734 = vpop.f32.mrf.mxu0
        %v1735 = vadd.f32 %v1694, %v1734
        %v1736 = vpop.f32.mrf.mxu0
        %v1737 = vadd.f32 %v1696, %v1736
        %v1738 = vpop.f32.mrf.mxu0
        %v1739 = vpop.f32.mrf.mxu0
        %1740 = vdwg.mxu0
        %v1741 = vxor.u32 %v1737, 2147483648
        %v1742 = vmul.f32 %v1741, 1.442695
        %v1743 = vpow.pop %v1742
        %v1744 = vadd.f32 %v1743, 1.0
        %v1745 = vrcp.pop %v1744
        %v1746 = vmul.f32 1.0, %v1745
        %v1747 = vsub.f32 %v1735, %v1348
        %v1748 = vmul.f32 %v1746, %v1747
        %v1749 = vadd.f32 %v1348, %v1748
        %v1750 = vld [vmem:[#allocation10] sm:$0xff]
        %v1751 = vld [vmem:[#allocation10 + $0x8] sm:$0xff]
        %v1752 = vld [vmem:[#allocation10 + $0x10] sm:$0xff]
        %v1753 = vld [vmem:[#allocation10 + $0x18] sm:$0xff]
        %v1754 = vld [vmem:[#allocation10 + $0x20] sm:$0xff]
        %v1755 = vld [vmem:[#allocation10 + $0x28] sm:$0xff]
        %v1756 = vld [vmem:[#allocation10 + $0x30] sm:$0xff]
        %v1757 = vld [vmem:[#allocation10 + $0x38] sm:$0xff]
        %v1758 = vld [vmem:[#allocation10 + $0x40] sm:$0xff]
        %v1759 = vld [vmem:[#allocation10 + $0x48] sm:$0xff]
        %v1760 = vld [vmem:[#allocation10 + $0x50] sm:$0xff]
        %v1761 = vld [vmem:[#allocation10 + $0x58] sm:$0xff]
        %v1762 = vld [vmem:[#allocation10 + $0x60] sm:$0xff]
        %v1763 = vld [vmem:[#allocation10 + $0x68] sm:$0xff]
        %v1764 = vld [vmem:[#allocation10 + $0x70] sm:$0xff]
        %v1765 = vld [vmem:[#allocation10 + $0x78] sm:$0xff]
        %v1766 = vld [vmem:[#allocation10 + $0x80] sm:$0xff]
        %v1767 = vld [vmem:[#allocation10 + $0x88] sm:$0xff]
        %v1768 = vld [vmem:[#allocation10 + $0x90] sm:$0xff]
        %v1769 = vld [vmem:[#allocation10 + $0x98] sm:$0xff]
        %v1770 = vld [vmem:[#allocation10 + $0xa0] sm:$0xff]
        %v1771 = vld [vmem:[#allocation10 + $0xa8] sm:$0xff]
        %v1772 = vld [vmem:[#allocation10 + $0xb0] sm:$0xff]
        %v1773 = vld [vmem:[#allocation10 + $0xb8] sm:$0xff]
        %v1774 = vld [vmem:[#allocation10 + $0xc0] sm:$0xff]
        %v1775 = vld [vmem:[#allocation10 + $0xc8] sm:$0xff]
        %v1776 = vld [vmem:[#allocation10 + $0xd0] sm:$0xff]
        %v1777 = vld [vmem:[#allocation10 + $0xd8] sm:$0xff]
        %v1778 = vld [vmem:[#allocation10 + $0xe0] sm:$0xff]
        %v1779 = vld [vmem:[#allocation10 + $0xe8] sm:$0xff]
        %v1780 = vld [vmem:[#allocation10 + $0xf0] sm:$0xff]
        %v1781 = vld [vmem:[#allocation10 + $0xf8] sm:$0xff]
        %v1782 = vld [vmem:[#allocation10 + $0x100] sm:$0xff]
        %v1783 = vld [vmem:[#allocation10 + $0x108] sm:$0xff]
        %v1784 = vld [vmem:[#allocation10 + $0x110] sm:$0xff]
        %v1785 = vld [vmem:[#allocation10 + $0x118] sm:$0xff]
        %v1786 = vld [vmem:[#allocation10 + $0x120] sm:$0xff]
        %v1787 = vld [vmem:[#allocation10 + $0x128] sm:$0xff]
        %v1788 = vld [vmem:[#allocation10 + $0x130] sm:$0xff]
        %v1789 = vld [vmem:[#allocation10 + $0x138] sm:$0xff]
        %v1790 = vld [vmem:[#allocation10 + $0x140] sm:$0xff]
        %v1791 = vld [vmem:[#allocation10 + $0x148] sm:$0xff]
        %v1792 = vld [vmem:[#allocation10 + $0x150] sm:$0xff]
        %v1793 = vld [vmem:[#allocation10 + $0x158] sm:$0xff]
        %v1794 = vld [vmem:[#allocation10 + $0x160] sm:$0xff]
        %v1795 = vld [vmem:[#allocation10 + $0x168] sm:$0xff]
        %v1796 = vld [vmem:[#allocation10 + $0x170] sm:$0xff]
        %v1797 = vld [vmem:[#allocation10 + $0x178] sm:$0xff]
        %v1798 = vld [vmem:[%s13] sm:$0x3]
        %1799 = vst [vmem:[#allocation2 + $0x8] sm:$0xff] %v1749
        %v1800 = vld [vmem:[#allocation2 + $0x5] sm:$0xff]
        %v1801 = vld [vmem:[#allocation2 + $0xb] sm:$0xff]
        %v1802 = vpack.c.bf16 %v1800, %v1800
        %v1803 = vpack.c.bf16 %v1749, %v1749
        %v1804 = vpack.c.bf16 %v1801, %v1801
        %v1806 = vlaneseq
        %v1807 = vshrl.u32 %v1806, 7
        %v1808 = vsub.s32 0, %v1807
        %v1809 = vrot.slane %v1798, %v1808
        %v1810 = vlaneseq
        %v1811 = vshrl.u32 %v1810, 7
        %v1812 = vsub.s32 1, %v1811
        %v1813 = vrot.slane %v1798, %v1812
        %v1864 = vunpack.c.l.b16 %v1750
        %v1865 = vunpack.c.h.b16 %v1750
        %v1866 = vunpack.c.l.b16 %v1751
        %v1867 = vunpack.c.h.b16 %v1751
        %v1868 = vunpack.c.l.b16 %v1752
        %v1869 = vunpack.c.h.b16 %v1752
        %v1870 = vunpack.c.l.b16 %v1753
        %v1871 = vunpack.c.h.b16 %v1753
        %v1872 = vunpack.c.l.b16 %v1754
        %v1873 = vunpack.c.h.b16 %v1754
        %v1874 = vunpack.c.l.b16 %v1755
        %v1875 = vunpack.c.h.b16 %v1755
        %v1876 = vunpack.c.l.b16 %v1756
        %v1877 = vunpack.c.h.b16 %v1756
        %v1878 = vunpack.c.l.b16 %v1757
        %v1879 = vunpack.c.h.b16 %v1757
        %v1880 = vunpack.c.l.b16 %v1758
        %v1881 = vunpack.c.h.b16 %v1758
        %v1882 = vunpack.c.l.b16 %v1759
        %v1883 = vunpack.c.h.b16 %v1759
        %v1884 = vunpack.c.l.b16 %v1760
        %v1885 = vunpack.c.h.b16 %v1760
        %v1886 = vunpack.c.l.b16 %v1761
        %v1887 = vunpack.c.h.b16 %v1761
        %v1888 = vunpack.c.l.b16 %v1762
        %v1889 = vunpack.c.h.b16 %v1762
        %v1890 = vunpack.c.l.b16 %v1763
        %v1891 = vunpack.c.h.b16 %v1763
        %v1892 = vunpack.c.l.b16 %v1764
        %v1893 = vunpack.c.h.b16 %v1764
        %v1894 = vunpack.c.l.b16 %v1765
        %v1895 = vunpack.c.h.b16 %v1765
        %v1896 = vunpack.c.l.b16 %v1766
        %v1897 = vunpack.c.h.b16 %v1766
        %v1898 = vunpack.c.l.b16 %v1767
        %v1899 = vunpack.c.h.b16 %v1767
        %v1900 = vunpack.c.l.b16 %v1768
        %v1901 = vunpack.c.h.b16 %v1768
        %v1902 = vunpack.c.l.b16 %v1769
        %v1903 = vunpack.c.h.b16 %v1769
        %v1904 = vunpack.c.l.b16 %v1770
        %v1905 = vunpack.c.h.b16 %v1770
        %v1906 = vunpack.c.l.b16 %v1771
        %v1907 = vunpack.c.h.b16 %v1771
        %v1908 = vunpack.c.l.b16 %v1772
        %v1909 = vunpack.c.h.b16 %v1772
        %v1910 = vunpack.c.l.b16 %v1773
        %v1911 = vunpack.c.h.b16 %v1773
        %v1912 = vunpack.c.l.b16 %v1774
        %v1913 = vunpack.c.h.b16 %v1774
        %v1914 = vunpack.c.l.b16 %v1775
        %v1915 = vunpack.c.h.b16 %v1775
        %v1916 = vunpack.c.l.b16 %v1776
        %v1917 = vunpack.c.h.b16 %v1776
        %v1918 = vunpack.c.l.b16 %v1777
        %v1919 = vunpack.c.h.b16 %v1777
        %v1920 = vunpack.c.l.b16 %v1778
        %v1921 = vunpack.c.h.b16 %v1778
        %v1922 = vunpack.c.l.b16 %v1779
        %v1923 = vunpack.c.h.b16 %v1779
        %v1924 = vunpack.c.l.b16 %v1780
        %v1925 = vunpack.c.h.b16 %v1780
        %v1926 = vunpack.c.l.b16 %v1781
        %v1927 = vunpack.c.h.b16 %v1781
        %v1928 = vunpack.c.l.b16 %v1782
        %v1929 = vunpack.c.h.b16 %v1782
        %v1930 = vunpack.c.l.b16 %v1783
        %v1931 = vunpack.c.h.b16 %v1783
        %v1932 = vunpack.c.l.b16 %v1784
        %v1933 = vunpack.c.h.b16 %v1784
        %v1934 = vunpack.c.l.b16 %v1785
        %v1935 = vunpack.c.h.b16 %v1785
        %v1936 = vunpack.c.l.b16 %v1786
        %v1937 = vunpack.c.h.b16 %v1786
        %v1938 = vunpack.c.l.b16 %v1787
        %v1939 = vunpack.c.h.b16 %v1787
        %v1940 = vunpack.c.l.b16 %v1788
        %v1941 = vunpack.c.h.b16 %v1788
        %v1942 = vunpack.c.l.b16 %v1789
        %v1943 = vunpack.c.h.b16 %v1789
        %v1944 = vunpack.c.l.b16 %v1790
        %v1945 = vunpack.c.h.b16 %v1790
        %v1946 = vunpack.c.l.b16 %v1791
        %v1947 = vunpack.c.h.b16 %v1791
        %v1948 = vunpack.c.l.b16 %v1792
        %v1949 = vunpack.c.h.b16 %v1792
        %v1950 = vunpack.c.l.b16 %v1793
        %v1951 = vunpack.c.h.b16 %v1793
        %v1952 = vunpack.c.l.b16 %v1794
        %v1953 = vunpack.c.h.b16 %v1794
        %v1954 = vunpack.c.l.b16 %v1795
        %v1955 = vunpack.c.h.b16 %v1795
        %v1956 = vunpack.c.l.b16 %v1796
        %v1957 = vunpack.c.h.b16 %v1796
        %v1958 = vunpack.c.l.b16 %v1797
        %v1959 = vunpack.c.h.b16 %v1797
        %v1960 = vpack.c.b16 %v1866, %v1864
        %v1961 = vpack.c.b16 %v1867, %v1865
        %v1962 = vpack.c.b16 %v1870, %v1868
        %v1963 = vpack.c.b16 %v1871, %v1869
        %v1964 = vpack.c.b16 %v1874, %v1872
        %v1965 = vpack.c.b16 %v1875, %v1873
        %v1966 = vpack.c.b16 %v1878, %v1876
        %v1967 = vpack.c.b16 %v1879, %v1877
        %v1968 = vpack.c.b16 %v1882, %v1880
        %v1969 = vpack.c.b16 %v1883, %v1881
        %v1970 = vpack.c.b16 %v1886, %v1884
        %v1971 = vpack.c.b16 %v1887, %v1885
        %v1972 = vpack.c.b16 %v1890, %v1888
        %v1973 = vpack.c.b16 %v1891, %v1889
        %v1974 = vpack.c.b16 %v1894, %v1892
        %v1975 = vpack.c.b16 %v1895, %v1893
        %v1976 = vpack.c.b16 %v1898, %v1896
        %v1977 = vpack.c.b16 %v1899, %v1897
        %v1978 = vpack.c.b16 %v1902, %v1900
        %v1979 = vpack.c.b16 %v1903, %v1901
        %v1980 = vpack.c.b16 %v1906, %v1904
        %v1981 = vpack.c.b16 %v1907, %v1905
        %v1982 = vpack.c.b16 %v1910, %v1908
        %v1983 = vpack.c.b16 %v1911, %v1909
        %v1984 = vpack.c.b16 %v1914, %v1912
        %v1985 = vpack.c.b16 %v1915, %v1913
        %v1986 = vpack.c.b16 %v1918, %v1916
        %v1987 = vpack.c.b16 %v1919, %v1917
        %v1988 = vpack.c.b16 %v1922, %v1920
        %v1989 = vpack.c.b16 %v1923, %v1921
        %v1990 = vpack.c.b16 %v1926, %v1924
        %v1991 = vpack.c.b16 %v1927, %v1925
        %v1992 = vpack.c.b16 %v1930, %v1928
        %v1993 = vpack.c.b16 %v1931, %v1929
        %v1994 = vpack.c.b16 %v1934, %v1932
        %v1995 = vpack.c.b16 %v1935, %v1933
        %v1996 = vpack.c.b16 %v1938, %v1936
        %v1997 = vpack.c.b16 %v1939, %v1937
        %v1998 = vpack.c.b16 %v1942, %v1940
        %v1999 = vpack.c.b16 %v1943, %v1941
        %v2000 = vpack.c.b16 %v1946, %v1944
        %v2001 = vpack.c.b16 %v1947, %v1945
        %v2002 = vpack.c.b16 %v1950, %v1948
        %v2003 = vpack.c.b16 %v1951, %v1949
        %v2004 = vpack.c.b16 %v1954, %v1952
        %v2005 = vpack.c.b16 %v1955, %v1953
        %v2006 = vpack.c.b16 %v1958, %v1956
        %v2007 = vpack.c.b16 %v1959, %v1957
        %2056 = vmatprep.subr.bf16.mxu0 %v1975
        %2057 = vmatpush1.bf16.msra.mxu0 %v1974
        %2058 = vmatprep.subr.bf16.mxu0 %v1973
        %2059 = vmatpush1.bf16.msra.mxu0 %v1972
        %2060 = vmatprep.subr.bf16.mxu0 %v1971
        %2061 = vmatpush1.bf16.msra.mxu0 %v1970
        %2062 = vmatprep.subr.bf16.mxu0 %v1969
        %2063 = vmatpush1.bf16.msra.mxu0 %v1968
        %2064 = vmatprep.subr.bf16.mxu0 %v1967
        %2065 = vmatpush1.bf16.msra.mxu0 %v1966
        %2066 = vmatprep.subr.bf16.mxu0 %v1965
        %2067 = vmatpush1.bf16.msra.mxu0 %v1964
        %2068 = vmatprep.subr.bf16.mxu0 %v1963
        %2069 = vmatpush1.bf16.msra.mxu0 %v1962
        %2070 = vmatprep.subr.bf16.mxu0 %v1961
        %2071 = vmatpush1.bf16.msra.mxu0 %v1960
        %2072 = vmatprep.subr.bf16.mxu0 %v1991
        %2073 = vmatpush2.bf16.msra.mxu0 %v1990
        %2074 = vmatprep.subr.bf16.mxu0 %v1989
        %2075 = vmatpush2.bf16.msra.mxu0 %v1988
        %2076 = vmatprep.subr.bf16.mxu0 %v1987
        %2077 = vmatpush2.bf16.msra.mxu0 %v1986
        %2078 = vmatprep.subr.bf16.mxu0 %v1985
        %2079 = vmatpush2.bf16.msra.mxu0 %v1984
        %2080 = vmatprep.subr.bf16.mxu0 %v1983
        %2081 = vmatpush2.bf16.msra.mxu0 %v1982
        %2082 = vmatprep.subr.bf16.mxu0 %v1981
        %2083 = vmatpush2.bf16.msra.mxu0 %v1980
        %2084 = vmatprep.subr.bf16.mxu0 %v1979
        %2085 = vmatpush2.bf16.msra.mxu0 %v1978
        %2086 = vmatprep.subr.bf16.mxu0 %v1977
        %2087 = vmatpush2.bf16.msra.mxu0 %v1976
        %2088 = vmatprep.mubr.bf16.mxu0 %v1803
        %2089 = vmatmul.mubr.bf16.gmra.mxu0 %v1802
        %v2090 = vpop.f32.mrf.mxu0
        %v2091 = vadd.f32 %v1809, %v2090
        %v2092 = vpop.f32.mrf.mxu0
        %v2093 = vadd.f32 %v1813, %v2092
        %v2094 = vpop.f32.mrf.mxu0
        %v2095 = vpop.f32.mrf.mxu0
        %2096 = vdwg.mxu0
        %2097 = vmatprep.subr.bf16.mxu0 %v2007
        %2098 = vmatpush1.bf16.msra.mxu0 %v2006
        %2099 = vmatprep.subr.bf16.mxu0 %v2005
        %2100 = vmatpush1.bf16.msra.mxu0 %v2004
        %2101 = vmatprep.subr.bf16.mxu0 %v2003
        %2102 = vmatpush1.bf16.msra.mxu0 %v2002
        %2103 = vmatprep.subr.bf16.mxu0 %v2001
        %2104 = vmatpush1.bf16.msra.mxu0 %v2000
        %2105 = vmatprep.subr.bf16.mxu0 %v1999
        %2106 = vmatpush1.bf16.msra.mxu0 %v1998
        %2107 = vmatprep.subr.bf16.mxu0 %v1997
        %2108 = vmatpush1.bf16.msra.mxu0 %v1996
        %2109 = vmatprep.subr.bf16.mxu0 %v1995
        %2110 = vmatpush1.bf16.msra.mxu0 %v1994
        %2111 = vmatprep.subr.bf16.mxu0 %v1993
        %2112 = vmatpush1.bf16.msra.mxu0 %v1992
        %2113 = vmatprep.subr.bf16.mxu0 0
        %2114 = vmatpush2.bf16.msra.mxu0 0
        %2115 = vmatprep.subr.bf16.mxu0 0
        %2116 = vmatpush2.bf16.msra.mxu0 0
        %2117 = vmatprep.subr.bf16.mxu0 0
        %2118 = vmatpush2.bf16.msra.mxu0 0
        %2119 = vmatprep.subr.bf16.mxu0 0
        %2120 = vmatpush2.bf16.msra.mxu0 0
        %2121 = vmatprep.subr.bf16.mxu0 0
        %2122 = vmatpush2.bf16.msra.mxu0 0
        %2123 = vmatprep.subr.bf16.mxu0 0
        %2124 = vmatpush2.bf16.msra.mxu0 0
        %2125 = vmatprep.subr.bf16.mxu0 0
        %2126 = vmatpush2.bf16.msra.mxu0 0
        %2127 = vmatprep.subr.bf16.mxu0 0
        %2128 = vmatpush2.bf16.msra.mxu0 0
        %2129 = vmatprep.mubr.bf16.mxu0 0
        %2130 = vmatmul.mubr.bf16.gmra.mxu0 %v1804
        %v2131 = vpop.f32.mrf.mxu0
        %v2132 = vadd.f32 %v2091, %v2131
        %v2133 = vpop.f32.mrf.mxu0
        %v2134 = vadd.f32 %v2093, %v2133
        %v2135 = vpop.f32.mrf.mxu0
        %v2136 = vpop.f32.mrf.mxu0
        %2137 = vdwg.mxu0
        %v2138 = vxor.u32 %v2134, 2147483648
        %v2139 = vmul.f32 %v2138, 1.442695
        %v2140 = vpow.pop %v2139
        %v2141 = vadd.f32 %v2140, 1.0
        %v2142 = vrcp.pop %v2141
        %v2143 = vmul.f32 1.0, %v2142
        %v2144 = vsub.f32 %v2132, %v1749
        %v2145 = vmul.f32 %v2143, %v2144
        %v2146 = vadd.f32 %v1749, %v2145
        %v2147 = vld [vmem:[#allocation11] sm:$0xff]
        %v2148 = vld [vmem:[#allocation11 + $0x8] sm:$0xff]
        %v2149 = vld [vmem:[#allocation11 + $0x10] sm:$0xff]
        %v2150 = vld [vmem:[#allocation11 + $0x18] sm:$0xff]
        %v2151 = vld [vmem:[#allocation11 + $0x20] sm:$0xff]
        %v2152 = vld [vmem:[#allocation11 + $0x28] sm:$0xff]
        %v2153 = vld [vmem:[#allocation11 + $0x30] sm:$0xff]
        %v2154 = vld [vmem:[#allocation11 + $0x38] sm:$0xff]
        %v2155 = vld [vmem:[#allocation11 + $0x40] sm:$0xff]
        %v2156 = vld [vmem:[#allocation11 + $0x48] sm:$0xff]
        %v2157 = vld [vmem:[#allocation11 + $0x50] sm:$0xff]
        %v2158 = vld [vmem:[#allocation11 + $0x58] sm:$0xff]
        %v2159 = vld [vmem:[#allocation11 + $0x60] sm:$0xff]
        %v2160 = vld [vmem:[#allocation11 + $0x68] sm:$0xff]
        %v2161 = vld [vmem:[#allocation11 + $0x70] sm:$0xff]
        %v2162 = vld [vmem:[#allocation11 + $0x78] sm:$0xff]
        %v2163 = vld [vmem:[%s17] sm:$0x3]
        %v2164 = vpack.c.bf16 %v2146, %v2146
        %v2166 = vlaneseq
        %v2167 = vshrl.u32 %v2166, 7
        %v2168 = vsub.s32 0, %v2167
        %v2169 = vrot.slane %v2163, %v2168
        %v2170 = vlaneseq
        %v2171 = vshrl.u32 %v2170, 7
        %v2172 = vsub.s32 1, %v2171
        %v2173 = vrot.slane %v2163, %v2172
        %v2192 = vunpack.c.l.b16 %v2147
        %v2193 = vunpack.c.h.b16 %v2147
        %v2194 = vunpack.c.l.b16 %v2148
        %v2195 = vunpack.c.h.b16 %v2148
        %v2196 = vunpack.c.l.b16 %v2149
        %v2197 = vunpack.c.h.b16 %v2149
        %v2198 = vunpack.c.l.b16 %v2150
        %v2199 = vunpack.c.h.b16 %v2150
        %v2200 = vunpack.c.l.b16 %v2151
        %v2201 = vunpack.c.h.b16 %v2151
        %v2202 = vunpack.c.l.b16 %v2152
        %v2203 = vunpack.c.h.b16 %v2152
        %v2204 = vunpack.c.l.b16 %v2153
        %v2205 = vunpack.c.h.b16 %v2153
        %v2206 = vunpack.c.l.b16 %v2154
        %v2207 = vunpack.c.h.b16 %v2154
        %v2208 = vunpack.c.l.b16 %v2155
        %v2209 = vunpack.c.h.b16 %v2155
        %v2210 = vunpack.c.l.b16 %v2156
        %v2211 = vunpack.c.h.b16 %v2156
        %v2212 = vunpack.c.l.b16 %v2157
        %v2213 = vunpack.c.h.b16 %v2157
        %v2214 = vunpack.c.l.b16 %v2158
        %v2215 = vunpack.c.h.b16 %v2158
        %v2216 = vunpack.c.l.b16 %v2159
        %v2217 = vunpack.c.h.b16 %v2159
        %v2218 = vunpack.c.l.b16 %v2160
        %v2219 = vunpack.c.h.b16 %v2160
        %v2220 = vunpack.c.l.b16 %v2161
        %v2221 = vunpack.c.h.b16 %v2161
        %v2222 = vunpack.c.l.b16 %v2162
        %v2223 = vunpack.c.h.b16 %v2162
        %v2224 = vpack.c.b16 %v2194, %v2192
        %v2225 = vpack.c.b16 %v2195, %v2193
        %v2226 = vpack.c.b16 %v2198, %v2196
        %v2227 = vpack.c.b16 %v2199, %v2197
        %v2228 = vpack.c.b16 %v2202, %v2200
        %v2229 = vpack.c.b16 %v2203, %v2201
        %v2230 = vpack.c.b16 %v2206, %v2204
        %v2231 = vpack.c.b16 %v2207, %v2205
        %v2232 = vpack.c.b16 %v2210, %v2208
        %v2233 = vpack.c.b16 %v2211, %v2209
        %v2234 = vpack.c.b16 %v2214, %v2212
        %v2235 = vpack.c.b16 %v2215, %v2213
        %v2236 = vpack.c.b16 %v2218, %v2216
        %v2237 = vpack.c.b16 %v2219, %v2217
        %v2238 = vpack.c.b16 %v2222, %v2220
        %v2239 = vpack.c.b16 %v2223, %v2221
        %2256 = vmatprep.subr.bf16.mxu0 %v2239
        %2257 = vmatpush1.bf16.msra.mxu0 %v2238
        %2258 = vmatprep.subr.bf16.mxu0 %v2237
        %2259 = vmatpush1.bf16.msra.mxu0 %v2236
        %2260 = vmatprep.subr.bf16.mxu0 %v2235
        %2261 = vmatpush1.bf16.msra.mxu0 %v2234
        %2262 = vmatprep.subr.bf16.mxu0 %v2233
        %2263 = vmatpush1.bf16.msra.mxu0 %v2232
        %2264 = vmatprep.subr.bf16.mxu0 %v2231
        %2265 = vmatpush1.bf16.msra.mxu0 %v2230
        %2266 = vmatprep.subr.bf16.mxu0 %v2229
        %2267 = vmatpush1.bf16.msra.mxu0 %v2228
        %2268 = vmatprep.subr.bf16.mxu0 %v2227
        %2269 = vmatpush1.bf16.msra.mxu0 %v2226
        %2270 = vmatprep.subr.bf16.mxu0 %v2225
        %2271 = vmatpush1.bf16.msra.mxu0 %v2224
        %2272 = vmatprep.subr.bf16.mxu0 0
        %2273 = vmatpush2.bf16.msra.mxu0 0
        %2274 = vmatprep.subr.bf16.mxu0 0
        %2275 = vmatpush2.bf16.msra.mxu0 0
        %2276 = vmatprep.subr.bf16.mxu0 0
        %2277 = vmatpush2.bf16.msra.mxu0 0
        %2278 = vmatprep.subr.bf16.mxu0 0
        %2279 = vmatpush2.bf16.msra.mxu0 0
        %2280 = vmatprep.subr.bf16.mxu0 0
        %2281 = vmatpush2.bf16.msra.mxu0 0
        %2282 = vmatprep.subr.bf16.mxu0 0
        %2283 = vmatpush2.bf16.msra.mxu0 0
        %2284 = vmatprep.subr.bf16.mxu0 0
        %2285 = vmatpush2.bf16.msra.mxu0 0
        %2286 = vmatprep.subr.bf16.mxu0 0
        %2287 = vmatpush2.bf16.msra.mxu0 0
        %2288 = vmatprep.mubr.bf16.mxu0 0
        %2289 = vmatmul.mubr.bf16.gmra.mxu0 %v2164
        %v2290 = vpop.f32.mrf.mxu0
        %v2291 = vadd.f32 %v2169, %v2290
        %v2292 = vpop.f32.mrf.mxu0
        %v2293 = vadd.f32 %v2173, %v2292
        %v2294 = vpop.f32.mrf.mxu0
        %v2295 = vpop.f32.mrf.mxu0
        %2296 = vdwg.mxu0
        %s2297 = scalar_lea.vmem [#allocation2], 8
        %2298 = vst [vmem:[%s2297] ss:$2 sm:$0xff] %v2291
        %s2299 = scalar_lea.vmem [#allocation2], 9
        %2300 = vst [vmem:[%s2299] ss:$2 sm:$0xff] %v2293
        %v2301 = vld [vmem:[#allocation2 + $0x8] sm:$0xff]
        %v2302 = vld [vmem:[#allocation2 + $0x10] sm:$0xff]
        %v2303 = vld [vmem:[#allocation13] sm:$0xff]
        %v2304 = vld [vmem:[#allocation13 + $0x8] sm:$0xff]
        %v2305 = vld [vmem:[#allocation13 + $0x10] sm:$0xff]
        %v2306 = vld [vmem:[#allocation13 + $0x18] sm:$0xff]
        %v2307 = vld [vmem:[#allocation13 + $0x20] sm:$0xff]
        %v2308 = vld [vmem:[#allocation13 + $0x28] sm:$0xff]
        %v2309 = vld [vmem:[#allocation13 + $0x30] sm:$0xff]
        %v2310 = vld [vmem:[#allocation13 + $0x38] sm:$0xff]
        %v2311 = vld [vmem:[#allocation13 + $0x40] sm:$0xff]
        %v2312 = vld [vmem:[#allocation13 + $0x48] sm:$0xff]
        %v2313 = vld [vmem:[#allocation13 + $0x50] sm:$0xff]
        %v2314 = vld [vmem:[#allocation13 + $0x58] sm:$0xff]
        %v2315 = vld [vmem:[#allocation13 + $0x60] sm:$0xff]
        %v2316 = vld [vmem:[#allocation13 + $0x68] sm:$0xff]
        %v2317 = vld [vmem:[#allocation13 + $0x70] sm:$0xff]
        %v2318 = vld [vmem:[#allocation13 + $0x78] sm:$0xff]
        %v2319 = vld [vmem:[#allocation13 + $0x80] sm:$0xff]
        %v2320 = vld [vmem:[#allocation13 + $0x88] sm:$0xff]
        %v2321 = vld [vmem:[#allocation13 + $0x90] sm:$0xff]
        %v2322 = vld [vmem:[#allocation13 + $0x98] sm:$0xff]
        %v2323 = vld [vmem:[#allocation13 + $0xa0] sm:$0xff]
        %v2324 = vld [vmem:[#allocation13 + $0xa8] sm:$0xff]
        %v2325 = vld [vmem:[#allocation13 + $0xb0] sm:$0xff]
        %v2326 = vld [vmem:[#allocation13 + $0xb8] sm:$0xff]
        %v2327 = vld [vmem:[#allocation13 + $0xc0] sm:$0xff]
        %v2328 = vld [vmem:[#allocation13 + $0xc8] sm:$0xff]
        %v2329 = vld [vmem:[#allocation13 + $0xd0] sm:$0xff]
        %v2330 = vld [vmem:[#allocation13 + $0xd8] sm:$0xff]
        %v2331 = vld [vmem:[#allocation13 + $0xe0] sm:$0xff]
        %v2332 = vld [vmem:[#allocation13 + $0xe8] sm:$0xff]
        %v2333 = vld [vmem:[#allocation13 + $0xf0] sm:$0xff]
        %v2334 = vld [vmem:[#allocation13 + $0xf8] sm:$0xff]
        %v2335 = vld [vmem:[#allocation13 + $0x100] sm:$0xff]
        %v2336 = vld [vmem:[#allocation13 + $0x108] sm:$0xff]
        %v2337 = vld [vmem:[#allocation13 + $0x110] sm:$0xff]
        %v2338 = vld [vmem:[#allocation13 + $0x118] sm:$0xff]
        %v2339 = vld [vmem:[#allocation13 + $0x120] sm:$0xff]
        %v2340 = vld [vmem:[#allocation13 + $0x128] sm:$0xff]
        %v2341 = vld [vmem:[#allocation13 + $0x130] sm:$0xff]
        %v2342 = vld [vmem:[#allocation13 + $0x138] sm:$0xff]
        %v2343 = vld [vmem:[#allocation13 + $0x140] sm:$0xff]
        %v2344 = vld [vmem:[#allocation13 + $0x148] sm:$0xff]
        %v2345 = vld [vmem:[#allocation13 + $0x150] sm:$0xff]
        %v2346 = vld [vmem:[#allocation13 + $0x158] sm:$0xff]
        %v2347 = vld [vmem:[#allocation13 + $0x160] sm:$0xff]
        %v2348 = vld [vmem:[#allocation13 + $0x168] sm:$0xff]
        %v2349 = vld [vmem:[#allocation13 + $0x170] sm:$0xff]
        %v2350 = vld [vmem:[#allocation13 + $0x178] sm:$0xff]
        %v2351 = vld [vmem:[%s21] sm:$0x3]
        %v2352 = vld [vmem:[#allocation2 + $0x7] sm:$0xff]
        %v2353 = vld [vmem:[#allocation2 + $0xf] sm:$0xff]
        %v2354 = vld [vmem:[#allocation2 + $0x9] sm:$0xff]
        %v2355 = vld [vmem:[#allocation2 + $0x11] sm:$0xff]
        %v2356 = vpack.c.bf16 %v2353, %v2352
        %v2357 = vpack.c.bf16 %v2302, %v2301
        %v2358 = vpack.c.bf16 %v2355, %v2354
        %v2360 = vlaneseq
        %v2361 = vshrl.u32 %v2360, 7
        %v2362 = vsub.s32 0, %v2361
        %v2363 = vrot.slane %v2351, %v2362
        %v2364 = vlaneseq
        %v2365 = vshrl.u32 %v2364, 7
        %v2366 = vsub.s32 1, %v2365
        %v2367 = vrot.slane %v2351, %v2366
        %v2418 = vunpack.c.l.b16 %v2303
        %v2419 = vunpack.c.h.b16 %v2303
        %v2420 = vunpack.c.l.b16 %v2304
        %v2421 = vunpack.c.h.b16 %v2304
        %v2422 = vunpack.c.l.b16 %v2305
        %v2423 = vunpack.c.h.b16 %v2305
        %v2424 = vunpack.c.l.b16 %v2306
        %v2425 = vunpack.c.h.b16 %v2306
        %v2426 = vunpack.c.l.b16 %v2307
        %v2427 = vunpack.c.h.b16 %v2307
        %v2428 = vunpack.c.l.b16 %v2308
        %v2429 = vunpack.c.h.b16 %v2308
        %v2430 = vunpack.c.l.b16 %v2309
        %v2431 = vunpack.c.h.b16 %v2309
        %v2432 = vunpack.c.l.b16 %v2310
        %v2433 = vunpack.c.h.b16 %v2310
        %v2434 = vunpack.c.l.b16 %v2311
        %v2435 = vunpack.c.h.b16 %v2311
        %v2436 = vunpack.c.l.b16 %v2312
        %v2437 = vunpack.c.h.b16 %v2312
        %v2438 = vunpack.c.l.b16 %v2313
        %v2439 = vunpack.c.h.b16 %v2313
        %v2440 = vunpack.c.l.b16 %v2314
        %v2441 = vunpack.c.h.b16 %v2314
        %v2442 = vunpack.c.l.b16 %v2315
        %v2443 = vunpack.c.h.b16 %v2315
        %v2444 = vunpack.c.l.b16 %v2316
        %v2445 = vunpack.c.h.b16 %v2316
        %v2446 = vunpack.c.l.b16 %v2317
        %v2447 = vunpack.c.h.b16 %v2317
        %v2448 = vunpack.c.l.b16 %v2318
        %v2449 = vunpack.c.h.b16 %v2318
        %v2450 = vunpack.c.l.b16 %v2319
        %v2451 = vunpack.c.h.b16 %v2319
        %v2452 = vunpack.c.l.b16 %v2320
        %v2453 = vunpack.c.h.b16 %v2320
        %v2454 = vunpack.c.l.b16 %v2321
        %v2455 = vunpack.c.h.b16 %v2321
        %v2456 = vunpack.c.l.b16 %v2322
        %v2457 = vunpack.c.h.b16 %v2322
        %v2458 = vunpack.c.l.b16 %v2323
        %v2459 = vunpack.c.h.b16 %v2323
        %v2460 = vunpack.c.l.b16 %v2324
        %v2461 = vunpack.c.h.b16 %v2324
        %v2462 = vunpack.c.l.b16 %v2325
        %v2463 = vunpack.c.h.b16 %v2325
        %v2464 = vunpack.c.l.b16 %v2326
        %v2465 = vunpack.c.h.b16 %v2326
        %v2466 = vunpack.c.l.b16 %v2327
        %v2467 = vunpack.c.h.b16 %v2327
        %v2468 = vunpack.c.l.b16 %v2328
        %v2469 = vunpack.c.h.b16 %v2328
        %v2470 = vunpack.c.l.b16 %v2329
        %v2471 = vunpack.c.h.b16 %v2329
        %v2472 = vunpack.c.l.b16 %v2330
        %v2473 = vunpack.c.h.b16 %v2330
        %v2474 = vunpack.c.l.b16 %v2331
        %v2475 = vunpack.c.h.b16 %v2331
        %v2476 = vunpack.c.l.b16 %v2332
        %v2477 = vunpack.c.h.b16 %v2332
        %v2478 = vunpack.c.l.b16 %v2333
        %v2479 = vunpack.c.h.b16 %v2333
        %v2480 = vunpack.c.l.b16 %v2334
        %v2481 = vunpack.c.h.b16 %v2334
        %v2482 = vunpack.c.l.b16 %v2335
        %v2483 = vunpack.c.h.b16 %v2335
        %v2484 = vunpack.c.l.b16 %v2336
        %v2485 = vunpack.c.h.b16 %v2336
        %v2486 = vunpack.c.l.b16 %v2337
        %v2487 = vunpack.c.h.b16 %v2337
        %v2488 = vunpack.c.l.b16 %v2338
        %v2489 = vunpack.c.h.b16 %v2338
        %v2490 = vunpack.c.l.b16 %v2339
        %v2491 = vunpack.c.h.b16 %v2339
        %v2492 = vunpack.c.l.b16 %v2340
        %v2493 = vunpack.c.h.b16 %v2340
        %v2494 = vunpack.c.l.b16 %v2341
        %v2495 = vunpack.c.h.b16 %v2341
        %v2496 = vunpack.c.l.b16 %v2342
        %v2497 = vunpack.c.h.b16 %v2342
        %v2498 = vunpack.c.l.b16 %v2343
        %v2499 = vunpack.c.h.b16 %v2343
        %v2500 = vunpack.c.l.b16 %v2344
        %v2501 = vunpack.c.h.b16 %v2344
        %v2502 = vunpack.c.l.b16 %v2345
        %v2503 = vunpack.c.h.b16 %v2345
        %v2504 = vunpack.c.l.b16 %v2346
        %v2505 = vunpack.c.h.b16 %v2346
        %v2506 = vunpack.c.l.b16 %v2347
        %v2507 = vunpack.c.h.b16 %v2347
        %v2508 = vunpack.c.l.b16 %v2348
        %v2509 = vunpack.c.h.b16 %v2348
        %v2510 = vunpack.c.l.b16 %v2349
        %v2511 = vunpack.c.h.b16 %v2349
        %v2512 = vunpack.c.l.b16 %v2350
        %v2513 = vunpack.c.h.b16 %v2350
        %v2514 = vpack.c.b16 %v2420, %v2418
        %v2515 = vpack.c.b16 %v2421, %v2419
        %v2516 = vpack.c.b16 %v2424, %v2422
        %v2517 = vpack.c.b16 %v2425, %v2423
        %v2518 = vpack.c.b16 %v2428, %v2426
        %v2519 = vpack.c.b16 %v2429, %v2427
        %v2520 = vpack.c.b16 %v2432, %v2430
        %v2521 = vpack.c.b16 %v2433, %v2431
        %v2522 = vpack.c.b16 %v2436, %v2434
        %v2523 = vpack.c.b16 %v2437, %v2435
        %v2524 = vpack.c.b16 %v2440, %v2438
        %v2525 = vpack.c.b16 %v2441, %v2439
        %v2526 = vpack.c.b16 %v2444, %v2442
        %v2527 = vpack.c.b16 %v2445, %v2443
        %v2528 = vpack.c.b16 %v2448, %v2446
        %v2529 = vpack.c.b16 %v2449, %v2447
        %v2530 = vpack.c.b16 %v2452, %v2450
        %v2531 = vpack.c.b16 %v2453, %v2451
        %v2532 = vpack.c.b16 %v2456, %v2454
        %v2533 = vpack.c.b16 %v2457, %v2455
        %v2534 = vpack.c.b16 %v2460, %v2458
        %v2535 = vpack.c.b16 %v2461, %v2459
        %v2536 = vpack.c.b16 %v2464, %v2462
        %v2537 = vpack.c.b16 %v2465, %v2463
        %v2538 = vpack.c.b16 %v2468, %v2466
        %v2539 = vpack.c.b16 %v2469, %v2467
        %v2540 = vpack.c.b16 %v2472, %v2470
        %v2541 = vpack.c.b16 %v2473, %v2471
        %v2542 = vpack.c.b16 %v2476, %v2474
        %v2543 = vpack.c.b16 %v2477, %v2475
        %v2544 = vpack.c.b16 %v2480, %v2478
        %v2545 = vpack.c.b16 %v2481, %v2479
        %v2546 = vpack.c.b16 %v2484, %v2482
        %v2547 = vpack.c.b16 %v2485, %v2483
        %v2548 = vpack.c.b16 %v2488, %v2486
        %v2549 = vpack.c.b16 %v2489, %v2487
        %v2550 = vpack.c.b16 %v2492, %v2490
        %v2551 = vpack.c.b16 %v2493, %v2491
        %v2552 = vpack.c.b16 %v2496, %v2494
        %v2553 = vpack.c.b16 %v2497, %v2495
        %v2554 = vpack.c.b16 %v2500, %v2498
        %v2555 = vpack.c.b16 %v2501, %v2499
        %v2556 = vpack.c.b16 %v2504, %v2502
        %v2557 = vpack.c.b16 %v2505, %v2503
        %v2558 = vpack.c.b16 %v2508, %v2506
        %v2559 = vpack.c.b16 %v2509, %v2507
        %v2560 = vpack.c.b16 %v2512, %v2510
        %v2561 = vpack.c.b16 %v2513, %v2511
        %2610 = vmatprep.subr.bf16.mxu0 %v2529
        %2611 = vmatpush1.bf16.msra.mxu0 %v2528
        %2612 = vmatprep.subr.bf16.mxu0 %v2527
        %2613 = vmatpush1.bf16.msra.mxu0 %v2526
        %2614 = vmatprep.subr.bf16.mxu0 %v2525
        %2615 = vmatpush1.bf16.msra.mxu0 %v2524
        %2616 = vmatprep.subr.bf16.mxu0 %v2523
        %2617 = vmatpush1.bf16.msra.mxu0 %v2522
        %2618 = vmatprep.subr.bf16.mxu0 %v2521
        %2619 = vmatpush1.bf16.msra.mxu0 %v2520
        %2620 = vmatprep.subr.bf16.mxu0 %v2519
        %2621 = vmatpush1.bf16.msra.mxu0 %v2518
        %2622 = vmatprep.subr.bf16.mxu0 %v2517
        %2623 = vmatpush1.bf16.msra.mxu0 %v2516
        %2624 = vmatprep.subr.bf16.mxu0 %v2515
        %2625 = vmatpush1.bf16.msra.mxu0 %v2514
        %2626 = vmatprep.subr.bf16.mxu0 %v2545
        %2627 = vmatpush2.bf16.msra.mxu0 %v2544
        %2628 = vmatprep.subr.bf16.mxu0 %v2543
        %2629 = vmatpush2.bf16.msra.mxu0 %v2542
        %2630 = vmatprep.subr.bf16.mxu0 %v2541
        %2631 = vmatpush2.bf16.msra.mxu0 %v2540
        %2632 = vmatprep.subr.bf16.mxu0 %v2539
        %2633 = vmatpush2.bf16.msra.mxu0 %v2538
        %2634 = vmatprep.subr.bf16.mxu0 %v2537
        %2635 = vmatpush2.bf16.msra.mxu0 %v2536
        %2636 = vmatprep.subr.bf16.mxu0 %v2535
        %2637 = vmatpush2.bf16.msra.mxu0 %v2534
        %2638 = vmatprep.subr.bf16.mxu0 %v2533
        %2639 = vmatpush2.bf16.msra.mxu0 %v2532
        %2640 = vmatprep.subr.bf16.mxu0 %v2531
        %2641 = vmatpush2.bf16.msra.mxu0 %v2530
        %2642 = vmatprep.mubr.bf16.mxu0 %v2357
        %2643 = vmatmul.mubr.bf16.gmra.mxu0 %v2356
        %v2644 = vpop.f32.mrf.mxu0
        %v2645 = vadd.f32 %v2363, %v2644
        %v2646 = vpop.f32.mrf.mxu0
        %v2647 = vadd.f32 %v2367, %v2646
        %v2648 = vpop.f32.mrf.mxu0
        %v2649 = vadd.f32 %v2363, %v2648
        %v2650 = vpop.f32.mrf.mxu0
        %v2651 = vadd.f32 %v2367, %v2650
        %2652 = vdwg.mxu0
        %2653 = vmatprep.subr.bf16.mxu0 %v2561
        %2654 = vmatpush1.bf16.msra.mxu0 %v2560
        %2655 = vmatprep.subr.bf16.mxu0 %v2559
        %2656 = vmatpush1.bf16.msra.mxu0 %v2558
        %2657 = vmatprep.subr.bf16.mxu0 %v2557
        %2658 = vmatpush1.bf16.msra.mxu0 %v2556
        %2659 = vmatprep.subr.bf16.mxu0 %v2555
        %2660 = vmatpush1.bf16.msra.mxu0 %v2554
        %2661 = vmatprep.subr.bf16.mxu0 %v2553
        %2662 = vmatpush1.bf16.msra.mxu0 %v2552
        %2663 = vmatprep.subr.bf16.mxu0 %v2551
        %2664 = vmatpush1.bf16.msra.mxu0 %v2550
        %2665 = vmatprep.subr.bf16.mxu0 %v2549
        %2666 = vmatpush1.bf16.msra.mxu0 %v2548
        %2667 = vmatprep.subr.bf16.mxu0 %v2547
        %2668 = vmatpush1.bf16.msra.mxu0 %v2546
        %2669 = vmatprep.subr.bf16.mxu0 0
        %2670 = vmatpush2.bf16.msra.mxu0 0
        %2671 = vmatprep.subr.bf16.mxu0 0
        %2672 = vmatpush2.bf16.msra.mxu0 0
        %2673 = vmatprep.subr.bf16.mxu0 0
        %2674 = vmatpush2.bf16.msra.mxu0 0
        %2675 = vmatprep.subr.bf16.mxu0 0
        %2676 = vmatpush2.bf16.msra.mxu0 0
        %2677 = vmatprep.subr.bf16.mxu0 0
        %2678 = vmatpush2.bf16.msra.mxu0 0
        %2679 = vmatprep.subr.bf16.mxu0 0
        %2680 = vmatpush2.bf16.msra.mxu0 0
        %2681 = vmatprep.subr.bf16.mxu0 0
        %2682 = vmatpush2.bf16.msra.mxu0 0
        %2683 = vmatprep.subr.bf16.mxu0 0
        %2684 = vmatpush2.bf16.msra.mxu0 0
        %2685 = vmatprep.mubr.bf16.mxu0 0
        %2686 = vmatmul.mubr.bf16.gmra.mxu0 %v2358
        %v2687 = vpop.f32.mrf.mxu0
        %v2688 = vadd.f32 %v2645, %v2687
        %v2689 = vpop.f32.mrf.mxu0
        %v2690 = vadd.f32 %v2647, %v2689
        %v2691 = vpop.f32.mrf.mxu0
        %v2692 = vadd.f32 %v2649, %v2691
        %v2693 = vpop.f32.mrf.mxu0
        %v2694 = vadd.f32 %v2651, %v2693
        %2695 = vdwg.mxu0
        %v2696 = vxor.u32 %v2690, 2147483648
        %v2697 = vxor.u32 %v2694, 2147483648
        %v2698 = vmul.f32 %v2696, 1.442695
        %v2699 = vpow.pop %v2698
        %v2700 = vmul.f32 %v2697, 1.442695
        %v2701 = vpow.pop %v2700
        %v2702 = vadd.f32 %v2699, 1.0
        %v2703 = vadd.f32 %v2701, 1.0
        %v2704 = vrcp.pop %v2702
        %v2705 = vmul.f32 1.0, %v2704
        %v2706 = vrcp.pop %v2703
        %v2707 = vmul.f32 1.0, %v2706
        %v2708 = vsub.f32 %v2688, %v2301
        %v2709 = vsub.f32 %v2692, %v2302
        %v2710 = vmul.f32 %v2705, %v2708
        %v2711 = vmul.f32 %v2707, %v2709
        %v2712 = vadd.f32 %v2301, %v2710
        %v2713 = vadd.f32 %v2302, %v2711
        %v2714 = vld [vmem:[#allocation14] sm:$0xff]
        %v2715 = vld [vmem:[#allocation14 + $0x8] sm:$0xff]
        %v2716 = vld [vmem:[#allocation14 + $0x10] sm:$0xff]
        %v2717 = vld [vmem:[#allocation14 + $0x18] sm:$0xff]
        %v2718 = vld [vmem:[#allocation14 + $0x20] sm:$0xff]
        %v2719 = vld [vmem:[#allocation14 + $0x28] sm:$0xff]
        %v2720 = vld [vmem:[#allocation14 + $0x30] sm:$0xff]
        %v2721 = vld [vmem:[#allocation14 + $0x38] sm:$0xff]
        %v2722 = vld [vmem:[#allocation14 + $0x40] sm:$0xff]
        %v2723 = vld [vmem:[#allocation14 + $0x48] sm:$0xff]
        %v2724 = vld [vmem:[#allocation14 + $0x50] sm:$0xff]
        %v2725 = vld [vmem:[#allocation14 + $0x58] sm:$0xff]
        %v2726 = vld [vmem:[#allocation14 + $0x60] sm:$0xff]
        %v2727 = vld [vmem:[#allocation14 + $0x68] sm:$0xff]
        %v2728 = vld [vmem:[#allocation14 + $0x70] sm:$0xff]
        %v2729 = vld [vmem:[#allocation14 + $0x78] sm:$0xff]
        %v2730 = vld [vmem:[#allocation14 + $0x80] sm:$0xff]
        %v2731 = vld [vmem:[#allocation14 + $0x88] sm:$0xff]
        %v2732 = vld [vmem:[#allocation14 + $0x90] sm:$0xff]
        %v2733 = vld [vmem:[#allocation14 + $0x98] sm:$0xff]
        %v2734 = vld [vmem:[#allocation14 + $0xa0] sm:$0xff]
        %v2735 = vld [vmem:[#allocation14 + $0xa8] sm:$0xff]
        %v2736 = vld [vmem:[#allocation14 + $0xb0] sm:$0xff]
        %v2737 = vld [vmem:[#allocation14 + $0xb8] sm:$0xff]
        %v2738 = vld [vmem:[#allocation14 + $0xc0] sm:$0xff]
        %v2739 = vld [vmem:[#allocation14 + $0xc8] sm:$0xff]
        %v2740 = vld [vmem:[#allocation14 + $0xd0] sm:$0xff]
        %v2741 = vld [vmem:[#allocation14 + $0xd8] sm:$0xff]
        %v2742 = vld [vmem:[#allocation14 + $0xe0] sm:$0xff]
        %v2743 = vld [vmem:[#allocation14 + $0xe8] sm:$0xff]
        %v2744 = vld [vmem:[#allocation14 + $0xf0] sm:$0xff]
        %v2745 = vld [vmem:[#allocation14 + $0xf8] sm:$0xff]
        %v2746 = vld [vmem:[#allocation14 + $0x100] sm:$0xff]
        %v2747 = vld [vmem:[#allocation14 + $0x108] sm:$0xff]
        %v2748 = vld [vmem:[#allocation14 + $0x110] sm:$0xff]
        %v2749 = vld [vmem:[#allocation14 + $0x118] sm:$0xff]
        %v2750 = vld [vmem:[#allocation14 + $0x120] sm:$0xff]
        %v2751 = vld [vmem:[#allocation14 + $0x128] sm:$0xff]
        %v2752 = vld [vmem:[#allocation14 + $0x130] sm:$0xff]
        %v2753 = vld [vmem:[#allocation14 + $0x138] sm:$0xff]
        %v2754 = vld [vmem:[#allocation14 + $0x140] sm:$0xff]
        %v2755 = vld [vmem:[#allocation14 + $0x148] sm:$0xff]
        %v2756 = vld [vmem:[#allocation14 + $0x150] sm:$0xff]
        %v2757 = vld [vmem:[#allocation14 + $0x158] sm:$0xff]
        %v2758 = vld [vmem:[#allocation14 + $0x160] sm:$0xff]
        %v2759 = vld [vmem:[#allocation14 + $0x168] sm:$0xff]
        %v2760 = vld [vmem:[#allocation14 + $0x170] sm:$0xff]
        %v2761 = vld [vmem:[#allocation14 + $0x178] sm:$0xff]
        %v2762 = vld [vmem:[%s25] sm:$0x3]
        %2763 = vst [vmem:[#allocation2 + $0x8] sm:$0xff] %v2712
        %2764 = vst [vmem:[#allocation2 + $0x10] sm:$0xff] %v2713
        %v2765 = vld [vmem:[#allocation2 + $0x5] sm:$0xff]
        %v2766 = vld [vmem:[#allocation2 + $0xd] sm:$0xff]
        %v2767 = vld [vmem:[#allocation2 + $0xb] sm:$0xff]
        %v2768 = vld [vmem:[#allocation2 + $0x13] sm:$0xff]
        %v2769 = vpack.c.bf16 %v2766, %v2765
        %v2770 = vpack.c.bf16 %v2713, %v2712
        %v2771 = vpack.c.bf16 %v2768, %v2767
        %v2773 = vlaneseq
        %v2774 = vshrl.u32 %v2773, 7
        %v2775 = vsub.s32 0, %v2774
        %v2776 = vrot.slane %v2762, %v2775
        %v2777 = vlaneseq
        %v2778 = vshrl.u32 %v2777, 7
        %v2779 = vsub.s32 1, %v2778
        %v2780 = vrot.slane %v2762, %v2779
        %v2831 = vunpack.c.l.b16 %v2714
        %v2832 = vunpack.c.h.b16 %v2714
        %v2833 = vunpack.c.l.b16 %v2715
        %v2834 = vunpack.c.h.b16 %v2715
        %v2835 = vunpack.c.l.b16 %v2716
        %v2836 = vunpack.c.h.b16 %v2716
        %v2837 = vunpack.c.l.b16 %v2717
        %v2838 = vunpack.c.h.b16 %v2717
        %v2839 = vunpack.c.l.b16 %v2718
        %v2840 = vunpack.c.h.b16 %v2718
        %v2841 = vunpack.c.l.b16 %v2719
        %v2842 = vunpack.c.h.b16 %v2719
        %v2843 = vunpack.c.l.b16 %v2720
        %v2844 = vunpack.c.h.b16 %v2720
        %v2845 = vunpack.c.l.b16 %v2721
        %v2846 = vunpack.c.h.b16 %v2721
        %v2847 = vunpack.c.l.b16 %v2722
        %v2848 = vunpack.c.h.b16 %v2722
        %v2849 = vunpack.c.l.b16 %v2723
        %v2850 = vunpack.c.h.b16 %v2723
        %v2851 = vunpack.c.l.b16 %v2724
        %v2852 = vunpack.c.h.b16 %v2724
        %v2853 = vunpack.c.l.b16 %v2725
        %v2854 = vunpack.c.h.b16 %v2725
        %v2855 = vunpack.c.l.b16 %v2726
        %v2856 = vunpack.c.h.b16 %v2726
        %v2857 = vunpack.c.l.b16 %v2727
        %v2858 = vunpack.c.h.b16 %v2727
        %v2859 = vunpack.c.l.b16 %v2728
        %v2860 = vunpack.c.h.b16 %v2728
        %v2861 = vunpack.c.l.b16 %v2729
        %v2862 = vunpack.c.h.b16 %v2729
        %v2863 = vunpack.c.l.b16 %v2730
        %v2864 = vunpack.c.h.b16 %v2730
        %v2865 = vunpack.c.l.b16 %v2731
        %v2866 = vunpack.c.h.b16 %v2731
        %v2867 = vunpack.c.l.b16 %v2732
        %v2868 = vunpack.c.h.b16 %v2732
        %v2869 = vunpack.c.l.b16 %v2733
        %v2870 = vunpack.c.h.b16 %v2733
        %v2871 = vunpack.c.l.b16 %v2734
        %v2872 = vunpack.c.h.b16 %v2734
        %v2873 = vunpack.c.l.b16 %v2735
        %v2874 = vunpack.c.h.b16 %v2735
        %v2875 = vunpack.c.l.b16 %v2736
        %v2876 = vunpack.c.h.b16 %v2736
        %v2877 = vunpack.c.l.b16 %v2737
        %v2878 = vunpack.c.h.b16 %v2737
        %v2879 = vunpack.c.l.b16 %v2738
        %v2880 = vunpack.c.h.b16 %v2738
        %v2881 = vunpack.c.l.b16 %v2739
        %v2882 = vunpack.c.h.b16 %v2739
        %v2883 = vunpack.c.l.b16 %v2740
        %v2884 = vunpack.c.h.b16 %v2740
        %v2885 = vunpack.c.l.b16 %v2741
        %v2886 = vunpack.c.h.b16 %v2741
        %v2887 = vunpack.c.l.b16 %v2742
        %v2888 = vunpack.c.h.b16 %v2742
        %v2889 = vunpack.c.l.b16 %v2743
        %v2890 = vunpack.c.h.b16 %v2743
        %v2891 = vunpack.c.l.b16 %v2744
        %v2892 = vunpack.c.h.b16 %v2744
        %v2893 = vunpack.c.l.b16 %v2745
        %v2894 = vunpack.c.h.b16 %v2745
        %v2895 = vunpack.c.l.b16 %v2746
        %v2896 = vunpack.c.h.b16 %v2746
        %v2897 = vunpack.c.l.b16 %v2747
        %v2898 = vunpack.c.h.b16 %v2747
        %v2899 = vunpack.c.l.b16 %v2748
        %v2900 = vunpack.c.h.b16 %v2748
        %v2901 = vunpack.c.l.b16 %v2749
        %v2902 = vunpack.c.h.b16 %v2749
        %v2903 = vunpack.c.l.b16 %v2750
        %v2904 = vunpack.c.h.b16 %v2750
        %v2905 = vunpack.c.l.b16 %v2751
        %v2906 = vunpack.c.h.b16 %v2751
        %v2907 = vunpack.c.l.b16 %v2752
        %v2908 = vunpack.c.h.b16 %v2752
        %v2909 = vunpack.c.l.b16 %v2753
        %v2910 = vunpack.c.h.b16 %v2753
        %v2911 = vunpack.c.l.b16 %v2754
        %v2912 = vunpack.c.h.b16 %v2754
        %v2913 = vunpack.c.l.b16 %v2755
        %v2914 = vunpack.c.h.b16 %v2755
        %v2915 = vunpack.c.l.b16 %v2756
        %v2916 = vunpack.c.h.b16 %v2756
        %v2917 = vunpack.c.l.b16 %v2757
        %v2918 = vunpack.c.h.b16 %v2757
        %v2919 = vunpack.c.l.b16 %v2758
        %v2920 = vunpack.c.h.b16 %v2758
        %v2921 = vunpack.c.l.b16 %v2759
        %v2922 = vunpack.c.h.b16 %v2759
        %v2923 = vunpack.c.l.b16 %v2760
        %v2924 = vunpack.c.h.b16 %v2760
        %v2925 = vunpack.c.l.b16 %v2761
        %v2926 = vunpack.c.h.b16 %v2761
        %v2927 = vpack.c.b16 %v2833, %v2831
        %v2928 = vpack.c.b16 %v2834, %v2832
        %v2929 = vpack.c.b16 %v2837, %v2835
        %v2930 = vpack.c.b16 %v2838, %v2836
        %v2931 = vpack.c.b16 %v2841, %v2839
        %v2932 = vpack.c.b16 %v2842, %v2840
        %v2933 = vpack.c.b16 %v2845, %v2843
        %v2934 = vpack.c.b16 %v2846, %v2844
        %v2935 = vpack.c.b16 %v2849, %v2847
        %v2936 = vpack.c.b16 %v2850, %v2848
        %v2937 = vpack.c.b16 %v2853, %v2851
        %v2938 = vpack.c.b16 %v2854, %v2852
        %v2939 = vpack.c.b16 %v2857, %v2855
        %v2940 = vpack.c.b16 %v2858, %v2856
        %v2941 = vpack.c.b16 %v2861, %v2859
        %v2942 = vpack.c.b16 %v2862, %v2860
        %v2943 = vpack.c.b16 %v2865, %v2863
        %v2944 = vpack.c.b16 %v2866, %v2864
        %v2945 = vpack.c.b16 %v2869, %v2867
        %v2946 = vpack.c.b16 %v2870, %v2868
        %v2947 = vpack.c.b16 %v2873, %v2871
        %v2948 = vpack.c.b16 %v2874, %v2872
        %v2949 = vpack.c.b16 %v2877, %v2875
        %v2950 = vpack.c.b16 %v2878, %v2876
        %v2951 = vpack.c.b16 %v2881, %v2879
        %v2952 = vpack.c.b16 %v2882, %v2880
        %v2953 = vpack.c.b16 %v2885, %v2883
        %v2954 = vpack.c.b16 %v2886, %v2884
        %v2955 = vpack.c.b16 %v2889, %v2887
        %v2956 = vpack.c.b16 %v2890, %v2888
        %v2957 = vpack.c.b16 %v2893, %v2891
        %v2958 = vpack.c.b16 %v2894, %v2892
        %v2959 = vpack.c.b16 %v2897, %v2895
        %v2960 = vpack.c.b16 %v2898, %v2896
        %v2961 = vpack.c.b16 %v2901, %v2899
        %v2962 = vpack.c.b16 %v2902, %v2900
        %v2963 = vpack.c.b16 %v2905, %v2903
        %v2964 = vpack.c.b16 %v2906, %v2904
        %v2965 = vpack.c.b16 %v2909, %v2907
        %v2966 = vpack.c.b16 %v2910, %v2908
        %v2967 = vpack.c.b16 %v2913, %v2911
        %v2968 = vpack.c.b16 %v2914, %v2912
        %v2969 = vpack.c.b16 %v2917, %v2915
        %v2970 = vpack.c.b16 %v2918, %v2916
        %v2971 = vpack.c.b16 %v2921, %v2919
        %v2972 = vpack.c.b16 %v2922, %v2920
        %v2973 = vpack.c.b16 %v2925, %v2923
        %v2974 = vpack.c.b16 %v2926, %v2924
        %3023 = vmatprep.subr.bf16.mxu0 %v2942
        %3024 = vmatpush1.bf16.msra.mxu0 %v2941
        %3025 = vmatprep.subr.bf16.mxu0 %v2940
        %3026 = vmatpush1.bf16.msra.mxu0 %v2939
        %3027 = vmatprep.subr.bf16.mxu0 %v2938
        %3028 = vmatpush1.bf16.msra.mxu0 %v2937
        %3029 = vmatprep.subr.bf16.mxu0 %v2936
        %3030 = vmatpush1.bf16.msra.mxu0 %v2935
        %3031 = vmatprep.subr.bf16.mxu0 %v2934
        %3032 = vmatpush1.bf16.msra.mxu0 %v2933
        %3033 = vmatprep.subr.bf16.mxu0 %v2932
        %3034 = vmatpush1.bf16.msra.mxu0 %v2931
        %3035 = vmatprep.subr.bf16.mxu0 %v2930
        %3036 = vmatpush1.bf16.msra.mxu0 %v2929
        %3037 = vmatprep.subr.bf16.mxu0 %v2928
        %3038 = vmatpush1.bf16.msra.mxu0 %v2927
        %3039 = vmatprep.subr.bf16.mxu0 %v2958
        %3040 = vmatpush2.bf16.msra.mxu0 %v2957
        %3041 = vmatprep.subr.bf16.mxu0 %v2956
        %3042 = vmatpush2.bf16.msra.mxu0 %v2955
        %3043 = vmatprep.subr.bf16.mxu0 %v2954
        %3044 = vmatpush2.bf16.msra.mxu0 %v2953
        %3045 = vmatprep.subr.bf16.mxu0 %v2952
        %3046 = vmatpush2.bf16.msra.mxu0 %v2951
        %3047 = vmatprep.subr.bf16.mxu0 %v2950
        %3048 = vmatpush2.bf16.msra.mxu0 %v2949
        %3049 = vmatprep.subr.bf16.mxu0 %v2948
        %3050 = vmatpush2.bf16.msra.mxu0 %v2947
        %3051 = vmatprep.subr.bf16.mxu0 %v2946
        %3052 = vmatpush2.bf16.msra.mxu0 %v2945
        %3053 = vmatprep.subr.bf16.mxu0 %v2944
        %3054 = vmatpush2.bf16.msra.mxu0 %v2943
        %3055 = vmatprep.mubr.bf16.mxu0 %v2770
        %3056 = vmatmul.mubr.bf16.gmra.mxu0 %v2769
        %v3057 = vpop.f32.mrf.mxu0
        %v3058 = vadd.f32 %v2776, %v3057
        %v3059 = vpop.f32.mrf.mxu0
        %v3060 = vadd.f32 %v2780, %v3059
        %v3061 = vpop.f32.mrf.mxu0
        %v3062 = vadd.f32 %v2776, %v3061
        %v3063 = vpop.f32.mrf.mxu0
        %v3064 = vadd.f32 %v2780, %v3063
        %3065 = vdwg.mxu0
        %3066 = vmatprep.subr.bf16.mxu0 %v2974
        %3067 = vmatpush1.bf16.msra.mxu0 %v2973
        %3068 = vmatprep.subr.bf16.mxu0 %v2972
        %3069 = vmatpush1.bf16.msra.mxu0 %v2971
        %3070 = vmatprep.subr.bf16.mxu0 %v2970
        %3071 = vmatpush1.bf16.msra.mxu0 %v2969
        %3072 = vmatprep.subr.bf16.mxu0 %v2968
        %3073 = vmatpush1.bf16.msra.mxu0 %v2967
        %3074 = vmatprep.subr.bf16.mxu0 %v2966
        %3075 = vmatpush1.bf16.msra.mxu0 %v2965
        %3076 = vmatprep.subr.bf16.mxu0 %v2964
        %3077 = vmatpush1.bf16.msra.mxu0 %v2963
        %3078 = vmatprep.subr.bf16.mxu0 %v2962
        %3079 = vmatpush1.bf16.msra.mxu0 %v2961
        %3080 = vmatprep.subr.bf16.mxu0 %v2960
        %3081 = vmatpush1.bf16.msra.mxu0 %v2959
        %3082 = vmatprep.subr.bf16.mxu0 0
        %3083 = vmatpush2.bf16.msra.mxu0 0
        %3084 = vmatprep.subr.bf16.mxu0 0
        %3085 = vmatpush2.bf16.msra.mxu0 0
        %3086 = vmatprep.subr.bf16.mxu0 0
        %3087 = vmatpush2.bf16.msra.mxu0 0
        %3088 = vmatprep.subr.bf16.mxu0 0
        %3089 = vmatpush2.bf16.msra.mxu0 0
        %3090 = vmatprep.subr.bf16.mxu0 0
        %3091 = vmatpush2.bf16.msra.mxu0 0
        %3092 = vmatprep.subr.bf16.mxu0 0
        %3093 = vmatpush2.bf16.msra.mxu0 0
        %3094 = vmatprep.subr.bf16.mxu0 0
        %3095 = vmatpush2.bf16.msra.mxu0 0
        %3096 = vmatprep.subr.bf16.mxu0 0
        %3097 = vmatpush2.bf16.msra.mxu0 0
        %3098 = vmatprep.mubr.bf16.mxu0 0
        %3099 = vmatmul.mubr.bf16.gmra.mxu0 %v2771
        %v3100 = vpop.f32.mrf.mxu0
        %v3101 = vadd.f32 %v3058, %v3100
        %v3102 = vpop.f32.mrf.mxu0
        %v3103 = vadd.f32 %v3060, %v3102
        %v3104 = vpop.f32.mrf.mxu0
        %v3105 = vadd.f32 %v3062, %v3104
        %v3106 = vpop.f32.mrf.mxu0
        %v3107 = vadd.f32 %v3064, %v3106
        %3108 = vdwg.mxu0
        %v3109 = vxor.u32 %v3103, 2147483648
        %v3110 = vxor.u32 %v3107, 2147483648
        %v3111 = vmul.f32 %v3109, 1.442695
        %v3112 = vpow.pop %v3111
        %v3113 = vmul.f32 %v3110, 1.442695
        %v3114 = vpow.pop %v3113
        %v3115 = vadd.f32 %v3112, 1.0
        %v3116 = vadd.f32 %v3114, 1.0
        %v3117 = vrcp.pop %v3115
        %v3118 = vmul.f32 1.0, %v3117
        %v3119 = vrcp.pop %v3116
        %v3120 = vmul.f32 1.0, %v3119
        %v3121 = vsub.f32 %v3101, %v2712
        %v3122 = vsub.f32 %v3105, %v2713
        %v3123 = vmul.f32 %v3118, %v3121
        %v3124 = vmul.f32 %v3120, %v3122
        %v3125 = vadd.f32 %v2712, %v3123
        %v3126 = vadd.f32 %v2713, %v3124
        %v3127 = vld [vmem:[#allocation16] sm:$0xff]
        %v3128 = vld [vmem:[#allocation16 + $0x8] sm:$0xff]
        %v3129 = vld [vmem:[#allocation16 + $0x10] sm:$0xff]
        %v3130 = vld [vmem:[#allocation16 + $0x18] sm:$0xff]
        %v3131 = vld [vmem:[#allocation16 + $0x20] sm:$0xff]
        %v3132 = vld [vmem:[#allocation16 + $0x28] sm:$0xff]
        %v3133 = vld [vmem:[#allocation16 + $0x30] sm:$0xff]
        %v3134 = vld [vmem:[#allocation16 + $0x38] sm:$0xff]
        %v3135 = vld [vmem:[#allocation16 + $0x40] sm:$0xff]
        %v3136 = vld [vmem:[#allocation16 + $0x48] sm:$0xff]
        %v3137 = vld [vmem:[#allocation16 + $0x50] sm:$0xff]
        %v3138 = vld [vmem:[#allocation16 + $0x58] sm:$0xff]
        %v3139 = vld [vmem:[#allocation16 + $0x60] sm:$0xff]
        %v3140 = vld [vmem:[#allocation16 + $0x68] sm:$0xff]
        %v3141 = vld [vmem:[#allocation16 + $0x70] sm:$0xff]
        %v3142 = vld [vmem:[#allocation16 + $0x78] sm:$0xff]
        %v3143 = vld [vmem:[%s29] sm:$0x3]
        %v3144 = vpack.c.bf16 %v3126, %v3125
        %v3146 = vlaneseq
        %v3147 = vshrl.u32 %v3146, 7
        %v3148 = vsub.s32 0, %v3147
        %v3149 = vrot.slane %v3143, %v3148
        %v3150 = vlaneseq
        %v3151 = vshrl.u32 %v3150, 7
        %v3152 = vsub.s32 1, %v3151
        %v3153 = vrot.slane %v3143, %v3152
        %v3172 = vunpack.c.l.b16 %v3127
        %v3173 = vunpack.c.h.b16 %v3127
        %v3174 = vunpack.c.l.b16 %v3128
        %v3175 = vunpack.c.h.b16 %v3128
        %v3176 = vunpack.c.l.b16 %v3129
        %v3177 = vunpack.c.h.b16 %v3129
        %v3178 = vunpack.c.l.b16 %v3130
        %v3179 = vunpack.c.h.b16 %v3130
        %v3180 = vunpack.c.l.b16 %v3131
        %v3181 = vunpack.c.h.b16 %v3131
        %v3182 = vunpack.c.l.b16 %v3132
        %v3183 = vunpack.c.h.b16 %v3132
        %v3184 = vunpack.c.l.b16 %v3133
        %v3185 = vunpack.c.h.b16 %v3133
        %v3186 = vunpack.c.l.b16 %v3134
        %v3187 = vunpack.c.h.b16 %v3134
        %v3188 = vunpack.c.l.b16 %v3135
        %v3189 = vunpack.c.h.b16 %v3135
        %v3190 = vunpack.c.l.b16 %v3136
        %v3191 = vunpack.c.h.b16 %v3136
        %v3192 = vunpack.c.l.b16 %v3137
        %v3193 = vunpack.c.h.b16 %v3137
        %v3194 = vunpack.c.l.b16 %v3138
        %v3195 = vunpack.c.h.b16 %v3138
        %v3196 = vunpack.c.l.b16 %v3139
        %v3197 = vunpack.c.h.b16 %v3139
        %v3198 = vunpack.c.l.b16 %v3140
        %v3199 = vunpack.c.h.b16 %v3140
        %v3200 = vunpack.c.l.b16 %v3141
        %v3201 = vunpack.c.h.b16 %v3141
        %v3202 = vunpack.c.l.b16 %v3142
        %v3203 = vunpack.c.h.b16 %v3142
        %v3204 = vpack.c.b16 %v3174, %v3172
        %v3205 = vpack.c.b16 %v3175, %v3173
        %v3206 = vpack.c.b16 %v3178, %v3176
        %v3207 = vpack.c.b16 %v3179, %v3177
        %v3208 = vpack.c.b16 %v3182, %v3180
        %v3209 = vpack.c.b16 %v3183, %v3181
        %v3210 = vpack.c.b16 %v3186, %v3184
        %v3211 = vpack.c.b16 %v3187, %v3185
        %v3212 = vpack.c.b16 %v3190, %v3188
        %v3213 = vpack.c.b16 %v3191, %v3189
        %v3214 = vpack.c.b16 %v3194, %v3192
        %v3215 = vpack.c.b16 %v3195, %v3193
        %v3216 = vpack.c.b16 %v3198, %v3196
        %v3217 = vpack.c.b16 %v3199, %v3197
        %v3218 = vpack.c.b16 %v3202, %v3200
        %v3219 = vpack.c.b16 %v3203, %v3201
        %3236 = vmatprep.subr.bf16.mxu0 %v3219
        %3237 = vmatpush1.bf16.msra.mxu0 %v3218
        %3238 = vmatprep.subr.bf16.mxu0 %v3217
        %3239 = vmatpush1.bf16.msra.mxu0 %v3216
        %3240 = vmatprep.subr.bf16.mxu0 %v3215
        %3241 = vmatpush1.bf16.msra.mxu0 %v3214
        %3242 = vmatprep.subr.bf16.mxu0 %v3213
        %3243 = vmatpush1.bf16.msra.mxu0 %v3212
        %3244 = vmatprep.subr.bf16.mxu0 %v3211
        %3245 = vmatpush1.bf16.msra.mxu0 %v3210
        %3246 = vmatprep.subr.bf16.mxu0 %v3209
        %3247 = vmatpush1.bf16.msra.mxu0 %v3208
        %3248 = vmatprep.subr.bf16.mxu0 %v3207
        %3249 = vmatpush1.bf16.msra.mxu0 %v3206
        %3250 = vmatprep.subr.bf16.mxu0 %v3205
        %3251 = vmatpush1.bf16.msra.mxu0 %v3204
        %3252 = vmatprep.subr.bf16.mxu0 0
        %3253 = vmatpush2.bf16.msra.mxu0 0
        %3254 = vmatprep.subr.bf16.mxu0 0
        %3255 = vmatpush2.bf16.msra.mxu0 0
        %3256 = vmatprep.subr.bf16.mxu0 0
        %3257 = vmatpush2.bf16.msra.mxu0 0
        %3258 = vmatprep.subr.bf16.mxu0 0
        %3259 = vmatpush2.bf16.msra.mxu0 0
        %3260 = vmatprep.subr.bf16.mxu0 0
        %3261 = vmatpush2.bf16.msra.mxu0 0
        %3262 = vmatprep.subr.bf16.mxu0 0
        %3263 = vmatpush2.bf16.msra.mxu0 0
        %3264 = vmatprep.subr.bf16.mxu0 0
        %3265 = vmatpush2.bf16.msra.mxu0 0
        %3266 = vmatprep.subr.bf16.mxu0 0
        %3267 = vmatpush2.bf16.msra.mxu0 0
        %3268 = vmatprep.mubr.bf16.mxu0 0
        %3269 = vmatmul.mubr.bf16.gmra.mxu0 %v3144
        %v3270 = vpop.f32.mrf.mxu0
        %v3271 = vadd.f32 %v3149, %v3270
        %v3272 = vpop.f32.mrf.mxu0
        %v3273 = vadd.f32 %v3153, %v3272
        %v3274 = vpop.f32.mrf.mxu0
        %v3275 = vadd.f32 %v3149, %v3274
        %v3276 = vpop.f32.mrf.mxu0
        %v3277 = vadd.f32 %v3153, %v3276
        %3278 = vdwg.mxu0
        %3279 = vst [vmem:[%s2297] ss:$2 sm:$0xff] %v3271
        %s3280 = scalar_lea.vmem [#allocation2], 24
        %3281 = vst [vmem:[%s3280] ss:$2 sm:$0xff] %v3275
        %3282 = vst [vmem:[%s2299] ss:$2 sm:$0xff] %v3273
        %s3283 = scalar_lea.vmem [#allocation2], 25
        %3284 = vst [vmem:[%s3283] ss:$2 sm:$0xff] %v3277
        %v3285 = vld [vmem:[#allocation2 + $0x8] sm:$0xff]
        %v3286 = vld [vmem:[#allocation2 + $0x10] sm:$0xff]
        %v3287 = vld [vmem:[#allocation2 + $0x18] sm:$0xff]
        %v3288 = vld [vmem:[#allocation2 + $0x20] sm:$0xff]
        %v3289 = vld [vmem:[#allocation17] sm:$0xff]
        %v3290 = vld [vmem:[#allocation17 + $0x8] sm:$0xff]
        %v3291 = vld [vmem:[#allocation17 + $0x10] sm:$0xff]
        %v3292 = vld [vmem:[#allocation17 + $0x18] sm:$0xff]
        %v3293 = vld [vmem:[#allocation17 + $0x20] sm:$0xff]
        %v3294 = vld [vmem:[#allocation17 + $0x28] sm:$0xff]
        %v3295 = vld [vmem:[#allocation17 + $0x30] sm:$0xff]
        %v3296 = vld [vmem:[#allocation17 + $0x38] sm:$0xff]
        %v3297 = vld [vmem:[#allocation17 + $0x40] sm:$0xff]
        %v3298 = vld [vmem:[#allocation17 + $0x48] sm:$0xff]
        %v3299 = vld [vmem:[#allocation17 + $0x50] sm:$0xff]
        %v3300 = vld [vmem:[#allocation17 + $0x58] sm:$0xff]
        %v3301 = vld [vmem:[#allocation17 + $0x60] sm:$0xff]
        %v3302 = vld [vmem:[#allocation17 + $0x68] sm:$0xff]
        %v3303 = vld [vmem:[#allocation17 + $0x70] sm:$0xff]
        %v3304 = vld [vmem:[#allocation17 + $0x78] sm:$0xff]
        %v3305 = vld [vmem:[#allocation17 + $0x80] sm:$0xff]
        %v3306 = vld [vmem:[#allocation17 + $0x88] sm:$0xff]
        %v3307 = vld [vmem:[#allocation17 + $0x90] sm:$0xff]
        %v3308 = vld [vmem:[#allocation17 + $0x98] sm:$0xff]
        %v3309 = vld [vmem:[#allocation17 + $0xa0] sm:$0xff]
        %v3310 = vld [vmem:[#allocation17 + $0xa8] sm:$0xff]
        %v3311 = vld [vmem:[#allocation17 + $0xb0] sm:$0xff]
        %v3312 = vld [vmem:[#allocation17 + $0xb8] sm:$0xff]
        %v3313 = vld [vmem:[#allocation17 + $0xc0] sm:$0xff]
        %v3314 = vld [vmem:[#allocation17 + $0xc8] sm:$0xff]
        %v3315 = vld [vmem:[#allocation17 + $0xd0] sm:$0xff]
        %v3316 = vld [vmem:[#allocation17 + $0xd8] sm:$0xff]
        %v3317 = vld [vmem:[#allocation17 + $0xe0] sm:$0xff]
        %v3318 = vld [vmem:[#allocation17 + $0xe8] sm:$0xff]
        %v3319 = vld [vmem:[#allocation17 + $0xf0] sm:$0xff]
        %v3320 = vld [vmem:[#allocation17 + $0xf8] sm:$0xff]
        %v3321 = vld [vmem:[#allocation17 + $0x100] sm:$0xff]
        %v3322 = vld [vmem:[#allocation17 + $0x108] sm:$0xff]
        %v3323 = vld [vmem:[#allocation17 + $0x110] sm:$0xff]
        %v3324 = vld [vmem:[#allocation17 + $0x118] sm:$0xff]
        %v3325 = vld [vmem:[#allocation17 + $0x120] sm:$0xff]
        %v3326 = vld [vmem:[#allocation17 + $0x128] sm:$0xff]
        %v3327 = vld [vmem:[#allocation17 + $0x130] sm:$0xff]
        %v3328 = vld [vmem:[#allocation17 + $0x138] sm:$0xff]
        %v3329 = vld [vmem:[#allocation17 + $0x140] sm:$0xff]
        %v3330 = vld [vmem:[#allocation17 + $0x148] sm:$0xff]
        %v3331 = vld [vmem:[#allocation17 + $0x150] sm:$0xff]
        %v3332 = vld [vmem:[#allocation17 + $0x158] sm:$0xff]
        %v3333 = vld [vmem:[#allocation17 + $0x160] sm:$0xff]
        %v3334 = vld [vmem:[#allocation17 + $0x168] sm:$0xff]
        %v3335 = vld [vmem:[#allocation17 + $0x170] sm:$0xff]
        %v3336 = vld [vmem:[#allocation17 + $0x178] sm:$0xff]
        %v3337 = vld [vmem:[%s33] sm:$0x3]
        %v3338 = vld [vmem:[#allocation2 + $0x7] sm:$0xff]
        %v3339 = vld [vmem:[#allocation2 + $0xf] sm:$0xff]
        %v3340 = vld [vmem:[#allocation2 + $0x17] sm:$0xff]
        %v3341 = vld [vmem:[#allocation2 + $0x1f] sm:$0xff]
        %v3342 = vld [vmem:[#allocation2 + $0x9] sm:$0xff]
        %v3343 = vld [vmem:[#allocation2 + $0x11] sm:$0xff]
        %v3344 = vld [vmem:[#allocation2 + $0x19] sm:$0xff]
        %v3345 = vld [vmem:[#allocation2 + $0x21] sm:$0xff]
        %v3346 = vpack.c.bf16 %v3339, %v3338
        %v3347 = vpack.c.bf16 %v3286, %v3285
        %v3348 = vpack.c.bf16 %v3343, %v3342
        %v3349 = vpack.c.bf16 %v3341, %v3340
        %v3350 = vpack.c.bf16 %v3288, %v3287
        %v3351 = vpack.c.bf16 %v3345, %v3344
        %v3353 = vlaneseq
        %v3354 = vshrl.u32 %v3353, 7
        %v3355 = vsub.s32 0, %v3354
        %v3356 = vrot.slane %v3337, %v3355
        %v3357 = vlaneseq
        %v3358 = vshrl.u32 %v3357, 7
        %v3359 = vsub.s32 1, %v3358
        %v3360 = vrot.slane %v3337, %v3359
        %v3411 = vunpack.c.l.b16 %v3289
        %v3412 = vunpack.c.h.b16 %v3289
        %v3413 = vunpack.c.l.b16 %v3290
        %v3414 = vunpack.c.h.b16 %v3290
        %v3415 = vunpack.c.l.b16 %v3291
        %v3416 = vunpack.c.h.b16 %v3291
        %v3417 = vunpack.c.l.b16 %v3292
        %v3418 = vunpack.c.h.b16 %v3292
        %v3419 = vunpack.c.l.b16 %v3293
        %v3420 = vunpack.c.h.b16 %v3293
        %v3421 = vunpack.c.l.b16 %v3294
        %v3422 = vunpack.c.h.b16 %v3294
        %v3423 = vunpack.c.l.b16 %v3295
        %v3424 = vunpack.c.h.b16 %v3295
        %v3425 = vunpack.c.l.b16 %v3296
        %v3426 = vunpack.c.h.b16 %v3296
        %v3427 = vunpack.c.l.b16 %v3297
        %v3428 = vunpack.c.h.b16 %v3297
        %v3429 = vunpack.c.l.b16 %v3298
        %v3430 = vunpack.c.h.b16 %v3298
        %v3431 = vunpack.c.l.b16 %v3299
        %v3432 = vunpack.c.h.b16 %v3299
        %v3433 = vunpack.c.l.b16 %v3300
        %v3434 = vunpack.c.h.b16 %v3300
        %v3435 = vunpack.c.l.b16 %v3301
        %v3436 = vunpack.c.h.b16 %v3301
        %v3437 = vunpack.c.l.b16 %v3302
        %v3438 = vunpack.c.h.b16 %v3302
        %v3439 = vunpack.c.l.b16 %v3303
        %v3440 = vunpack.c.h.b16 %v3303
        %v3441 = vunpack.c.l.b16 %v3304
        %v3442 = vunpack.c.h.b16 %v3304
        %v3443 = vunpack.c.l.b16 %v3305
        %v3444 = vunpack.c.h.b16 %v3305
        %v3445 = vunpack.c.l.b16 %v3306
        %v3446 = vunpack.c.h.b16 %v3306
        %v3447 = vunpack.c.l.b16 %v3307
        %v3448 = vunpack.c.h.b16 %v3307
        %v3449 = vunpack.c.l.b16 %v3308
        %v3450 = vunpack.c.h.b16 %v3308
        %v3451 = vunpack.c.l.b16 %v3309
        %v3452 = vunpack.c.h.b16 %v3309
        %v3453 = vunpack.c.l.b16 %v3310
        %v3454 = vunpack.c.h.b16 %v3310
        %v3455 = vunpack.c.l.b16 %v3311
        %v3456 = vunpack.c.h.b16 %v3311
        %v3457 = vunpack.c.l.b16 %v3312
        %v3458 = vunpack.c.h.b16 %v3312
        %v3459 = vunpack.c.l.b16 %v3313
        %v3460 = vunpack.c.h.b16 %v3313
        %v3461 = vunpack.c.l.b16 %v3314
        %v3462 = vunpack.c.h.b16 %v3314
        %v3463 = vunpack.c.l.b16 %v3315
        %v3464 = vunpack.c.h.b16 %v3315
        %v3465 = vunpack.c.l.b16 %v3316
        %v3466 = vunpack.c.h.b16 %v3316
        %v3467 = vunpack.c.l.b16 %v3317
        %v3468 = vunpack.c.h.b16 %v3317
        %v3469 = vunpack.c.l.b16 %v3318
        %v3470 = vunpack.c.h.b16 %v3318
        %v3471 = vunpack.c.l.b16 %v3319
        %v3472 = vunpack.c.h.b16 %v3319
        %v3473 = vunpack.c.l.b16 %v3320
        %v3474 = vunpack.c.h.b16 %v3320
        %v3475 = vunpack.c.l.b16 %v3321
        %v3476 = vunpack.c.h.b16 %v3321
        %v3477 = vunpack.c.l.b16 %v3322
        %v3478 = vunpack.c.h.b16 %v3322
        %v3479 = vunpack.c.l.b16 %v3323
        %v3480 = vunpack.c.h.b16 %v3323
        %v3481 = vunpack.c.l.b16 %v3324
        %v3482 = vunpack.c.h.b16 %v3324
        %v3483 = vunpack.c.l.b16 %v3325
        %v3484 = vunpack.c.h.b16 %v3325
        %v3485 = vunpack.c.l.b16 %v3326
        %v3486 = vunpack.c.h.b16 %v3326
        %v3487 = vunpack.c.l.b16 %v3327
        %v3488 = vunpack.c.h.b16 %v3327
        %v3489 = vunpack.c.l.b16 %v3328
        %v3490 = vunpack.c.h.b16 %v3328
        %v3491 = vunpack.c.l.b16 %v3329
        %v3492 = vunpack.c.h.b16 %v3329
        %v3493 = vunpack.c.l.b16 %v3330
        %v3494 = vunpack.c.h.b16 %v3330
        %v3495 = vunpack.c.l.b16 %v3331
        %v3496 = vunpack.c.h.b16 %v3331
        %v3497 = vunpack.c.l.b16 %v3332
        %v3498 = vunpack.c.h.b16 %v3332
        %v3499 = vunpack.c.l.b16 %v3333
        %v3500 = vunpack.c.h.b16 %v3333
        %v3501 = vunpack.c.l.b16 %v3334
        %v3502 = vunpack.c.h.b16 %v3334
        %v3503 = vunpack.c.l.b16 %v3335
        %v3504 = vunpack.c.h.b16 %v3335
        %v3505 = vunpack.c.l.b16 %v3336
        %v3506 = vunpack.c.h.b16 %v3336
        %v3507 = vpack.c.b16 %v3413, %v3411
        %v3508 = vpack.c.b16 %v3414, %v3412
        %v3509 = vpack.c.b16 %v3417, %v3415
        %v3510 = vpack.c.b16 %v3418, %v3416
        %v3511 = vpack.c.b16 %v3421, %v3419
        %v3512 = vpack.c.b16 %v3422, %v3420
        %v3513 = vpack.c.b16 %v3425, %v3423
        %v3514 = vpack.c.b16 %v3426, %v3424
        %v3515 = vpack.c.b16 %v3429, %v3427
        %v3516 = vpack.c.b16 %v3430, %v3428
        %v3517 = vpack.c.b16 %v3433, %v3431
        %v3518 = vpack.c.b16 %v3434, %v3432
        %v3519 = vpack.c.b16 %v3437, %v3435
        %v3520 = vpack.c.b16 %v3438, %v3436
        %v3521 = vpack.c.b16 %v3441, %v3439
        %v3522 = vpack.c.b16 %v3442, %v3440
        %v3523 = vpack.c.b16 %v3445, %v3443
        %v3524 = vpack.c.b16 %v3446, %v3444
        %v3525 = vpack.c.b16 %v3449, %v3447
        %v3526 = vpack.c.b16 %v3450, %v3448
        %v3527 = vpack.c.b16 %v3453, %v3451
        %v3528 = vpack.c.b16 %v3454, %v3452
        %v3529 = vpack.c.b16 %v3457, %v3455
        %v3530 = vpack.c.b16 %v3458, %v3456
        %v3531 = vpack.c.b16 %v3461, %v3459
        %v3532 = vpack.c.b16 %v3462, %v3460
        %v3533 = vpack.c.b16 %v3465, %v3463
        %v3534 = vpack.c.b16 %v3466, %v3464
        %v3535 = vpack.c.b16 %v3469, %v3467
        %v3536 = vpack.c.b16 %v3470, %v3468
        %v3537 = vpack.c.b16 %v3473, %v3471
        %v3538 = vpack.c.b16 %v3474, %v3472
        %v3539 = vpack.c.b16 %v3477, %v3475
        %v3540 = vpack.c.b16 %v3478, %v3476
        %v3541 = vpack.c.b16 %v3481, %v3479
        %v3542 = vpack.c.b16 %v3482, %v3480
        %v3543 = vpack.c.b16 %v3485, %v3483
        %v3544 = vpack.c.b16 %v3486, %v3484
        %v3545 = vpack.c.b16 %v3489, %v3487
        %v3546 = vpack.c.b16 %v3490, %v3488
        %v3547 = vpack.c.b16 %v3493, %v3491
        %v3548 = vpack.c.b16 %v3494, %v3492
        %v3549 = vpack.c.b16 %v3497, %v3495
        %v3550 = vpack.c.b16 %v3498, %v3496
        %v3551 = vpack.c.b16 %v3501, %v3499
        %v3552 = vpack.c.b16 %v3502, %v3500
        %v3553 = vpack.c.b16 %v3505, %v3503
        %v3554 = vpack.c.b16 %v3506, %v3504
        %3603 = vmatprep.subr.bf16.mxu0 %v3522
        %3604 = vmatpush1.bf16.msra.mxu0 %v3521
        %3605 = vmatprep.subr.bf16.mxu0 %v3520
        %3606 = vmatpush1.bf16.msra.mxu0 %v3519
        %3607 = vmatprep.subr.bf16.mxu0 %v3518
        %3608 = vmatpush1.bf16.msra.mxu0 %v3517
        %3609 = vmatprep.subr.bf16.mxu0 %v3516
        %3610 = vmatpush1.bf16.msra.mxu0 %v3515
        %3611 = vmatprep.subr.bf16.mxu0 %v3514
        %3612 = vmatpush1.bf16.msra.mxu0 %v3513
        %3613 = vmatprep.subr.bf16.mxu0 %v3512
        %3614 = vmatpush1.bf16.msra.mxu0 %v3511
        %3615 = vmatprep.subr.bf16.mxu0 %v3510
        %3616 = vmatpush1.bf16.msra.mxu0 %v3509
        %3617 = vmatprep.subr.bf16.mxu0 %v3508
        %3618 = vmatpush1.bf16.msra.mxu0 %v3507
        %3619 = vmatprep.subr.bf16.mxu0 %v3538
        %3620 = vmatpush2.bf16.msra.mxu0 %v3537
        %3621 = vmatprep.subr.bf16.mxu0 %v3536
        %3622 = vmatpush2.bf16.msra.mxu0 %v3535
        %3623 = vmatprep.subr.bf16.mxu0 %v3534
        %3624 = vmatpush2.bf16.msra.mxu0 %v3533
        %3625 = vmatprep.subr.bf16.mxu0 %v3532
        %3626 = vmatpush2.bf16.msra.mxu0 %v3531
        %3627 = vmatprep.subr.bf16.mxu0 %v3530
        %3628 = vmatpush2.bf16.msra.mxu0 %v3529
        %3629 = vmatprep.subr.bf16.mxu0 %v3528
        %3630 = vmatpush2.bf16.msra.mxu0 %v3527
        %3631 = vmatprep.subr.bf16.mxu0 %v3526
        %3632 = vmatpush2.bf16.msra.mxu0 %v3525
        %3633 = vmatprep.subr.bf16.mxu0 %v3524
        %3634 = vmatpush2.bf16.msra.mxu0 %v3523
        %3635 = vmatprep.mubr.bf16.mxu0 %v3347
        %3636 = vmatmul.mubr.bf16.gmra.mxu0 %v3346
        %v3637 = vpop.f32.mrf.mxu0
        %v3638 = vadd.f32 %v3356, %v3637
        %v3639 = vpop.f32.mrf.mxu0
        %v3640 = vadd.f32 %v3360, %v3639
        %v3641 = vpop.f32.mrf.mxu0
        %v3642 = vadd.f32 %v3356, %v3641
        %v3643 = vpop.f32.mrf.mxu0
        %v3644 = vadd.f32 %v3360, %v3643
        %3645 = vmatprep.mubr.bf16.mxu0 %v3350
        %3646 = vmatmul.mubr.bf16.gmra.mxu0 %v3349
        %v3647 = vpop.f32.mrf.mxu0
        %v3648 = vadd.f32 %v3356, %v3647
        %v3649 = vpop.f32.mrf.mxu0
        %v3650 = vadd.f32 %v3360, %v3649
        %v3651 = vpop.f32.mrf.mxu0
        %v3652 = vadd.f32 %v3356, %v3651
        %v3653 = vpop.f32.mrf.mxu0
        %v3654 = vadd.f32 %v3360, %v3653
        %3655 = vdwg.mxu0
        %3656 = vmatprep.subr.bf16.mxu0 %v3554
        %3657 = vmatpush1.bf16.msra.mxu0 %v3553
        %3658 = vmatprep.subr.bf16.mxu0 %v3552
        %3659 = vmatpush1.bf16.msra.mxu0 %v3551
        %3660 = vmatprep.subr.bf16.mxu0 %v3550
        %3661 = vmatpush1.bf16.msra.mxu0 %v3549
        %3662 = vmatprep.subr.bf16.mxu0 %v3548
        %3663 = vmatpush1.bf16.msra.mxu0 %v3547
        %3664 = vmatprep.subr.bf16.mxu0 %v3546
        %3665 = vmatpush1.bf16.msra.mxu0 %v3545
        %3666 = vmatprep.subr.bf16.mxu0 %v3544
        %3667 = vmatpush1.bf16.msra.mxu0 %v3543
        %3668 = vmatprep.subr.bf16.mxu0 %v3542
        %3669 = vmatpush1.bf16.msra.mxu0 %v3541
        %3670 = vmatprep.subr.bf16.mxu0 %v3540
        %3671 = vmatpush1.bf16.msra.mxu0 %v3539
        %3672 = vmatprep.subr.bf16.mxu0 0
        %3673 = vmatpush2.bf16.msra.mxu0 0
        %3674 = vmatprep.subr.bf16.mxu0 0
        %3675 = vmatpush2.bf16.msra.mxu0 0
        %3676 = vmatprep.subr.bf16.mxu0 0
        %3677 = vmatpush2.bf16.msra.mxu0 0
        %3678 = vmatprep.subr.bf16.mxu0 0
        %3679 = vmatpush2.bf16.msra.mxu0 0
        %3680 = vmatprep.subr.bf16.mxu0 0
        %3681 = vmatpush2.bf16.msra.mxu0 0
        %3682 = vmatprep.subr.bf16.mxu0 0
        %3683 = vmatpush2.bf16.msra.mxu0 0
        %3684 = vmatprep.subr.bf16.mxu0 0
        %3685 = vmatpush2.bf16.msra.mxu0 0
        %3686 = vmatprep.subr.bf16.mxu0 0
        %3687 = vmatpush2.bf16.msra.mxu0 0
        %3688 = vmatprep.mubr.bf16.mxu0 0
        %3689 = vmatmul.mubr.bf16.gmra.mxu0 %v3348
        %v3690 = vpop.f32.mrf.mxu0
        %v3691 = vadd.f32 %v3638, %v3690
        %v3692 = vpop.f32.mrf.mxu0
        %v3693 = vadd.f32 %v3640, %v3692
        %v3694 = vpop.f32.mrf.mxu0
        %v3695 = vadd.f32 %v3642, %v3694
        %v3696 = vpop.f32.mrf.mxu0
        %v3697 = vadd.f32 %v3644, %v3696
        %3698 = vmatprep.mubr.bf16.mxu0 0
        %3699 = vmatmul.mubr.bf16.gmra.mxu0 %v3351
        %v3700 = vpop.f32.mrf.mxu0
        %v3701 = vadd.f32 %v3648, %v3700
        %v3702 = vpop.f32.mrf.mxu0
        %v3703 = vadd.f32 %v3650, %v3702
        %v3704 = vpop.f32.mrf.mxu0
        %v3705 = vadd.f32 %v3652, %v3704
        %v3706 = vpop.f32.mrf.mxu0
        %v3707 = vadd.f32 %v3654, %v3706
        %3708 = vdwg.mxu0
        %v3709 = vxor.u32 %v3693, 2147483648
        %v3710 = vxor.u32 %v3697, 2147483648
        %v3711 = vxor.u32 %v3703, 2147483648
        %v3712 = vxor.u32 %v3707, 2147483648
        %v3713 = vmul.f32 %v3709, 1.442695
        %v3714 = vpow.pop %v3713
        %v3715 = vmul.f32 %v3710, 1.442695
        %v3716 = vpow.pop %v3715
        %v3717 = vmul.f32 %v3711, 1.442695
        %v3718 = vpow.pop %v3717
        %v3719 = vmul.f32 %v3712, 1.442695
        %v3720 = vpow.pop %v3719
        %v3721 = vadd.f32 %v3714, 1.0
        %v3722 = vadd.f32 %v3716, 1.0
        %v3723 = vadd.f32 %v3718, 1.0
        %v3724 = vadd.f32 %v3720, 1.0
        %v3725 = vrcp.pop %v3721
        %v3726 = vmul.f32 1.0, %v3725
        %v3727 = vrcp.pop %v3722
        %v3728 = vmul.f32 1.0, %v3727
        %v3729 = vrcp.pop %v3723
        %v3730 = vmul.f32 1.0, %v3729
        %v3731 = vrcp.pop %v3724
        %v3732 = vmul.f32 1.0, %v3731
        %v3733 = vsub.f32 %v3691, %v3285
        %v3734 = vsub.f32 %v3695, %v3286
        %v3735 = vsub.f32 %v3701, %v3287
        %v3736 = vsub.f32 %v3705, %v3288
        %v3737 = vmul.f32 %v3726, %v3733
        %v3738 = vmul.f32 %v3728, %v3734
        %v3739 = vmul.f32 %v3730, %v3735
        %v3740 = vmul.f32 %v3732, %v3736
        %v3741 = vadd.f32 %v3285, %v3737
        %v3742 = vadd.f32 %v3286, %v3738
        %v3743 = vadd.f32 %v3287, %v3739
        %v3744 = vadd.f32 %v3288, %v3740
        %v3745 = vld [vmem:[#allocation19] sm:$0xff]
        %v3746 = vld [vmem:[#allocation19 + $0x8] sm:$0xff]
        %v3747 = vld [vmem:[#allocation19 + $0x10] sm:$0xff]
        %v3748 = vld [vmem:[#allocation19 + $0x18] sm:$0xff]
        %v3749 = vld [vmem:[#allocation19 + $0x20] sm:$0xff]
        %v3750 = vld [vmem:[#allocation19 + $0x28] sm:$0xff]
        %v3751 = vld [vmem:[#allocation19 + $0x30] sm:$0xff]
        %v3752 = vld [vmem:[#allocation19 + $0x38] sm:$0xff]
        %v3753 = vld [vmem:[#allocation19 + $0x40] sm:$0xff]
        %v3754 = vld [vmem:[#allocation19 + $0x48] sm:$0xff]
        %v3755 = vld [vmem:[#allocation19 + $0x50] sm:$0xff]
        %v3756 = vld [vmem:[#allocation19 + $0x58] sm:$0xff]
        %v3757 = vld [vmem:[#allocation19 + $0x60] sm:$0xff]
        %v3758 = vld [vmem:[#allocation19 + $0x68] sm:$0xff]
        %v3759 = vld [vmem:[#allocation19 + $0x70] sm:$0xff]
        %v3760 = vld [vmem:[#allocation19 + $0x78] sm:$0xff]
        %v3761 = vld [vmem:[#allocation19 + $0x80] sm:$0xff]
        %v3762 = vld [vmem:[#allocation19 + $0x88] sm:$0xff]
        %v3763 = vld [vmem:[#allocation19 + $0x90] sm:$0xff]
        %v3764 = vld [vmem:[#allocation19 + $0x98] sm:$0xff]
        %v3765 = vld [vmem:[#allocation19 + $0xa0] sm:$0xff]
        %v3766 = vld [vmem:[#allocation19 + $0xa8] sm:$0xff]
        %v3767 = vld [vmem:[#allocation19 + $0xb0] sm:$0xff]
        %v3768 = vld [vmem:[#allocation19 + $0xb8] sm:$0xff]
        %v3769 = vld [vmem:[#allocation19 + $0xc0] sm:$0xff]
        %v3770 = vld [vmem:[#allocation19 + $0xc8] sm:$0xff]
        %v3771 = vld [vmem:[#allocation19 + $0xd0] sm:$0xff]
        %v3772 = vld [vmem:[#allocation19 + $0xd8] sm:$0xff]
        %v3773 = vld [vmem:[#allocation19 + $0xe0] sm:$0xff]
        %v3774 = vld [vmem:[#allocation19 + $0xe8] sm:$0xff]
        %v3775 = vld [vmem:[#allocation19 + $0xf0] sm:$0xff]
        %v3776 = vld [vmem:[#allocation19 + $0xf8] sm:$0xff]
        %v3777 = vld [vmem:[#allocation19 + $0x100] sm:$0xff]
        %v3778 = vld [vmem:[#allocation19 + $0x108] sm:$0xff]
        %v3779 = vld [vmem:[#allocation19 + $0x110] sm:$0xff]
        %v3780 = vld [vmem:[#allocation19 + $0x118] sm:$0xff]
        %v3781 = vld [vmem:[#allocation19 + $0x120] sm:$0xff]
        %v3782 = vld [vmem:[#allocation19 + $0x128] sm:$0xff]
        %v3783 = vld [vmem:[#allocation19 + $0x130] sm:$0xff]
        %v3784 = vld [vmem:[#allocation19 + $0x138] sm:$0xff]
        %v3785 = vld [vmem:[#allocation19 + $0x140] sm:$0xff]
        %v3786 = vld [vmem:[#allocation19 + $0x148] sm:$0xff]
        %v3787 = vld [vmem:[#allocation19 + $0x150] sm:$0xff]
        %v3788 = vld [vmem:[#allocation19 + $0x158] sm:$0xff]
        %v3789 = vld [vmem:[#allocation19 + $0x160] sm:$0xff]
        %v3790 = vld [vmem:[#allocation19 + $0x168] sm:$0xff]
        %v3791 = vld [vmem:[#allocation19 + $0x170] sm:$0xff]
        %v3792 = vld [vmem:[#allocation19 + $0x178] sm:$0xff]
        %v3793 = vld [vmem:[%s37] sm:$0x3]
        %3794 = vst [vmem:[#allocation2 + $0x8] sm:$0xff] %v3741
        %3795 = vst [vmem:[#allocation2 + $0x10] sm:$0xff] %v3742
        %3796 = vst [vmem:[#allocation2 + $0x18] sm:$0xff] %v3743
        %3797 = vst [vmem:[#allocation2 + $0x20] sm:$0xff] %v3744
        %v3798 = vld [vmem:[#allocation2 + $0x5] sm:$0xff]
        %v3799 = vld [vmem:[#allocation2 + $0xd] sm:$0xff]
        %v3800 = vld [vmem:[#allocation2 + $0x15] sm:$0xff]
        %v3801 = vld [vmem:[#allocation2 + $0x1d] sm:$0xff]
        %v3802 = vld [vmem:[#allocation2 + $0xb] sm:$0xff]
        %v3803 = vld [vmem:[#allocation2 + $0x13] sm:$0xff]
        %v3804 = vld [vmem:[#allocation2 + $0x1b] sm:$0xff]
        %v3805 = vld [vmem:[#allocation2 + $0x23] sm:$0xff]
        %v3806 = vpack.c.bf16 %v3799, %v3798
        %v3807 = vpack.c.bf16 %v3742, %v3741
        %v3808 = vpack.c.bf16 %v3803, %v3802
        %v3809 = vpack.c.bf16 %v3801, %v3800
        %v3810 = vpack.c.bf16 %v3744, %v3743
        %v3811 = vpack.c.bf16 %v3805, %v3804
        %v3813 = vlaneseq
        %v3814 = vshrl.u32 %v3813, 7
        %v3815 = vsub.s32 0, %v3814
        %v3816 = vrot.slane %v3793, %v3815
        %v3817 = vlaneseq
        %v3818 = vshrl.u32 %v3817, 7
        %v3819 = vsub.s32 1, %v3818
        %v3820 = vrot.slane %v3793, %v3819
        %v3871 = vunpack.c.l.b16 %v3745
        %v3872 = vunpack.c.h.b16 %v3745
        %v3873 = vunpack.c.l.b16 %v3746
        %v3874 = vunpack.c.h.b16 %v3746
        %v3875 = vunpack.c.l.b16 %v3747
        %v3876 = vunpack.c.h.b16 %v3747
        %v3877 = vunpack.c.l.b16 %v3748
        %v3878 = vunpack.c.h.b16 %v3748
        %v3879 = vunpack.c.l.b16 %v3749
        %v3880 = vunpack.c.h.b16 %v3749
        %v3881 = vunpack.c.l.b16 %v3750
        %v3882 = vunpack.c.h.b16 %v3750
        %v3883 = vunpack.c.l.b16 %v3751
        %v3884 = vunpack.c.h.b16 %v3751
        %v3885 = vunpack.c.l.b16 %v3752
        %v3886 = vunpack.c.h.b16 %v3752
        %v3887 = vunpack.c.l.b16 %v3753
        %v3888 = vunpack.c.h.b16 %v3753
        %v3889 = vunpack.c.l.b16 %v3754
        %v3890 = vunpack.c.h.b16 %v3754
        %v3891 = vunpack.c.l.b16 %v3755
        %v3892 = vunpack.c.h.b16 %v3755
        %v3893 = vunpack.c.l.b16 %v3756
        %v3894 = vunpack.c.h.b16 %v3756
        %v3895 = vunpack.c.l.b16 %v3757
        %v3896 = vunpack.c.h.b16 %v3757
        %v3897 = vunpack.c.l.b16 %v3758
        %v3898 = vunpack.c.h.b16 %v3758
        %v3899 = vunpack.c.l.b16 %v3759
        %v3900 = vunpack.c.h.b16 %v3759
        %v3901 = vunpack.c.l.b16 %v3760
        %v3902 = vunpack.c.h.b16 %v3760
        %v3903 = vunpack.c.l.b16 %v3761
        %v3904 = vunpack.c.h.b16 %v3761
        %v3905 = vunpack.c.l.b16 %v3762
        %v3906 = vunpack.c.h.b16 %v3762
        %v3907 = vunpack.c.l.b16 %v3763
        %v3908 = vunpack.c.h.b16 %v3763
        %v3909 = vunpack.c.l.b16 %v3764
        %v3910 = vunpack.c.h.b16 %v3764
        %v3911 = vunpack.c.l.b16 %v3765
        %v3912 = vunpack.c.h.b16 %v3765
        %v3913 = vunpack.c.l.b16 %v3766
        %v3914 = vunpack.c.h.b16 %v3766
        %v3915 = vunpack.c.l.b16 %v3767
        %v3916 = vunpack.c.h.b16 %v3767
        %v3917 = vunpack.c.l.b16 %v3768
        %v3918 = vunpack.c.h.b16 %v3768
        %v3919 = vunpack.c.l.b16 %v3769
        %v3920 = vunpack.c.h.b16 %v3769
        %v3921 = vunpack.c.l.b16 %v3770
        %v3922 = vunpack.c.h.b16 %v3770
        %v3923 = vunpack.c.l.b16 %v3771
        %v3924 = vunpack.c.h.b16 %v3771
        %v3925 = vunpack.c.l.b16 %v3772
        %v3926 = vunpack.c.h.b16 %v3772
        %v3927 = vunpack.c.l.b16 %v3773
        %v3928 = vunpack.c.h.b16 %v3773
        %v3929 = vunpack.c.l.b16 %v3774
        %v3930 = vunpack.c.h.b16 %v3774
        %v3931 = vunpack.c.l.b16 %v3775
        %v3932 = vunpack.c.h.b16 %v3775
        %v3933 = vunpack.c.l.b16 %v3776
        %v3934 = vunpack.c.h.b16 %v3776
        %v3935 = vunpack.c.l.b16 %v3777
        %v3936 = vunpack.c.h.b16 %v3777
        %v3937 = vunpack.c.l.b16 %v3778
        %v3938 = vunpack.c.h.b16 %v3778
        %v3939 = vunpack.c.l.b16 %v3779
        %v3940 = vunpack.c.h.b16 %v3779
        %v3941 = vunpack.c.l.b16 %v3780
        %v3942 = vunpack.c.h.b16 %v3780
        %v3943 = vunpack.c.l.b16 %v3781
        %v3944 = vunpack.c.h.b16 %v3781
        %v3945 = vunpack.c.l.b16 %v3782
        %v3946 = vunpack.c.h.b16 %v3782
        %v3947 = vunpack.c.l.b16 %v3783
        %v3948 = vunpack.c.h.b16 %v3783
        %v3949 = vunpack.c.l.b16 %v3784
        %v3950 = vunpack.c.h.b16 %v3784
        %v3951 = vunpack.c.l.b16 %v3785
        %v3952 = vunpack.c.h.b16 %v3785
        %v3953 = vunpack.c.l.b16 %v3786
        %v3954 = vunpack.c.h.b16 %v3786
        %v3955 = vunpack.c.l.b16 %v3787
        %v3956 = vunpack.c.h.b16 %v3787
        %v3957 = vunpack.c.l.b16 %v3788
        %v3958 = vunpack.c.h.b16 %v3788
        %v3959 = vunpack.c.l.b16 %v3789
        %v3960 = vunpack.c.h.b16 %v3789
        %v3961 = vunpack.c.l.b16 %v3790
        %v3962 = vunpack.c.h.b16 %v3790
        %v3963 = vunpack.c.l.b16 %v3791
        %v3964 = vunpack.c.h.b16 %v3791
        %v3965 = vunpack.c.l.b16 %v3792
        %v3966 = vunpack.c.h.b16 %v3792
        %v3967 = vpack.c.b16 %v3873, %v3871
        %v3968 = vpack.c.b16 %v3874, %v3872
        %v3969 = vpack.c.b16 %v3877, %v3875
        %v3970 = vpack.c.b16 %v3878, %v3876
        %v3971 = vpack.c.b16 %v3881, %v3879
        %v3972 = vpack.c.b16 %v3882, %v3880
        %v3973 = vpack.c.b16 %v3885, %v3883
        %v3974 = vpack.c.b16 %v3886, %v3884
        %v3975 = vpack.c.b16 %v3889, %v3887
        %v3976 = vpack.c.b16 %v3890, %v3888
        %v3977 = vpack.c.b16 %v3893, %v3891
        %v3978 = vpack.c.b16 %v3894, %v3892
        %v3979 = vpack.c.b16 %v3897, %v3895
        %v3980 = vpack.c.b16 %v3898, %v3896
        %v3981 = vpack.c.b16 %v3901, %v3899
        %v3982 = vpack.c.b16 %v3902, %v3900
        %v3983 = vpack.c.b16 %v3905, %v3903
        %v3984 = vpack.c.b16 %v3906, %v3904
        %v3985 = vpack.c.b16 %v3909, %v3907
        %v3986 = vpack.c.b16 %v3910, %v3908
        %v3987 = vpack.c.b16 %v3913, %v3911
        %v3988 = vpack.c.b16 %v3914, %v3912
        %v3989 = vpack.c.b16 %v3917, %v3915
        %v3990 = vpack.c.b16 %v3918, %v3916
        %v3991 = vpack.c.b16 %v3921, %v3919
        %v3992 = vpack.c.b16 %v3922, %v3920
        %v3993 = vpack.c.b16 %v3925, %v3923
        %v3994 = vpack.c.b16 %v3926, %v3924
        %v3995 = vpack.c.b16 %v3929, %v3927
        %v3996 = vpack.c.b16 %v3930, %v3928
        %v3997 = vpack.c.b16 %v3933, %v3931
        %v3998 = vpack.c.b16 %v3934, %v3932
        %v3999 = vpack.c.b16 %v3937, %v3935
        %v4000 = vpack.c.b16 %v3938, %v3936
        %v4001 = vpack.c.b16 %v3941, %v3939
        %v4002 = vpack.c.b16 %v3942, %v3940
        %v4003 = vpack.c.b16 %v3945, %v3943
        %v4004 = vpack.c.b16 %v3946, %v3944
        %v4005 = vpack.c.b16 %v3949, %v3947
        %v4006 = vpack.c.b16 %v3950, %v3948
        %v4007 = vpack.c.b16 %v3953, %v3951
        %v4008 = vpack.c.b16 %v3954, %v3952
        %v4009 = vpack.c.b16 %v3957, %v3955
        %v4010 = vpack.c.b16 %v3958, %v3956
        %v4011 = vpack.c.b16 %v3961, %v3959
        %v4012 = vpack.c.b16 %v3962, %v3960
        %v4013 = vpack.c.b16 %v3965, %v3963
        %v4014 = vpack.c.b16 %v3966, %v3964
        %4063 = vmatprep.subr.bf16.mxu0 %v3982
        %4064 = vmatpush1.bf16.msra.mxu0 %v3981
        %4065 = vmatprep.subr.bf16.mxu0 %v3980
        %4066 = vmatpush1.bf16.msra.mxu0 %v3979
        %4067 = vmatprep.subr.bf16.mxu0 %v3978
        %4068 = vmatpush1.bf16.msra.mxu0 %v3977
        %4069 = vmatprep.subr.bf16.mxu0 %v3976
        %4070 = vmatpush1.bf16.msra.mxu0 %v3975
        %4071 = vmatprep.subr.bf16.mxu0 %v3974
        %4072 = vmatpush1.bf16.msra.mxu0 %v3973
        %4073 = vmatprep.subr.bf16.mxu0 %v3972
        %4074 = vmatpush1.bf16.msra.mxu0 %v3971
        %4075 = vmatprep.subr.bf16.mxu0 %v3970
        %4076 = vmatpush1.bf16.msra.mxu0 %v3969
        %4077 = vmatprep.subr.bf16.mxu0 %v3968
        %4078 = vmatpush1.bf16.msra.mxu0 %v3967
        %4079 = vmatprep.subr.bf16.mxu0 %v3998
        %4080 = vmatpush2.bf16.msra.mxu0 %v3997
        %4081 = vmatprep.subr.bf16.mxu0 %v3996
        %4082 = vmatpush2.bf16.msra.mxu0 %v3995
        %4083 = vmatprep.subr.bf16.mxu0 %v3994
        %4084 = vmatpush2.bf16.msra.mxu0 %v3993
        %4085 = vmatprep.subr.bf16.mxu0 %v3992
        %4086 = vmatpush2.bf16.msra.mxu0 %v3991
        %4087 = vmatprep.subr.bf16.mxu0 %v3990
        %4088 = vmatpush2.bf16.msra.mxu0 %v3989
        %4089 = vmatprep.subr.bf16.mxu0 %v3988
        %4090 = vmatpush2.bf16.msra.mxu0 %v3987
        %4091 = vmatprep.subr.bf16.mxu0 %v3986
        %4092 = vmatpush2.bf16.msra.mxu0 %v3985
        %4093 = vmatprep.subr.bf16.mxu0 %v3984
        %4094 = vmatpush2.bf16.msra.mxu0 %v3983
        %4095 = vmatprep.mubr.bf16.mxu0 %v3807
        %4096 = vmatmul.mubr.bf16.gmra.mxu0 %v3806
        %v4097 = vpop.f32.mrf.mxu0
        %v4098 = vadd.f32 %v3816, %v4097
        %v4099 = vpop.f32.mrf.mxu0
        %v4100 = vadd.f32 %v3820, %v4099
        %v4101 = vpop.f32.mrf.mxu0
        %v4102 = vadd.f32 %v3816, %v4101
        %v4103 = vpop.f32.mrf.mxu0
        %v4104 = vadd.f32 %v3820, %v4103
        %4105 = vmatprep.mubr.bf16.mxu0 %v3810
        %4106 = vmatmul.mubr.bf16.gmra.mxu0 %v3809
        %v4107 = vpop.f32.mrf.mxu0
        %v4108 = vadd.f32 %v3816, %v4107
        %v4109 = vpop.f32.mrf.mxu0
        %v4110 = vadd.f32 %v3820, %v4109
        %v4111 = vpop.f32.mrf.mxu0
        %v4112 = vadd.f32 %v3816, %v4111
        %v4113 = vpop.f32.mrf.mxu0
        %v4114 = vadd.f32 %v3820, %v4113
        %4115 = vdwg.mxu0
        %4116 = vmatprep.subr.bf16.mxu0 %v4014
        %4117 = vmatpush1.bf16.msra.mxu0 %v4013
        %4118 = vmatprep.subr.bf16.mxu0 %v4012
        %4119 = vmatpush1.bf16.msra.mxu0 %v4011
        %4120 = vmatprep.subr.bf16.mxu0 %v4010
        %4121 = vmatpush1.bf16.msra.mxu0 %v4009
        %4122 = vmatprep.subr.bf16.mxu0 %v4008
        %4123 = vmatpush1.bf16.msra.mxu0 %v4007
        %4124 = vmatprep.subr.bf16.mxu0 %v4006
        %4125 = vmatpush1.bf16.msra.mxu0 %v4005
        %4126 = vmatprep.subr.bf16.mxu0 %v4004
        %4127 = vmatpush1.bf16.msra.mxu0 %v4003
        %4128 = vmatprep.subr.bf16.mxu0 %v4002
        %4129 = vmatpush1.bf16.msra.mxu0 %v4001
        %4130 = vmatprep.subr.bf16.mxu0 %v4000
        %4131 = vmatpush1.bf16.msra.mxu0 %v3999
        %4132 = vmatprep.subr.bf16.mxu0 0
        %4133 = vmatpush2.bf16.msra.mxu0 0
        %4134 = vmatprep.subr.bf16.mxu0 0
        %4135 = vmatpush2.bf16.msra.mxu0 0
        %4136 = vmatprep.subr.bf16.mxu0 0
        %4137 = vmatpush2.bf16.msra.mxu0 0
        %4138 = vmatprep.subr.bf16.mxu0 0
        %4139 = vmatpush2.bf16.msra.mxu0 0
        %4140 = vmatprep.subr.bf16.mxu0 0
        %4141 = vmatpush2.bf16.msra.mxu0 0
        %4142 = vmatprep.subr.bf16.mxu0 0
        %4143 = vmatpush2.bf16.msra.mxu0 0
        %4144 = vmatprep.subr.bf16.mxu0 0
        %4145 = vmatpush2.bf16.msra.mxu0 0
        %4146 = vmatprep.subr.bf16.mxu0 0
        %4147 = vmatpush2.bf16.msra.mxu0 0
        %4148 = vmatprep.mubr.bf16.mxu0 0
        %4149 = vmatmul.mubr.bf16.gmra.mxu0 %v3808
        %v4150 = vpop.f32.mrf.mxu0
        %v4151 = vadd.f32 %v4098, %v4150
        %v4152 = vpop.f32.mrf.mxu0
        %v4153 = vadd.f32 %v4100, %v4152
        %v4154 = vpop.f32.mrf.mxu0
        %v4155 = vadd.f32 %v4102, %v4154
        %v4156 = vpop.f32.mrf.mxu0
        %v4157 = vadd.f32 %v4104, %v4156
        %4158 = vmatprep.mubr.bf16.mxu0 0
        %4159 = vmatmul.mubr.bf16.gmra.mxu0 %v3811
        %v4160 = vpop.f32.mrf.mxu0
        %v4161 = vadd.f32 %v4108, %v4160
        %v4162 = vpop.f32.mrf.mxu0
        %v4163 = vadd.f32 %v4110, %v4162
        %v4164 = vpop.f32.mrf.mxu0
        %v4165 = vadd.f32 %v4112, %v4164
        %v4166 = vpop.f32.mrf.mxu0
        %v4167 = vadd.f32 %v4114, %v4166
        %4168 = vdwg.mxu0
        %v4169 = vxor.u32 %v4153, 2147483648
        %v4170 = vxor.u32 %v4157, 2147483648
        %v4171 = vxor.u32 %v4163, 2147483648
        %v4172 = vxor.u32 %v4167, 2147483648
        %v4173 = vmul.f32 %v4169, 1.442695
        %v4174 = vpow.pop %v4173
        %v4175 = vmul.f32 %v4170, 1.442695
        %v4176 = vpow.pop %v4175
        %v4177 = vmul.f32 %v4171, 1.442695
        %v4178 = vpow.pop %v4177
        %v4179 = vmul.f32 %v4172, 1.442695
        %v4180 = vpow.pop %v4179
        %v4181 = vadd.f32 %v4174, 1.0
        %v4182 = vadd.f32 %v4176, 1.0
        %v4183 = vadd.f32 %v4178, 1.0
        %v4184 = vadd.f32 %v4180, 1.0
        %v4185 = vrcp.pop %v4181
        %v4186 = vmul.f32 1.0, %v4185
        %v4187 = vrcp.pop %v4182
        %v4188 = vmul.f32 1.0, %v4187
        %v4189 = vrcp.pop %v4183
        %v4190 = vmul.f32 1.0, %v4189
        %v4191 = vrcp.pop %v4184
        %v4192 = vmul.f32 1.0, %v4191
        %v4193 = vsub.f32 %v4151, %v3741
        %v4194 = vsub.f32 %v4155, %v3742
        %v4195 = vsub.f32 %v4161, %v3743
        %v4196 = vsub.f32 %v4165, %v3744
        %v4197 = vmul.f32 %v4186, %v4193
        %v4198 = vmul.f32 %v4188, %v4194
        %v4199 = vmul.f32 %v4190, %v4195
        %v4200 = vmul.f32 %v4192, %v4196
        %v4201 = vadd.f32 %v3741, %v4197
        %v4202 = vadd.f32 %v3742, %v4198
        %v4203 = vadd.f32 %v3743, %v4199
        %v4204 = vadd.f32 %v3744, %v4200
        %v4205 = vld [vmem:[#allocation20] sm:$0xf]
        %v4206 = vld [vmem:[#allocation20 + $0x4] sm:$0xf]
        %v4207 = vld [vmem:[#allocation20 + $0x8] sm:$0xf]
        %v4208 = vld [vmem:[#allocation20 + $0xc] sm:$0xf]
        %v4209 = vld [vmem:[#allocation20 + $0x10] sm:$0xf]
        %v4210 = vld [vmem:[#allocation20 + $0x14] sm:$0xf]
        %v4211 = vld [vmem:[#allocation20 + $0x18] sm:$0xf]
        %v4212 = vld [vmem:[#allocation20 + $0x1c] sm:$0xf]
        %v4213 = vld [vmem:[#allocation20 + $0x20] sm:$0xf]
        %v4214 = vld [vmem:[#allocation20 + $0x24] sm:$0xf]
        %v4215 = vld [vmem:[#allocation20 + $0x28] sm:$0xf]
        %v4216 = vld [vmem:[#allocation20 + $0x2c] sm:$0xf]
        %v4217 = vld [vmem:[#allocation20 + $0x30] sm:$0xf]
        %v4218 = vld [vmem:[#allocation20 + $0x34] sm:$0xf]
        %v4219 = vld [vmem:[#allocation20 + $0x38] sm:$0xf]
        %v4220 = vld [vmem:[#allocation20 + $0x3c] sm:$0xf]
        %v4221 = vld [vmem:[%s41] sm:$0x1]
        %v4222 = vpack.c.bf16 %v4202, %v4201
        %v4223 = vpack.c.bf16 %v4204, %v4203
        %v4225 = vlaneseq
        %v4226 = vshrl.u32 %v4225, 7
        %v4227 = vsub.s32 0, %v4226
        %v4228 = vrot.slane %v4221, %v4227
        %v4246 = vunpack.c.l.b16 %v4205
        %v4247 = vunpack.c.l.b16 %v4206
        %v4248 = vunpack.c.l.b16 %v4207
        %v4249 = vunpack.c.l.b16 %v4208
        %v4250 = vunpack.c.l.b16 %v4209
        %v4251 = vunpack.c.l.b16 %v4210
        %v4252 = vunpack.c.l.b16 %v4211
        %v4253 = vunpack.c.l.b16 %v4212
        %v4254 = vunpack.c.l.b16 %v4213
        %v4255 = vunpack.c.l.b16 %v4214
        %v4256 = vunpack.c.l.b16 %v4215
        %v4257 = vunpack.c.l.b16 %v4216
        %v4258 = vunpack.c.l.b16 %v4217
        %v4259 = vunpack.c.l.b16 %v4218
        %v4260 = vunpack.c.l.b16 %v4219
        %v4261 = vunpack.c.l.b16 %v4220
        %v4262 = vpack.c.b16 %v4247, %v4246
        %v4263 = vpack.c.b16 %v4249, %v4248
        %v4264 = vpack.c.b16 %v4251, %v4250
        %v4265 = vpack.c.b16 %v4253, %v4252
        %v4266 = vpack.c.b16 %v4255, %v4254
        %v4267 = vpack.c.b16 %v4257, %v4256
        %v4268 = vpack.c.b16 %v4259, %v4258
        %v4269 = vpack.c.b16 %v4261, %v4260
        %4278 = vmatprep.subr.bf16.mxu0 0
        %4279 = vmatpush1.bf16.msra.mxu0 %v4269
        %4280 = vmatprep.subr.bf16.mxu0 0
        %4281 = vmatpush1.bf16.msra.mxu0 %v4268
        %4282 = vmatprep.subr.bf16.mxu0 0
        %4283 = vmatpush1.bf16.msra.mxu0 %v4267
        %4284 = vmatprep.subr.bf16.mxu0 0
        %4285 = vmatpush1.bf16.msra.mxu0 %v4266
        %4286 = vmatprep.subr.bf16.mxu0 0
        %4287 = vmatpush1.bf16.msra.mxu0 %v4265
        %4288 = vmatprep.subr.bf16.mxu0 0
        %4289 = vmatpush1.bf16.msra.mxu0 %v4264
        %4290 = vmatprep.subr.bf16.mxu0 0
        %4291 = vmatpush1.bf16.msra.mxu0 %v4263
        %4292 = vmatprep.subr.bf16.mxu0 0
        %4293 = vmatpush1.bf16.msra.mxu0 %v4262
        %4294 = vmatprep.subr.bf16.mxu0 0
        %4295 = vmatpush2.bf16.msra.mxu0 0
        %4296 = vmatprep.subr.bf16.mxu0 0
        %4297 = vmatpush2.bf16.msra.mxu0 0
        %4298 = vmatprep.subr.bf16.mxu0 0
        %4299 = vmatpush2.bf16.msra.mxu0 0
        %4300 = vmatprep.subr.bf16.mxu0 0
        %4301 = vmatpush2.bf16.msra.mxu0 0
        %4302 = vmatprep.subr.bf16.mxu0 0
        %4303 = vmatpush2.bf16.msra.mxu0 0
        %4304 = vmatprep.subr.bf16.mxu0 0
        %4305 = vmatpush2.bf16.msra.mxu0 0
        %4306 = vmatprep.subr.bf16.mxu0 0
        %4307 = vmatpush2.bf16.msra.mxu0 0
        %4308 = vmatprep.subr.bf16.mxu0 0
        %4309 = vmatpush2.bf16.msra.mxu0 0
        %4310 = vmatprep.mubr.bf16.mxu0 0
        %4311 = vmatmul.mubr.bf16.gmra.mxu0 %v4222
        %v4312 = vpop.f32.mrf.mxu0
        %v4313 = vadd.f32 %v4228, %v4312
        %v4314 = vpop.f32.mrf.mxu0
        %v4315 = vpop.f32.mrf.mxu0
        %v4316 = vadd.f32 %v4228, %v4315
        %v4317 = vpop.f32.mrf.mxu0
        %4318 = vmatprep.mubr.bf16.mxu0 0
        %4319 = vmatmul.mubr.bf16.gmra.mxu0 %v4223
        %v4320 = vpop.f32.mrf.mxu0
        %v4321 = vadd.f32 %v4228, %v4320
        %v4322 = vpop.f32.mrf.mxu0
        %v4323 = vpop.f32.mrf.mxu0
        %v4324 = vadd.f32 %v4228, %v4323
        %v4325 = vpop.f32.mrf.mxu0
        %4326 = vdwg.mxu0
        %v4327 = vld [vmem:[#allocation22] sm:$0xff]
        %v4328 = vld [vmem:[#allocation22 + $0x8] sm:$0xff]
        %v4329 = vld [vmem:[#allocation22 + $0x10] sm:$0xff]
        %v4330 = vld [vmem:[#allocation22 + $0x18] sm:$0xff]
        %v4331 = vld [vmem:[#allocation22 + $0x20] sm:$0xff]
        %v4332 = vld [vmem:[#allocation22 + $0x28] sm:$0xff]
        %v4333 = vld [vmem:[#allocation22 + $0x30] sm:$0xff]
        %v4334 = vld [vmem:[#allocation22 + $0x38] sm:$0xff]
        %v4335 = vld [vmem:[#allocation22 + $0x40] sm:$0xff]
        %v4336 = vld [vmem:[#allocation22 + $0x48] sm:$0xff]
        %v4337 = vld [vmem:[#allocation22 + $0x50] sm:$0xff]
        %v4338 = vld [vmem:[#allocation22 + $0x58] sm:$0xff]
        %v4339 = vld [vmem:[#allocation22 + $0x60] sm:$0xff]
        %v4340 = vld [vmem:[#allocation22 + $0x68] sm:$0xff]
        %v4341 = vld [vmem:[#allocation22 + $0x70] sm:$0xff]
        %v4342 = vld [vmem:[#allocation22 + $0x78] sm:$0xff]
        %v4343 = vld [vmem:[#allocation22 + $0x80] sm:$0xff]
        %v4344 = vld [vmem:[#allocation22 + $0x88] sm:$0xff]
        %v4345 = vld [vmem:[#allocation22 + $0x90] sm:$0xff]
        %v4346 = vld [vmem:[#allocation22 + $0x98] sm:$0xff]
        %v4347 = vld [vmem:[#allocation22 + $0xa0] sm:$0xff]
        %v4348 = vld [vmem:[#allocation22 + $0xa8] sm:$0xff]
        %v4349 = vld [vmem:[#allocation22 + $0xb0] sm:$0xff]
        %v4350 = vld [vmem:[#allocation22 + $0xb8] sm:$0xff]
        %v4351 = vld [vmem:[#allocation22 + $0xc0] sm:$0xff]
        %v4352 = vld [vmem:[#allocation22 + $0xc8] sm:$0xff]
        %v4353 = vld [vmem:[#allocation22 + $0xd0] sm:$0xff]
        %v4354 = vld [vmem:[#allocation22 + $0xd8] sm:$0xff]
        %v4355 = vld [vmem:[#allocation22 + $0xe0] sm:$0xff]
        %v4356 = vld [vmem:[#allocation22 + $0xe8] sm:$0xff]
        %v4357 = vld [vmem:[#allocation22 + $0xf0] sm:$0xff]
        %v4358 = vld [vmem:[#allocation22 + $0xf8] sm:$0xff]
        %v4359 = vld [vmem:[#allocation22 + $0x100] sm:$0xff]
        %v4360 = vld [vmem:[#allocation22 + $0x108] sm:$0xff]
        %v4361 = vld [vmem:[#allocation22 + $0x110] sm:$0xff]
        %v4362 = vld [vmem:[#allocation22 + $0x118] sm:$0xff]
        %v4363 = vld [vmem:[#allocation22 + $0x120] sm:$0xff]
        %v4364 = vld [vmem:[#allocation22 + $0x128] sm:$0xff]
        %v4365 = vld [vmem:[#allocation22 + $0x130] sm:$0xff]
        %v4366 = vld [vmem:[#allocation22 + $0x138] sm:$0xff]
        %v4367 = vld [vmem:[#allocation22 + $0x140] sm:$0xff]
        %v4368 = vld [vmem:[#allocation22 + $0x148] sm:$0xff]
        %v4369 = vld [vmem:[#allocation22 + $0x150] sm:$0xff]
        %v4370 = vld [vmem:[#allocation22 + $0x158] sm:$0xff]
        %v4371 = vld [vmem:[#allocation22 + $0x160] sm:$0xff]
        %v4372 = vld [vmem:[#allocation22 + $0x168] sm:$0xff]
        %v4373 = vld [vmem:[#allocation22 + $0x170] sm:$0xff]
        %v4374 = vld [vmem:[#allocation22 + $0x178] sm:$0xff]
        %v4375 = vld [vmem:[%s45] sm:$0x3]
        %4376 = vst [vmem:[#allocation2 + $0x8] sm:$0xff] %v4313
        %4377 = vst [vmem:[#allocation2 + $0x10] sm:$0xff] %v4316
        %4378 = vst [vmem:[#allocation2 + $0x18] sm:$0xff] %v4321
        %4379 = vst [vmem:[#allocation2 + $0x20] sm:$0xff] %v4324
        %v4380 = vld [vmem:[#allocation2 + $0x7] sm:$0xff]
        %v4381 = vld [vmem:[#allocation2 + $0xf] sm:$0xff]
        %v4382 = vld [vmem:[#allocation2 + $0x17] sm:$0xff]
        %v4383 = vld [vmem:[#allocation2 + $0x1f] sm:$0xff]
        %v4384 = vld [vmem:[#allocation2 + $0x9] sm:$0xff]
        %v4385 = vld [vmem:[#allocation2 + $0x11] sm:$0xff]
        %v4386 = vld [vmem:[#allocation2 + $0x19] sm:$0xff]
        %v4387 = vld [vmem:[#allocation2 + $0x21] sm:$0xff]
        %v4388 = vpack.c.bf16 %v4381, %v4380
        %v4389 = vpack.c.bf16 %v4316, %v4313
        %v4390 = vpack.c.bf16 %v4385, %v4384
        %v4391 = vpack.c.bf16 %v4383, %v4382
        %v4392 = vpack.c.bf16 %v4324, %v4321
        %v4393 = vpack.c.bf16 %v4387, %v4386
        %v4395 = vlaneseq
        %v4396 = vshrl.u32 %v4395, 7
        %v4397 = vsub.s32 0, %v4396
        %v4398 = vrot.slane %v4375, %v4397
        %v4399 = vlaneseq
        %v4400 = vshrl.u32 %v4399, 7
        %v4401 = vsub.s32 1, %v4400
        %v4402 = vrot.slane %v4375, %v4401
        %v4453 = vunpack.c.l.b16 %v4327
        %v4454 = vunpack.c.h.b16 %v4327
        %v4455 = vunpack.c.l.b16 %v4328
        %v4456 = vunpack.c.h.b16 %v4328
        %v4457 = vunpack.c.l.b16 %v4329
        %v4458 = vunpack.c.h.b16 %v4329
        %v4459 = vunpack.c.l.b16 %v4330
        %v4460 = vunpack.c.h.b16 %v4330
        %v4461 = vunpack.c.l.b16 %v4331
        %v4462 = vunpack.c.h.b16 %v4331
        %v4463 = vunpack.c.l.b16 %v4332
        %v4464 = vunpack.c.h.b16 %v4332
        %v4465 = vunpack.c.l.b16 %v4333
        %v4466 = vunpack.c.h.b16 %v4333
        %v4467 = vunpack.c.l.b16 %v4334
        %v4468 = vunpack.c.h.b16 %v4334
        %v4469 = vunpack.c.l.b16 %v4335
        %v4470 = vunpack.c.h.b16 %v4335
        %v4471 = vunpack.c.l.b16 %v4336
        %v4472 = vunpack.c.h.b16 %v4336
        %v4473 = vunpack.c.l.b16 %v4337
        %v4474 = vunpack.c.h.b16 %v4337
        %v4475 = vunpack.c.l.b16 %v4338
        %v4476 = vunpack.c.h.b16 %v4338
        %v4477 = vunpack.c.l.b16 %v4339
        %v4478 = vunpack.c.h.b16 %v4339
        %v4479 = vunpack.c.l.b16 %v4340
        %v4480 = vunpack.c.h.b16 %v4340
        %v4481 = vunpack.c.l.b16 %v4341
        %v4482 = vunpack.c.h.b16 %v4341
        %v4483 = vunpack.c.l.b16 %v4342
        %v4484 = vunpack.c.h.b16 %v4342
        %v4485 = vunpack.c.l.b16 %v4343
        %v4486 = vunpack.c.h.b16 %v4343
        %v4487 = vunpack.c.l.b16 %v4344
        %v4488 = vunpack.c.h.b16 %v4344
        %v4489 = vunpack.c.l.b16 %v4345
        %v4490 = vunpack.c.h.b16 %v4345
        %v4491 = vunpack.c.l.b16 %v4346
        %v4492 = vunpack.c.h.b16 %v4346
        %v4493 = vunpack.c.l.b16 %v4347
        %v4494 = vunpack.c.h.b16 %v4347
        %v4495 = vunpack.c.l.b16 %v4348
        %v4496 = vunpack.c.h.b16 %v4348
        %v4497 = vunpack.c.l.b16 %v4349
        %v4498 = vunpack.c.h.b16 %v4349
        %v4499 = vunpack.c.l.b16 %v4350
        %v4500 = vunpack.c.h.b16 %v4350
        %v4501 = vunpack.c.l.b16 %v4351
        %v4502 = vunpack.c.h.b16 %v4351
        %v4503 = vunpack.c.l.b16 %v4352
        %v4504 = vunpack.c.h.b16 %v4352
        %v4505 = vunpack.c.l.b16 %v4353
        %v4506 = vunpack.c.h.b16 %v4353
        %v4507 = vunpack.c.l.b16 %v4354
        %v4508 = vunpack.c.h.b16 %v4354
        %v4509 = vunpack.c.l.b16 %v4355
        %v4510 = vunpack.c.h.b16 %v4355
        %v4511 = vunpack.c.l.b16 %v4356
        %v4512 = vunpack.c.h.b16 %v4356
        %v4513 = vunpack.c.l.b16 %v4357
        %v4514 = vunpack.c.h.b16 %v4357
        %v4515 = vunpack.c.l.b16 %v4358
        %v4516 = vunpack.c.h.b16 %v4358
        %v4517 = vunpack.c.l.b16 %v4359
        %v4518 = vunpack.c.h.b16 %v4359
        %v4519 = vunpack.c.l.b16 %v4360
        %v4520 = vunpack.c.h.b16 %v4360
        %v4521 = vunpack.c.l.b16 %v4361
        %v4522 = vunpack.c.h.b16 %v4361
        %v4523 = vunpack.c.l.b16 %v4362
        %v4524 = vunpack.c.h.b16 %v4362
        %v4525 = vunpack.c.l.b16 %v4363
        %v4526 = vunpack.c.h.b16 %v4363
        %v4527 = vunpack.c.l.b16 %v4364
        %v4528 = vunpack.c.h.b16 %v4364
        %v4529 = vunpack.c.l.b16 %v4365
        %v4530 = vunpack.c.h.b16 %v4365
        %v4531 = vunpack.c.l.b16 %v4366
        %v4532 = vunpack.c.h.b16 %v4366
        %v4533 = vunpack.c.l.b16 %v4367
        %v4534 = vunpack.c.h.b16 %v4367
        %v4535 = vunpack.c.l.b16 %v4368
        %v4536 = vunpack.c.h.b16 %v4368
        %v4537 = vunpack.c.l.b16 %v4369
        %v4538 = vunpack.c.h.b16 %v4369
        %v4539 = vunpack.c.l.b16 %v4370
        %v4540 = vunpack.c.h.b16 %v4370
        %v4541 = vunpack.c.l.b16 %v4371
        %v4542 = vunpack.c.h.b16 %v4371
        %v4543 = vunpack.c.l.b16 %v4372
        %v4544 = vunpack.c.h.b16 %v4372
        %v4545 = vunpack.c.l.b16 %v4373
        %v4546 = vunpack.c.h.b16 %v4373
        %v4547 = vunpack.c.l.b16 %v4374
        %v4548 = vunpack.c.h.b16 %v4374
        %v4549 = vpack.c.b16 %v4455, %v4453
        %v4550 = vpack.c.b16 %v4456, %v4454
        %v4551 = vpack.c.b16 %v4459, %v4457
        %v4552 = vpack.c.b16 %v4460, %v4458
        %v4553 = vpack.c.b16 %v4463, %v4461
        %v4554 = vpack.c.b16 %v4464, %v4462
        %v4555 = vpack.c.b16 %v4467, %v4465
        %v4556 = vpack.c.b16 %v4468, %v4466
        %v4557 = vpack.c.b16 %v4471, %v4469
        %v4558 = vpack.c.b16 %v4472, %v4470
        %v4559 = vpack.c.b16 %v4475, %v4473
        %v4560 = vpack.c.b16 %v4476, %v4474
        %v4561 = vpack.c.b16 %v4479, %v4477
        %v4562 = vpack.c.b16 %v4480, %v4478
        %v4563 = vpack.c.b16 %v4483, %v4481
        %v4564 = vpack.c.b16 %v4484, %v4482
        %v4565 = vpack.c.b16 %v4487, %v4485
        %v4566 = vpack.c.b16 %v4488, %v4486
        %v4567 = vpack.c.b16 %v4491, %v4489
        %v4568 = vpack.c.b16 %v4492, %v4490
        %v4569 = vpack.c.b16 %v4495, %v4493
        %v4570 = vpack.c.b16 %v4496, %v4494
        %v4571 = vpack.c.b16 %v4499, %v4497
        %v4572 = vpack.c.b16 %v4500, %v4498
        %v4573 = vpack.c.b16 %v4503, %v4501
        %v4574 = vpack.c.b16 %v4504, %v4502
        %v4575 = vpack.c.b16 %v4507, %v4505
        %v4576 = vpack.c.b16 %v4508, %v4506
        %v4577 = vpack.c.b16 %v4511, %v4509
        %v4578 = vpack.c.b16 %v4512, %v4510
        %v4579 = vpack.c.b16 %v4515, %v4513
        %v4580 = vpack.c.b16 %v4516, %v4514
        %v4581 = vpack.c.b16 %v4519, %v4517
        %v4582 = vpack.c.b16 %v4520, %v4518
        %v4583 = vpack.c.b16 %v4523, %v4521
        %v4584 = vpack.c.b16 %v4524, %v4522
        %v4585 = vpack.c.b16 %v4527, %v4525
        %v4586 = vpack.c.b16 %v4528, %v4526
        %v4587 = vpack.c.b16 %v4531, %v4529
        %v4588 = vpack.c.b16 %v4532, %v4530
        %v4589 = vpack.c.b16 %v4535, %v4533
        %v4590 = vpack.c.b16 %v4536, %v4534
        %v4591 = vpack.c.b16 %v4539, %v4537
        %v4592 = vpack.c.b16 %v4540, %v4538
        %v4593 = vpack.c.b16 %v4543, %v4541
        %v4594 = vpack.c.b16 %v4544, %v4542
        %v4595 = vpack.c.b16 %v4547, %v4545
        %v4596 = vpack.c.b16 %v4548, %v4546
        %4645 = vmatprep.subr.bf16.mxu0 %v4564
        %4646 = vmatpush1.bf16.msra.mxu0 %v4563
        %4647 = vmatprep.subr.bf16.mxu0 %v4562
        %4648 = vmatpush1.bf16.msra.mxu0 %v4561
        %4649 = vmatprep.subr.bf16.mxu0 %v4560
        %4650 = vmatpush1.bf16.msra.mxu0 %v4559
        %4651 = vmatprep.subr.bf16.mxu0 %v4558
        %4652 = vmatpush1.bf16.msra.mxu0 %v4557
        %4653 = vmatprep.subr.bf16.mxu0 %v4556
        %4654 = vmatpush1.bf16.msra.mxu0 %v4555
        %4655 = vmatprep.subr.bf16.mxu0 %v4554
        %4656 = vmatpush1.bf16.msra.mxu0 %v4553
        %4657 = vmatprep.subr.bf16.mxu0 %v4552
        %4658 = vmatpush1.bf16.msra.mxu0 %v4551
        %4659 = vmatprep.subr.bf16.mxu0 %v4550
        %4660 = vmatpush1.bf16.msra.mxu0 %v4549
        %4661 = vmatprep.subr.bf16.mxu0 %v4580
        %4662 = vmatpush2.bf16.msra.mxu0 %v4579
        %4663 = vmatprep.subr.bf16.mxu0 %v4578
        %4664 = vmatpush2.bf16.msra.mxu0 %v4577
        %4665 = vmatprep.subr.bf16.mxu0 %v4576
        %4666 = vmatpush2.bf16.msra.mxu0 %v4575
        %4667 = vmatprep.subr.bf16.mxu0 %v4574
        %4668 = vmatpush2.bf16.msra.mxu0 %v4573
        %4669 = vmatprep.subr.bf16.mxu0 %v4572
        %4670 = vmatpush2.bf16.msra.mxu0 %v4571
        %4671 = vmatprep.subr.bf16.mxu0 %v4570
        %4672 = vmatpush2.bf16.msra.mxu0 %v4569
        %4673 = vmatprep.subr.bf16.mxu0 %v4568
        %4674 = vmatpush2.bf16.msra.mxu0 %v4567
        %4675 = vmatprep.subr.bf16.mxu0 %v4566
        %4676 = vmatpush2.bf16.msra.mxu0 %v4565
        %4677 = vmatprep.mubr.bf16.mxu0 %v4389
        %4678 = vmatmul.mubr.bf16.gmra.mxu0 %v4388
        %v4679 = vpop.f32.mrf.mxu0
        %v4680 = vadd.f32 %v4398, %v4679
        %v4681 = vpop.f32.mrf.mxu0
        %v4682 = vadd.f32 %v4402, %v4681
        %v4683 = vpop.f32.mrf.mxu0
        %v4684 = vadd.f32 %v4398, %v4683
        %v4685 = vpop.f32.mrf.mxu0
        %v4686 = vadd.f32 %v4402, %v4685
        %4687 = vmatprep.mubr.bf16.mxu0 %v4392
        %4688 = vmatmul.mubr.bf16.gmra.mxu0 %v4391
        %v4689 = vpop.f32.mrf.mxu0
        %v4690 = vadd.f32 %v4398, %v4689
        %v4691 = vpop.f32.mrf.mxu0
        %v4692 = vadd.f32 %v4402, %v4691
        %v4693 = vpop.f32.mrf.mxu0
        %v4694 = vadd.f32 %v4398, %v4693
        %v4695 = vpop.f32.mrf.mxu0
        %v4696 = vadd.f32 %v4402, %v4695
        %4697 = vdwg.mxu0
        %4698 = vmatprep.subr.bf16.mxu0 %v4596
        %4699 = vmatpush1.bf16.msra.mxu0 %v4595
        %4700 = vmatprep.subr.bf16.mxu0 %v4594
        %4701 = vmatpush1.bf16.msra.mxu0 %v4593
        %4702 = vmatprep.subr.bf16.mxu0 %v4592
        %4703 = vmatpush1.bf16.msra.mxu0 %v4591
        %4704 = vmatprep.subr.bf16.mxu0 %v4590
        %4705 = vmatpush1.bf16.msra.mxu0 %v4589
        %4706 = vmatprep.subr.bf16.mxu0 %v4588
        %4707 = vmatpush1.bf16.msra.mxu0 %v4587
        %4708 = vmatprep.subr.bf16.mxu0 %v4586
        %4709 = vmatpush1.bf16.msra.mxu0 %v4585
        %4710 = vmatprep.subr.bf16.mxu0 %v4584
        %4711 = vmatpush1.bf16.msra.mxu0 %v4583
        %4712 = vmatprep.subr.bf16.mxu0 %v4582
        %4713 = vmatpush1.bf16.msra.mxu0 %v4581
        %4714 = vmatprep.subr.bf16.mxu0 0
        %4715 = vmatpush2.bf16.msra.mxu0 0
        %4716 = vmatprep.subr.bf16.mxu0 0
        %4717 = vmatpush2.bf16.msra.mxu0 0
        %4718 = vmatprep.subr.bf16.mxu0 0
        %4719 = vmatpush2.bf16.msra.mxu0 0
        %4720 = vmatprep.subr.bf16.mxu0 0
        %4721 = vmatpush2.bf16.msra.mxu0 0
        %4722 = vmatprep.subr.bf16.mxu0 0
        %4723 = vmatpush2.bf16.msra.mxu0 0
        %4724 = vmatprep.subr.bf16.mxu0 0
        %4725 = vmatpush2.bf16.msra.mxu0 0
        %4726 = vmatprep.subr.bf16.mxu0 0
        %4727 = vmatpush2.bf16.msra.mxu0 0
        %4728 = vmatprep.subr.bf16.mxu0 0
        %4729 = vmatpush2.bf16.msra.mxu0 0
        %4730 = vmatprep.mubr.bf16.mxu0 0
        %4731 = vmatmul.mubr.bf16.gmra.mxu0 %v4390
        %v4732 = vpop.f32.mrf.mxu0
        %v4733 = vadd.f32 %v4680, %v4732
        %v4734 = vpop.f32.mrf.mxu0
        %v4735 = vadd.f32 %v4682, %v4734
        %v4736 = vpop.f32.mrf.mxu0
        %v4737 = vadd.f32 %v4684, %v4736
        %v4738 = vpop.f32.mrf.mxu0
        %v4739 = vadd.f32 %v4686, %v4738
        %4740 = vmatprep.mubr.bf16.mxu0 0
        %4741 = vmatmul.mubr.bf16.gmra.mxu0 %v4393
        %v4742 = vpop.f32.mrf.mxu0
        %v4743 = vadd.f32 %v4690, %v4742
        %v4744 = vpop.f32.mrf.mxu0
        %v4745 = vadd.f32 %v4692, %v4744
        %v4746 = vpop.f32.mrf.mxu0
        %v4747 = vadd.f32 %v4694, %v4746
        %v4748 = vpop.f32.mrf.mxu0
        %v4749 = vadd.f32 %v4696, %v4748
        %4750 = vdwg.mxu0
        %v4751 = vxor.u32 %v4735, 2147483648
        %v4752 = vxor.u32 %v4739, 2147483648
        %v4753 = vxor.u32 %v4745, 2147483648
        %v4754 = vxor.u32 %v4749, 2147483648
        %v4755 = vmul.f32 %v4751, 1.442695
        %v4756 = vpow.pop %v4755
        %v4757 = vmul.f32 %v4752, 1.442695
        %v4758 = vpow.pop %v4757
        %v4759 = vmul.f32 %v4753, 1.442695
        %v4760 = vpow.pop %v4759
        %v4761 = vmul.f32 %v4754, 1.442695
        %v4762 = vpow.pop %v4761
        %v4763 = vadd.f32 %v4756, 1.0
        %v4764 = vadd.f32 %v4758, 1.0
        %v4765 = vadd.f32 %v4760, 1.0
        %v4766 = vadd.f32 %v4762, 1.0
        %v4767 = vrcp.pop %v4763
        %v4768 = vmul.f32 1.0, %v4767
        %v4769 = vrcp.pop %v4764
        %v4770 = vmul.f32 1.0, %v4769
        %v4771 = vrcp.pop %v4765
        %v4772 = vmul.f32 1.0, %v4771
        %v4773 = vrcp.pop %v4766
        %v4774 = vmul.f32 1.0, %v4773
        %v4775 = vsub.f32 %v4733, %v4313
        %v4776 = vsub.f32 %v4737, %v4316
        %v4777 = vsub.f32 %v4743, %v4321
        %v4778 = vsub.f32 %v4747, %v4324
        %v4779 = vmul.f32 %v4768, %v4775
        %v4780 = vmul.f32 %v4770, %v4776
        %v4781 = vmul.f32 %v4772, %v4777
        %v4782 = vmul.f32 %v4774, %v4778
        %v4783 = vadd.f32 %v4313, %v4779
        %v4784 = vadd.f32 %v4316, %v4780
        %v4785 = vadd.f32 %v4321, %v4781
        %v4786 = vadd.f32 %v4324, %v4782
        %v4787 = vld [vmem:[#allocation23] sm:$0xff]
        %v4788 = vld [vmem:[#allocation23 + $0x8] sm:$0xff]
        %v4789 = vld [vmem:[#allocation23 + $0x10] sm:$0xff]
        %v4790 = vld [vmem:[#allocation23 + $0x18] sm:$0xff]
        %v4791 = vld [vmem:[#allocation23 + $0x20] sm:$0xff]
        %v4792 = vld [vmem:[#allocation23 + $0x28] sm:$0xff]
        %v4793 = vld [vmem:[#allocation23 + $0x30] sm:$0xff]
        %v4794 = vld [vmem:[#allocation23 + $0x38] sm:$0xff]
        %v4795 = vld [vmem:[#allocation23 + $0x40] sm:$0xff]
        %v4796 = vld [vmem:[#allocation23 + $0x48] sm:$0xff]
        %v4797 = vld [vmem:[#allocation23 + $0x50] sm:$0xff]
        %v4798 = vld [vmem:[#allocation23 + $0x58] sm:$0xff]
        %v4799 = vld [vmem:[#allocation23 + $0x60] sm:$0xff]
        %v4800 = vld [vmem:[#allocation23 + $0x68] sm:$0xff]
        %v4801 = vld [vmem:[#allocation23 + $0x70] sm:$0xff]
        %v4802 = vld [vmem:[#allocation23 + $0x78] sm:$0xff]
        %v4803 = vld [vmem:[#allocation23 + $0x80] sm:$0xff]
        %v4804 = vld [vmem:[#allocation23 + $0x88] sm:$0xff]
        %v4805 = vld [vmem:[#allocation23 + $0x90] sm:$0xff]
        %v4806 = vld [vmem:[#allocation23 + $0x98] sm:$0xff]
        %v4807 = vld [vmem:[#allocation23 + $0xa0] sm:$0xff]
        %v4808 = vld [vmem:[#allocation23 + $0xa8] sm:$0xff]
        %v4809 = vld [vmem:[#allocation23 + $0xb0] sm:$0xff]
        %v4810 = vld [vmem:[#allocation23 + $0xb8] sm:$0xff]
        %v4811 = vld [vmem:[#allocation23 + $0xc0] sm:$0xff]
        %v4812 = vld [vmem:[#allocation23 + $0xc8] sm:$0xff]
        %v4813 = vld [vmem:[#allocation23 + $0xd0] sm:$0xff]
        %v4814 = vld [vmem:[#allocation23 + $0xd8] sm:$0xff]
        %v4815 = vld [vmem:[#allocation23 + $0xe0] sm:$0xff]
        %v4816 = vld [vmem:[#allocation23 + $0xe8] sm:$0xff]
        %v4817 = vld [vmem:[#allocation23 + $0xf0] sm:$0xff]
        %v4818 = vld [vmem:[#allocation23 + $0xf8] sm:$0xff]
        %v4819 = vld [vmem:[#allocation23 + $0x100] sm:$0xff]
        %v4820 = vld [vmem:[#allocation23 + $0x108] sm:$0xff]
        %v4821 = vld [vmem:[#allocation23 + $0x110] sm:$0xff]
        %v4822 = vld [vmem:[#allocation23 + $0x118] sm:$0xff]
        %v4823 = vld [vmem:[#allocation23 + $0x120] sm:$0xff]
        %v4824 = vld [vmem:[#allocation23 + $0x128] sm:$0xff]
        %v4825 = vld [vmem:[#allocation23 + $0x130] sm:$0xff]
        %v4826 = vld [vmem:[#allocation23 + $0x138] sm:$0xff]
        %v4827 = vld [vmem:[#allocation23 + $0x140] sm:$0xff]
        %v4828 = vld [vmem:[#allocation23 + $0x148] sm:$0xff]
        %v4829 = vld [vmem:[#allocation23 + $0x150] sm:$0xff]
        %v4830 = vld [vmem:[#allocation23 + $0x158] sm:$0xff]
        %v4831 = vld [vmem:[#allocation23 + $0x160] sm:$0xff]
        %v4832 = vld [vmem:[#allocation23 + $0x168] sm:$0xff]
        %v4833 = vld [vmem:[#allocation23 + $0x170] sm:$0xff]
        %v4834 = vld [vmem:[#allocation23 + $0x178] sm:$0xff]
        %v4835 = vld [vmem:[%s49] sm:$0x3]
        %4836 = vst [vmem:[#allocation2 + $0x8] sm:$0xff] %v4783
        %4837 = vst [vmem:[#allocation2 + $0x10] sm:$0xff] %v4784
        %4838 = vst [vmem:[#allocation2 + $0x18] sm:$0xff] %v4785
        %4839 = vst [vmem:[#allocation2 + $0x20] sm:$0xff] %v4786
        %v4840 = vld [vmem:[#allocation2 + $0x7] sm:$0xff]
        %v4841 = vld [vmem:[#allocation2 + $0xf] sm:$0xff]
        %v4842 = vld [vmem:[#allocation2 + $0x17] sm:$0xff]
        %v4843 = vld [vmem:[#allocation2 + $0x1f] sm:$0xff]
        %v4844 = vld [vmem:[#allocation2 + $0x9] sm:$0xff]
        %v4845 = vld [vmem:[#allocation2 + $0x11] sm:$0xff]
        %v4846 = vld [vmem:[#allocation2 + $0x19] sm:$0xff]
        %v4847 = vld [vmem:[#allocation2 + $0x21] sm:$0xff]
        %v4848 = vpack.c.bf16 %v4841, %v4840
        %v4849 = vpack.c.bf16 %v4784, %v4783
        %v4850 = vpack.c.bf16 %v4845, %v4844
        %v4851 = vpack.c.bf16 %v4843, %v4842
        %v4852 = vpack.c.bf16 %v4786, %v4785
        %v4853 = vpack.c.bf16 %v4847, %v4846
        %v4855 = vlaneseq
        %v4856 = vshrl.u32 %v4855, 7
        %v4857 = vsub.s32 0, %v4856
        %v4858 = vrot.slane %v4835, %v4857
        %v4859 = vlaneseq
        %v4860 = vshrl.u32 %v4859, 7
        %v4861 = vsub.s32 1, %v4860
        %v4862 = vrot.slane %v4835, %v4861
        %v4913 = vunpack.c.l.b16 %v4787
        %v4914 = vunpack.c.h.b16 %v4787
        %v4915 = vunpack.c.l.b16 %v4788
        %v4916 = vunpack.c.h.b16 %v4788
        %v4917 = vunpack.c.l.b16 %v4789
        %v4918 = vunpack.c.h.b16 %v4789
        %v4919 = vunpack.c.l.b16 %v4790
        %v4920 = vunpack.c.h.b16 %v4790
        %v4921 = vunpack.c.l.b16 %v4791
        %v4922 = vunpack.c.h.b16 %v4791
        %v4923 = vunpack.c.l.b16 %v4792
        %v4924 = vunpack.c.h.b16 %v4792
        %v4925 = vunpack.c.l.b16 %v4793
        %v4926 = vunpack.c.h.b16 %v4793
        %v4927 = vunpack.c.l.b16 %v4794
        %v4928 = vunpack.c.h.b16 %v4794
        %v4929 = vunpack.c.l.b16 %v4795
        %v4930 = vunpack.c.h.b16 %v4795
        %v4931 = vunpack.c.l.b16 %v4796
        %v4932 = vunpack.c.h.b16 %v4796
        %v4933 = vunpack.c.l.b16 %v4797
        %v4934 = vunpack.c.h.b16 %v4797
        %v4935 = vunpack.c.l.b16 %v4798
        %v4936 = vunpack.c.h.b16 %v4798
        %v4937 = vunpack.c.l.b16 %v4799
        %v4938 = vunpack.c.h.b16 %v4799
        %v4939 = vunpack.c.l.b16 %v4800
        %v4940 = vunpack.c.h.b16 %v4800
        %v4941 = vunpack.c.l.b16 %v4801
        %v4942 = vunpack.c.h.b16 %v4801
        %v4943 = vunpack.c.l.b16 %v4802
        %v4944 = vunpack.c.h.b16 %v4802
        %v4945 = vunpack.c.l.b16 %v4803
        %v4946 = vunpack.c.h.b16 %v4803
        %v4947 = vunpack.c.l.b16 %v4804
        %v4948 = vunpack.c.h.b16 %v4804
        %v4949 = vunpack.c.l.b16 %v4805
        %v4950 = vunpack.c.h.b16 %v4805
        %v4951 = vunpack.c.l.b16 %v4806
        %v4952 = vunpack.c.h.b16 %v4806
        %v4953 = vunpack.c.l.b16 %v4807
        %v4954 = vunpack.c.h.b16 %v4807
        %v4955 = vunpack.c.l.b16 %v4808
        %v4956 = vunpack.c.h.b16 %v4808
        %v4957 = vunpack.c.l.b16 %v4809
        %v4958 = vunpack.c.h.b16 %v4809
        %v4959 = vunpack.c.l.b16 %v4810
        %v4960 = vunpack.c.h.b16 %v4810
        %v4961 = vunpack.c.l.b16 %v4811
        %v4962 = vunpack.c.h.b16 %v4811
        %v4963 = vunpack.c.l.b16 %v4812
        %v4964 = vunpack.c.h.b16 %v4812
        %v4965 = vunpack.c.l.b16 %v4813
        %v4966 = vunpack.c.h.b16 %v4813
        %v4967 = vunpack.c.l.b16 %v4814
        %v4968 = vunpack.c.h.b16 %v4814
        %v4969 = vunpack.c.l.b16 %v4815
        %v4970 = vunpack.c.h.b16 %v4815
        %v4971 = vunpack.c.l.b16 %v4816
        %v4972 = vunpack.c.h.b16 %v4816
        %v4973 = vunpack.c.l.b16 %v4817
        %v4974 = vunpack.c.h.b16 %v4817
        %v4975 = vunpack.c.l.b16 %v4818
        %v4976 = vunpack.c.h.b16 %v4818
        %v4977 = vunpack.c.l.b16 %v4819
        %v4978 = vunpack.c.h.b16 %v4819
        %v4979 = vunpack.c.l.b16 %v4820
        %v4980 = vunpack.c.h.b16 %v4820
        %v4981 = vunpack.c.l.b16 %v4821
        %v4982 = vunpack.c.h.b16 %v4821
        %v4983 = vunpack.c.l.b16 %v4822
        %v4984 = vunpack.c.h.b16 %v4822
        %v4985 = vunpack.c.l.b16 %v4823
        %v4986 = vunpack.c.h.b16 %v4823
        %v4987 = vunpack.c.l.b16 %v4824
        %v4988 = vunpack.c.h.b16 %v4824
        %v4989 = vunpack.c.l.b16 %v4825
        %v4990 = vunpack.c.h.b16 %v4825
        %v4991 = vunpack.c.l.b16 %v4826
        %v4992 = vunpack.c.h.b16 %v4826
        %v4993 = vunpack.c.l.b16 %v4827
        %v4994 = vunpack.c.h.b16 %v4827
        %v4995 = vunpack.c.l.b16 %v4828
        %v4996 = vunpack.c.h.b16 %v4828
        %v4997 = vunpack.c.l.b16 %v4829
        %v4998 = vunpack.c.h.b16 %v4829
        %v4999 = vunpack.c.l.b16 %v4830
        %v5000 = vunpack.c.h.b16 %v4830
        %v5001 = vunpack.c.l.b16 %v4831
        %v5002 = vunpack.c.h.b16 %v4831
        %v5003 = vunpack.c.l.b16 %v4832
        %v5004 = vunpack.c.h.b16 %v4832
        %v5005 = vunpack.c.l.b16 %v4833
        %v5006 = vunpack.c.h.b16 %v4833
        %v5007 = vunpack.c.l.b16 %v4834
        %v5008 = vunpack.c.h.b16 %v4834
        %v5009 = vpack.c.b16 %v4915, %v4913
        %v5010 = vpack.c.b16 %v4916, %v4914
        %v5011 = vpack.c.b16 %v4919, %v4917
        %v5012 = vpack.c.b16 %v4920, %v4918
        %v5013 = vpack.c.b16 %v4923, %v4921
        %v5014 = vpack.c.b16 %v4924, %v4922
        %v5015 = vpack.c.b16 %v4927, %v4925
        %v5016 = vpack.c.b16 %v4928, %v4926
        %v5017 = vpack.c.b16 %v4931, %v4929
        %v5018 = vpack.c.b16 %v4932, %v4930
        %v5019 = vpack.c.b16 %v4935, %v4933
        %v5020 = vpack.c.b16 %v4936, %v4934
        %v5021 = vpack.c.b16 %v4939, %v4937
        %v5022 = vpack.c.b16 %v4940, %v4938
        %v5023 = vpack.c.b16 %v4943, %v4941
        %v5024 = vpack.c.b16 %v4944, %v4942
        %v5025 = vpack.c.b16 %v4947, %v4945
        %v5026 = vpack.c.b16 %v4948, %v4946
        %v5027 = vpack.c.b16 %v4951, %v4949
        %v5028 = vpack.c.b16 %v4952, %v4950
        %v5029 = vpack.c.b16 %v4955, %v4953
        %v5030 = vpack.c.b16 %v4956, %v4954
        %v5031 = vpack.c.b16 %v4959, %v4957
        %v5032 = vpack.c.b16 %v4960, %v4958
        %v5033 = vpack.c.b16 %v4963, %v4961
        %v5034 = vpack.c.b16 %v4964, %v4962
        %v5035 = vpack.c.b16 %v4967, %v4965
        %v5036 = vpack.c.b16 %v4968, %v4966
        %v5037 = vpack.c.b16 %v4971, %v4969
        %v5038 = vpack.c.b16 %v4972, %v4970
        %v5039 = vpack.c.b16 %v4975, %v4973
        %v5040 = vpack.c.b16 %v4976, %v4974
        %v5041 = vpack.c.b16 %v4979, %v4977
        %v5042 = vpack.c.b16 %v4980, %v4978
        %v5043 = vpack.c.b16 %v4983, %v4981
        %v5044 = vpack.c.b16 %v4984, %v4982
        %v5045 = vpack.c.b16 %v4987, %v4985
        %v5046 = vpack.c.b16 %v4988, %v4986
        %v5047 = vpack.c.b16 %v4991, %v4989
        %v5048 = vpack.c.b16 %v4992, %v4990
        %v5049 = vpack.c.b16 %v4995, %v4993
        %v5050 = vpack.c.b16 %v4996, %v4994
        %v5051 = vpack.c.b16 %v4999, %v4997
        %v5052 = vpack.c.b16 %v5000, %v4998
        %v5053 = vpack.c.b16 %v5003, %v5001
        %v5054 = vpack.c.b16 %v5004, %v5002
        %v5055 = vpack.c.b16 %v5007, %v5005
        %v5056 = vpack.c.b16 %v5008, %v5006
        %5105 = vmatprep.subr.bf16.mxu0 %v5024
        %5106 = vmatpush1.bf16.msra.mxu0 %v5023
        %5107 = vmatprep.subr.bf16.mxu0 %v5022
        %5108 = vmatpush1.bf16.msra.mxu0 %v5021
        %5109 = vmatprep.subr.bf16.mxu0 %v5020
        %5110 = vmatpush1.bf16.msra.mxu0 %v5019
        %5111 = vmatprep.subr.bf16.mxu0 %v5018
        %5112 = vmatpush1.bf16.msra.mxu0 %v5017
        %5113 = vmatprep.subr.bf16.mxu0 %v5016
        %5114 = vmatpush1.bf16.msra.mxu0 %v5015
        %5115 = vmatprep.subr.bf16.mxu0 %v5014
        %5116 = vmatpush1.bf16.msra.mxu0 %v5013
        %5117 = vmatprep.subr.bf16.mxu0 %v5012
        %5118 = vmatpush1.bf16.msra.mxu0 %v5011
        %5119 = vmatprep.subr.bf16.mxu0 %v5010
        %5120 = vmatpush1.bf16.msra.mxu0 %v5009
        %5121 = vmatprep.subr.bf16.mxu0 %v5040
        %5122 = vmatpush2.bf16.msra.mxu0 %v5039
        %5123 = vmatprep.subr.bf16.mxu0 %v5038
        %5124 = vmatpush2.bf16.msra.mxu0 %v5037
        %5125 = vmatprep.subr.bf16.mxu0 %v5036
        %5126 = vmatpush2.bf16.msra.mxu0 %v5035
        %5127 = vmatprep.subr.bf16.mxu0 %v5034
        %5128 = vmatpush2.bf16.msra.mxu0 %v5033
        %5129 = vmatprep.subr.bf16.mxu0 %v5032
        %5130 = vmatpush2.bf16.msra.mxu0 %v5031
        %5131 = vmatprep.subr.bf16.mxu0 %v5030
        %5132 = vmatpush2.bf16.msra.mxu0 %v5029
        %5133 = vmatprep.subr.bf16.mxu0 %v5028
        %5134 = vmatpush2.bf16.msra.mxu0 %v5027
        %5135 = vmatprep.subr.bf16.mxu0 %v5026
        %5136 = vmatpush2.bf16.msra.mxu0 %v5025
        %5137 = vmatprep.mubr.bf16.mxu0 %v4849
        %5138 = vmatmul.mubr.bf16.gmra.mxu0 %v4848
        %v5139 = vpop.f32.mrf.mxu0
        %v5140 = vadd.f32 %v4858, %v5139
        %v5141 = vpop.f32.mrf.mxu0
        %v5142 = vadd.f32 %v4862, %v5141
        %v5143 = vpop.f32.mrf.mxu0
        %v5144 = vadd.f32 %v4858, %v5143
        %v5145 = vpop.f32.mrf.mxu0
        %v5146 = vadd.f32 %v4862, %v5145
        %5147 = vmatprep.mubr.bf16.mxu0 %v4852
        %5148 = vmatmul.mubr.bf16.gmra.mxu0 %v4851
        %v5149 = vpop.f32.mrf.mxu0
        %v5150 = vadd.f32 %v4858, %v5149
        %v5151 = vpop.f32.mrf.mxu0
        %v5152 = vadd.f32 %v4862, %v5151
        %v5153 = vpop.f32.mrf.mxu0
        %v5154 = vadd.f32 %v4858, %v5153
        %v5155 = vpop.f32.mrf.mxu0
        %v5156 = vadd.f32 %v4862, %v5155
        %5157 = vdwg.mxu0
        %5158 = vmatprep.subr.bf16.mxu0 %v5056
        %5159 = vmatpush1.bf16.msra.mxu0 %v5055
        %5160 = vmatprep.subr.bf16.mxu0 %v5054
        %5161 = vmatpush1.bf16.msra.mxu0 %v5053
        %5162 = vmatprep.subr.bf16.mxu0 %v5052
        %5163 = vmatpush1.bf16.msra.mxu0 %v5051
        %5164 = vmatprep.subr.bf16.mxu0 %v5050
        %5165 = vmatpush1.bf16.msra.mxu0 %v5049
        %5166 = vmatprep.subr.bf16.mxu0 %v5048
        %5167 = vmatpush1.bf16.msra.mxu0 %v5047
        %5168 = vmatprep.subr.bf16.mxu0 %v5046
        %5169 = vmatpush1.bf16.msra.mxu0 %v5045
        %5170 = vmatprep.subr.bf16.mxu0 %v5044
        %5171 = vmatpush1.bf16.msra.mxu0 %v5043
        %5172 = vmatprep.subr.bf16.mxu0 %v5042
        %5173 = vmatpush1.bf16.msra.mxu0 %v5041
        %5174 = vmatprep.subr.bf16.mxu0 0
        %5175 = vmatpush2.bf16.msra.mxu0 0
        %5176 = vmatprep.subr.bf16.mxu0 0
        %5177 = vmatpush2.bf16.msra.mxu0 0
        %5178 = vmatprep.subr.bf16.mxu0 0
        %5179 = vmatpush2.bf16.msra.mxu0 0
        %5180 = vmatprep.subr.bf16.mxu0 0
        %5181 = vmatpush2.bf16.msra.mxu0 0
        %5182 = vmatprep.subr.bf16.mxu0 0
        %5183 = vmatpush2.bf16.msra.mxu0 0
        %5184 = vmatprep.subr.bf16.mxu0 0
        %5185 = vmatpush2.bf16.msra.mxu0 0
        %5186 = vmatprep.subr.bf16.mxu0 0
        %5187 = vmatpush2.bf16.msra.mxu0 0
        %5188 = vmatprep.subr.bf16.mxu0 0
        %5189 = vmatpush2.bf16.msra.mxu0 0
        %5190 = vmatprep.mubr.bf16.mxu0 0
        %5191 = vmatmul.mubr.bf16.gmra.mxu0 %v4850
        %v5192 = vpop.f32.mrf.mxu0
        %v5193 = vadd.f32 %v5140, %v5192
        %v5194 = vpop.f32.mrf.mxu0
        %v5195 = vadd.f32 %v5142, %v5194
        %v5196 = vpop.f32.mrf.mxu0
        %v5197 = vadd.f32 %v5144, %v5196
        %v5198 = vpop.f32.mrf.mxu0
        %v5199 = vadd.f32 %v5146, %v5198
        %5200 = vmatprep.mubr.bf16.mxu0 0
        %5201 = vmatmul.mubr.bf16.gmra.mxu0 %v4853
        %v5202 = vpop.f32.mrf.mxu0
        %v5203 = vadd.f32 %v5150, %v5202
        %v5204 = vpop.f32.mrf.mxu0
        %v5205 = vadd.f32 %v5152, %v5204
        %v5206 = vpop.f32.mrf.mxu0
        %v5207 = vadd.f32 %v5154, %v5206
        %v5208 = vpop.f32.mrf.mxu0
        %v5209 = vadd.f32 %v5156, %v5208
        %5210 = vdwg.mxu0
        %v5211 = vxor.u32 %v5195, 2147483648
        %v5212 = vxor.u32 %v5199, 2147483648
        %v5213 = vxor.u32 %v5205, 2147483648
        %v5214 = vxor.u32 %v5209, 2147483648
        %v5215 = vmul.f32 %v5211, 1.442695
        %v5216 = vpow.pop %v5215
        %v5217 = vmul.f32 %v5212, 1.442695
        %v5218 = vpow.pop %v5217
        %v5219 = vmul.f32 %v5213, 1.442695
        %v5220 = vpow.pop %v5219
        %v5221 = vmul.f32 %v5214, 1.442695
        %v5222 = vpow.pop %v5221
        %v5223 = vadd.f32 %v5216, 1.0
        %v5224 = vadd.f32 %v5218, 1.0
        %v5225 = vadd.f32 %v5220, 1.0
        %v5226 = vadd.f32 %v5222, 1.0
        %v5227 = vrcp.pop %v5223
        %v5228 = vmul.f32 1.0, %v5227
        %v5229 = vrcp.pop %v5224
        %v5230 = vmul.f32 1.0, %v5229
        %v5231 = vrcp.pop %v5225
        %v5232 = vmul.f32 1.0, %v5231
        %v5233 = vrcp.pop %v5226
        %v5234 = vmul.f32 1.0, %v5233
        %v5235 = vsub.f32 %v5193, %v4783
        %v5236 = vsub.f32 %v5197, %v4784
        %v5237 = vsub.f32 %v5203, %v4785
        %v5238 = vsub.f32 %v5207, %v4786
        %v5239 = vmul.f32 %v5228, %v5235
        %v5240 = vmul.f32 %v5230, %v5236
        %v5241 = vmul.f32 %v5232, %v5237
        %v5242 = vmul.f32 %v5234, %v5238
        %v5243 = vadd.f32 %v4783, %v5239
        %v5244 = vadd.f32 %v4784, %v5240
        %v5245 = vadd.f32 %v4785, %v5241
        %v5246 = vadd.f32 %v4786, %v5242
        %v5247 = vld [vmem:[#allocation25] sm:$0xf]
        %v5248 = vld [vmem:[#allocation25 + $0x4] sm:$0xf]
        %v5249 = vld [vmem:[#allocation25 + $0x8] sm:$0xf]
        %v5250 = vld [vmem:[#allocation25 + $0xc] sm:$0xf]
        %v5251 = vld [vmem:[#allocation25 + $0x10] sm:$0xf]
        %v5252 = vld [vmem:[#allocation25 + $0x14] sm:$0xf]
        %v5253 = vld [vmem:[#allocation25 + $0x18] sm:$0xf]
        %v5254 = vld [vmem:[#allocation25 + $0x1c] sm:$0xf]
        %v5255 = vld [vmem:[#allocation25 + $0x20] sm:$0xf]
        %v5256 = vld [vmem:[#allocation25 + $0x24] sm:$0xf]
        %v5257 = vld [vmem:[#allocation25 + $0x28] sm:$0xf]
        %v5258 = vld [vmem:[#allocation25 + $0x2c] sm:$0xf]
        %v5259 = vld [vmem:[#allocation25 + $0x30] sm:$0xf]
        %v5260 = vld [vmem:[#allocation25 + $0x34] sm:$0xf]
        %v5261 = vld [vmem:[#allocation25 + $0x38] sm:$0xf]
        %v5262 = vld [vmem:[#allocation25 + $0x3c] sm:$0xf]
        %v5263 = vld [vmem:[%s53] sm:$0x1]
        %v5264 = vpack.c.bf16 %v5244, %v5243
        %v5265 = vpack.c.bf16 %v5246, %v5245
        %v5267 = vlaneseq
        %v5268 = vshrl.u32 %v5267, 7
        %v5269 = vsub.s32 0, %v5268
        %v5270 = vrot.slane %v5263, %v5269
        %v5288 = vunpack.c.l.b16 %v5247
        %v5289 = vunpack.c.l.b16 %v5248
        %v5290 = vunpack.c.l.b16 %v5249
        %v5291 = vunpack.c.l.b16 %v5250
        %v5292 = vunpack.c.l.b16 %v5251
        %v5293 = vunpack.c.l.b16 %v5252
        %v5294 = vunpack.c.l.b16 %v5253
        %v5295 = vunpack.c.l.b16 %v5254
        %v5296 = vunpack.c.l.b16 %v5255
        %v5297 = vunpack.c.l.b16 %v5256
        %v5298 = vunpack.c.l.b16 %v5257
        %v5299 = vunpack.c.l.b16 %v5258
        %v5300 = vunpack.c.l.b16 %v5259
        %v5301 = vunpack.c.l.b16 %v5260
        %v5302 = vunpack.c.l.b16 %v5261
        %v5303 = vunpack.c.l.b16 %v5262
        %v5304 = vpack.c.b16 %v5289, %v5288
        %v5305 = vpack.c.b16 %v5291, %v5290
        %v5306 = vpack.c.b16 %v5293, %v5292
        %v5307 = vpack.c.b16 %v5295, %v5294
        %v5308 = vpack.c.b16 %v5297, %v5296
        %v5309 = vpack.c.b16 %v5299, %v5298
        %v5310 = vpack.c.b16 %v5301, %v5300
        %v5311 = vpack.c.b16 %v5303, %v5302
        %5320 = vmatprep.subr.bf16.mxu0 0
        %5321 = vmatpush1.bf16.msra.mxu0 %v5311
        %5322 = vmatprep.subr.bf16.mxu0 0
        %5323 = vmatpush1.bf16.msra.mxu0 %v5310
        %5324 = vmatprep.subr.bf16.mxu0 0
        %5325 = vmatpush1.bf16.msra.mxu0 %v5309
        %5326 = vmatprep.subr.bf16.mxu0 0
        %5327 = vmatpush1.bf16.msra.mxu0 %v5308
        %5328 = vmatprep.subr.bf16.mxu0 0
        %5329 = vmatpush1.bf16.msra.mxu0 %v5307
        %5330 = vmatprep.subr.bf16.mxu0 0
        %5331 = vmatpush1.bf16.msra.mxu0 %v5306
        %5332 = vmatprep.subr.bf16.mxu0 0
        %5333 = vmatpush1.bf16.msra.mxu0 %v5305
        %5334 = vmatprep.subr.bf16.mxu0 0
        %5335 = vmatpush1.bf16.msra.mxu0 %v5304
        %5336 = vmatprep.subr.bf16.mxu0 0
        %5337 = vmatpush2.bf16.msra.mxu0 0
        %5338 = vmatprep.subr.bf16.mxu0 0
        %5339 = vmatpush2.bf16.msra.mxu0 0
        %5340 = vmatprep.subr.bf16.mxu0 0
        %5341 = vmatpush2.bf16.msra.mxu0 0
        %5342 = vmatprep.subr.bf16.mxu0 0
        %5343 = vmatpush2.bf16.msra.mxu0 0
        %5344 = vmatprep.subr.bf16.mxu0 0
        %5345 = vmatpush2.bf16.msra.mxu0 0
        %5346 = vmatprep.subr.bf16.mxu0 0
        %5347 = vmatpush2.bf16.msra.mxu0 0
        %5348 = vmatprep.subr.bf16.mxu0 0
        %5349 = vmatpush2.bf16.msra.mxu0 0
        %5350 = vmatprep.subr.bf16.mxu0 0
        %5351 = vmatpush2.bf16.msra.mxu0 0
        %5352 = vmatprep.mubr.bf16.mxu0 0
        %5353 = vmatmul.mubr.bf16.gmra.mxu0 %v5264
        %v5354 = vpop.f32.mrf.mxu0
        %v5355 = vadd.f32 %v5270, %v5354
        %v5356 = vpop.f32.mrf.mxu0
        %v5357 = vpop.f32.mrf.mxu0
        %v5358 = vadd.f32 %v5270, %v5357
        %v5359 = vpop.f32.mrf.mxu0
        %5360 = vmatprep.mubr.bf16.mxu0 0
        %5361 = vmatmul.mubr.bf16.gmra.mxu0 %v5265
        %v5362 = vpop.f32.mrf.mxu0
        %v5363 = vadd.f32 %v5270, %v5362
        %v5364 = vpop.f32.mrf.mxu0
        %v5365 = vpop.f32.mrf.mxu0
        %v5366 = vadd.f32 %v5270, %v5365
        %v5367 = vpop.f32.mrf.mxu0
        %5368 = vdwg.mxu0
        %v5369 = vld [vmem:[#allocation26] sm:$0xf]
        %v5370 = vld [vmem:[#allocation26 + $0x4] sm:$0xf]
        %v5371 = vld [vmem:[#allocation26 + $0x8] sm:$0xf]
        %v5372 = vld [vmem:[#allocation26 + $0xc] sm:$0xf]
        %v5373 = vld [vmem:[#allocation26 + $0x10] sm:$0xf]
        %v5374 = vld [vmem:[#allocation26 + $0x14] sm:$0xf]
        %v5375 = vld [vmem:[#allocation26 + $0x18] sm:$0xf]
        %v5376 = vld [vmem:[#allocation26 + $0x1c] sm:$0xf]
        %v5377 = vld [vmem:[#allocation26 + $0x20] sm:$0xf]
        %v5378 = vld [vmem:[#allocation26 + $0x24] sm:$0xf]
        %v5379 = vld [vmem:[#allocation26 + $0x28] sm:$0xf]
        %v5380 = vld [vmem:[#allocation26 + $0x2c] sm:$0xf]
        %v5381 = vld [vmem:[#allocation26 + $0x30] sm:$0xf]
        %v5382 = vld [vmem:[#allocation26 + $0x34] sm:$0xf]
        %v5383 = vld [vmem:[#allocation26 + $0x38] sm:$0xf]
        %v5384 = vld [vmem:[#allocation26 + $0x3c] sm:$0xf]
        %v5385 = vld [vmem:[%s57] sm:$0x1]
        %v5386 = vpack.c.bf16 %v5358, %v5355
        %v5387 = vpack.c.bf16 %v5366, %v5363
        %v5389 = vlaneseq
        %v5390 = vshrl.u32 %v5389, 7
        %v5391 = vsub.s32 0, %v5390
        %v5392 = vrot.slane %v5385, %v5391
        %v5410 = vunpack.c.l.b16 %v5369
        %v5411 = vunpack.c.l.b16 %v5370
        %v5412 = vunpack.c.l.b16 %v5371
        %v5413 = vunpack.c.l.b16 %v5372
        %v5414 = vunpack.c.l.b16 %v5373
        %v5415 = vunpack.c.l.b16 %v5374
        %v5416 = vunpack.c.l.b16 %v5375
        %v5417 = vunpack.c.l.b16 %v5376
        %v5418 = vunpack.c.l.b16 %v5377
        %v5419 = vunpack.c.l.b16 %v5378
        %v5420 = vunpack.c.l.b16 %v5379
        %v5421 = vunpack.c.l.b16 %v5380
        %v5422 = vunpack.c.l.b16 %v5381
        %v5423 = vunpack.c.l.b16 %v5382
        %v5424 = vunpack.c.l.b16 %v5383
        %v5425 = vunpack.c.l.b16 %v5384
        %v5426 = vpack.c.b16 %v5411, %v5410
        %v5427 = vpack.c.b16 %v5413, %v5412
        %v5428 = vpack.c.b16 %v5415, %v5414
        %v5429 = vpack.c.b16 %v5417, %v5416
        %v5430 = vpack.c.b16 %v5419, %v5418
        %v5431 = vpack.c.b16 %v5421, %v5420
        %v5432 = vpack.c.b16 %v5423, %v5422
        %v5433 = vpack.c.b16 %v5425, %v5424
        %5442 = vmatprep.subr.bf16.mxu0 0
        %5443 = vmatpush1.bf16.msra.mxu0 %v5433
        %5444 = vmatprep.subr.bf16.mxu0 0
        %5445 = vmatpush1.bf16.msra.mxu0 %v5432
        %5446 = vmatprep.subr.bf16.mxu0 0
        %5447 = vmatpush1.bf16.msra.mxu0 %v5431
        %5448 = vmatprep.subr.bf16.mxu0 0
        %5449 = vmatpush1.bf16.msra.mxu0 %v5430
        %5450 = vmatprep.subr.bf16.mxu0 0
        %5451 = vmatpush1.bf16.msra.mxu0 %v5429
        %5452 = vmatprep.subr.bf16.mxu0 0
        %5453 = vmatpush1.bf16.msra.mxu0 %v5428
        %5454 = vmatprep.subr.bf16.mxu0 0
        %5455 = vmatpush1.bf16.msra.mxu0 %v5427
        %5456 = vmatprep.subr.bf16.mxu0 0
        %5457 = vmatpush1.bf16.msra.mxu0 %v5426
        %5458 = vmatprep.subr.bf16.mxu0 0
        %5459 = vmatpush2.bf16.msra.mxu0 0
        %5460 = vmatprep.subr.bf16.mxu0 0
        %5461 = vmatpush2.bf16.msra.mxu0 0
        %5462 = vmatprep.subr.bf16.mxu0 0
        %5463 = vmatpush2.bf16.msra.mxu0 0
        %5464 = vmatprep.subr.bf16.mxu0 0
        %5465 = vmatpush2.bf16.msra.mxu0 0
        %5466 = vmatprep.subr.bf16.mxu0 0
        %5467 = vmatpush2.bf16.msra.mxu0 0
        %5468 = vmatprep.subr.bf16.mxu0 0
        %5469 = vmatpush2.bf16.msra.mxu0 0
        %5470 = vmatprep.subr.bf16.mxu0 0
        %5471 = vmatpush2.bf16.msra.mxu0 0
        %5472 = vmatprep.subr.bf16.mxu0 0
        %5473 = vmatpush2.bf16.msra.mxu0 0
        %5474 = vmatprep.mubr.bf16.mxu0 0
        %5475 = vmatmul.mubr.bf16.gmra.mxu0 %v5386
        %v5476 = vpop.f32.mrf.mxu0
        %v5477 = vadd.f32 %v5392, %v5476
        %v5478 = vpop.f32.mrf.mxu0
        %v5479 = vpop.f32.mrf.mxu0
        %v5480 = vadd.f32 %v5392, %v5479
        %v5481 = vpop.f32.mrf.mxu0
        %5482 = vmatprep.mubr.bf16.mxu0 0
        %5483 = vmatmul.mubr.bf16.gmra.mxu0 %v5387
        %v5484 = vpop.f32.mrf.mxu0
        %v5485 = vadd.f32 %v5392, %v5484
        %v5486 = vpop.f32.mrf.mxu0
        %v5487 = vpop.f32.mrf.mxu0
        %v5488 = vadd.f32 %v5392, %v5487
        %v5489 = vpop.f32.mrf.mxu0
        %5490 = vdwg.mxu0
        %v5491 = vmax.f32 %v5477, 0.0
        %v5492 = vmax.f32 %v5480, 0.0
        %v5493 = vmax.f32 %v5485, 0.0
        %v5494 = vmax.f32 %v5488, 0.0
        %v5495 = vld [vmem:[#allocation28] sm:$0xf]
        %v5496 = vld [vmem:[#allocation28 + $0x4] sm:$0xf]
        %v5497 = vld [vmem:[#allocation28 + $0x8] sm:$0xf]
        %v5498 = vld [vmem:[#allocation28 + $0xc] sm:$0xf]
        %v5499 = vld [vmem:[#allocation28 + $0x10] sm:$0xf]
        %v5500 = vld [vmem:[#allocation28 + $0x14] sm:$0xf]
        %v5501 = vld [vmem:[#allocation28 + $0x18] sm:$0xf]
        %v5502 = vld [vmem:[#allocation28 + $0x1c] sm:$0xf]
        %v5503 = vld [vmem:[#allocation28 + $0x20] sm:$0xf]
        %v5504 = vld [vmem:[#allocation28 + $0x24] sm:$0xf]
        %v5505 = vld [vmem:[#allocation28 + $0x28] sm:$0xf]
        %v5506 = vld [vmem:[#allocation28 + $0x2c] sm:$0xf]
        %v5507 = vld [vmem:[#allocation28 + $0x30] sm:$0xf]
        %v5508 = vld [vmem:[#allocation28 + $0x34] sm:$0xf]
        %v5509 = vld [vmem:[#allocation28 + $0x38] sm:$0xf]
        %v5510 = vld [vmem:[#allocation28 + $0x3c] sm:$0xf]
        %v5511 = vld [vmem:[%s61] sm:$0x1]
        %v5512 = vpack.c.bf16 %v5492, %v5491
        %v5513 = vpack.c.bf16 %v5494, %v5493
        %v5515 = vlaneseq
        %v5516 = vshrl.u32 %v5515, 7
        %v5517 = vsub.s32 0, %v5516
        %v5518 = vrot.slane %v5511, %v5517
        %v5536 = vunpack.c.l.b16 %v5495
        %v5537 = vunpack.c.l.b16 %v5496
        %v5538 = vunpack.c.l.b16 %v5497
        %v5539 = vunpack.c.l.b16 %v5498
        %v5540 = vunpack.c.l.b16 %v5499
        %v5541 = vunpack.c.l.b16 %v5500
        %v5542 = vunpack.c.l.b16 %v5501
        %v5543 = vunpack.c.l.b16 %v5502
        %v5544 = vunpack.c.l.b16 %v5503
        %v5545 = vunpack.c.l.b16 %v5504
        %v5546 = vunpack.c.l.b16 %v5505
        %v5547 = vunpack.c.l.b16 %v5506
        %v5548 = vunpack.c.l.b16 %v5507
        %v5549 = vunpack.c.l.b16 %v5508
        %v5550 = vunpack.c.l.b16 %v5509
        %v5551 = vunpack.c.l.b16 %v5510
        %v5552 = vpack.c.b16 %v5537, %v5536
        %v5553 = vpack.c.b16 %v5539, %v5538
        %v5554 = vpack.c.b16 %v5541, %v5540
        %v5555 = vpack.c.b16 %v5543, %v5542
        %v5556 = vpack.c.b16 %v5545, %v5544
        %v5557 = vpack.c.b16 %v5547, %v5546
        %v5558 = vpack.c.b16 %v5549, %v5548
        %v5559 = vpack.c.b16 %v5551, %v5550
        %5568 = vmatprep.subr.bf16.mxu0 0
        %5569 = vmatpush1.bf16.msra.mxu0 %v5559
        %5570 = vmatprep.subr.bf16.mxu0 0
        %5571 = vmatpush1.bf16.msra.mxu0 %v5558
        %5572 = vmatprep.subr.bf16.mxu0 0
        %5573 = vmatpush1.bf16.msra.mxu0 %v5557
        %5574 = vmatprep.subr.bf16.mxu0 0
        %5575 = vmatpush1.bf16.msra.mxu0 %v5556
        %5576 = vmatprep.subr.bf16.mxu0 0
        %5577 = vmatpush1.bf16.msra.mxu0 %v5555
        %5578 = vmatprep.subr.bf16.mxu0 0
        %5579 = vmatpush1.bf16.msra.mxu0 %v5554
        %5580 = vmatprep.subr.bf16.mxu0 0
        %5581 = vmatpush1.bf16.msra.mxu0 %v5553
        %5582 = vmatprep.subr.bf16.mxu0 0
        %5583 = vmatpush1.bf16.msra.mxu0 %v5552
        %5584 = vmatprep.subr.bf16.mxu0 0
        %5585 = vmatpush2.bf16.msra.mxu0 0
        %5586 = vmatprep.subr.bf16.mxu0 0
        %5587 = vmatpush2.bf16.msra.mxu0 0
        %5588 = vmatprep.subr.bf16.mxu0 0
        %5589 = vmatpush2.bf16.msra.mxu0 0
        %5590 = vmatprep.subr.bf16.mxu0 0
        %5591 = vmatpush2.bf16.msra.mxu0 0
        %5592 = vmatprep.subr.bf16.mxu0 0
        %5593 = vmatpush2.bf16.msra.mxu0 0
        %5594 = vmatprep.subr.bf16.mxu0 0
        %5595 = vmatpush2.bf16.msra.mxu0 0
        %5596 = vmatprep.subr.bf16.mxu0 0
        %5597 = vmatpush2.bf16.msra.mxu0 0
        %5598 = vmatprep.subr.bf16.mxu0 0
        %5599 = vmatpush2.bf16.msra.mxu0 0
        %5600 = vmatprep.mubr.bf16.mxu0 0
        %5601 = vmatmul.mubr.bf16.gmra.mxu0 %v5512
        %v5602 = vpop.f32.mrf.mxu0
        %v5603 = vadd.f32 %v5518, %v5602
        %v5604 = vpop.f32.mrf.mxu0
        %v5605 = vpop.f32.mrf.mxu0
        %v5606 = vadd.f32 %v5518, %v5605
        %v5607 = vpop.f32.mrf.mxu0
        %5608 = vmatprep.mubr.bf16.mxu0 0
        %5609 = vmatmul.mubr.bf16.gmra.mxu0 %v5513
        %v5610 = vpop.f32.mrf.mxu0
        %v5611 = vadd.f32 %v5518, %v5610
        %v5612 = vpop.f32.mrf.mxu0
        %v5613 = vpop.f32.mrf.mxu0
        %v5614 = vadd.f32 %v5518, %v5613
        %v5615 = vpop.f32.mrf.mxu0
        %5616 = vdwg.mxu0
        %v5617 = vmax.f32 %v5603, 0.0
        %v5618 = vmax.f32 %v5606, 0.0
        %v5619 = vmax.f32 %v5611, 0.0
        %v5620 = vmax.f32 %v5614, 0.0
        %v5621 = vld [vmem:[#allocation29] sm:$0xf]
        %v5622 = vld [vmem:[#allocation29 + $0x4] sm:$0xf]
        %v5623 = vld [vmem:[#allocation29 + $0x8] sm:$0xf]
        %v5624 = vld [vmem:[#allocation29 + $0xc] sm:$0xf]
        %v5625 = vld [vmem:[#allocation29 + $0x10] sm:$0xf]
        %v5626 = vld [vmem:[#allocation29 + $0x14] sm:$0xf]
        %v5627 = vld [vmem:[#allocation29 + $0x18] sm:$0xf]
        %v5628 = vld [vmem:[#allocation29 + $0x1c] sm:$0xf]
        %v5629 = vld [vmem:[#allocation29 + $0x20] sm:$0xf]
        %v5630 = vld [vmem:[#allocation29 + $0x24] sm:$0xf]
        %v5631 = vld [vmem:[#allocation29 + $0x28] sm:$0xf]
        %v5632 = vld [vmem:[#allocation29 + $0x2c] sm:$0xf]
        %v5633 = vld [vmem:[#allocation29 + $0x30] sm:$0xf]
        %v5634 = vld [vmem:[#allocation29 + $0x34] sm:$0xf]
        %v5635 = vld [vmem:[#allocation29 + $0x38] sm:$0xf]
        %v5636 = vld [vmem:[#allocation29 + $0x3c] sm:$0xf]
        %v5637 = vld [vmem:[%s65] sm:$0x1]
        %v5638 = vpack.c.bf16 %v5618, %v5617
        %v5639 = vpack.c.bf16 %v5620, %v5619
        %v5641 = vlaneseq
        %v5642 = vshrl.u32 %v5641, 7
        %v5643 = vsub.s32 0, %v5642
        %v5644 = vrot.slane %v5637, %v5643
        %v5662 = vunpack.c.l.b16 %v5621
        %v5663 = vunpack.c.l.b16 %v5622
        %v5664 = vunpack.c.l.b16 %v5623
        %v5665 = vunpack.c.l.b16 %v5624
        %v5666 = vunpack.c.l.b16 %v5625
        %v5667 = vunpack.c.l.b16 %v5626
        %v5668 = vunpack.c.l.b16 %v5627
        %v5669 = vunpack.c.l.b16 %v5628
        %v5670 = vunpack.c.l.b16 %v5629
        %v5671 = vunpack.c.l.b16 %v5630
        %v5672 = vunpack.c.l.b16 %v5631
        %v5673 = vunpack.c.l.b16 %v5632
        %v5674 = vunpack.c.l.b16 %v5633
        %v5675 = vunpack.c.l.b16 %v5634
        %v5676 = vunpack.c.l.b16 %v5635
        %v5677 = vunpack.c.l.b16 %v5636
        %v5678 = vpack.c.b16 %v5663, %v5662
        %v5679 = vpack.c.b16 %v5665, %v5664
        %v5680 = vpack.c.b16 %v5667, %v5666
        %v5681 = vpack.c.b16 %v5669, %v5668
        %v5682 = vpack.c.b16 %v5671, %v5670
        %v5683 = vpack.c.b16 %v5673, %v5672
        %v5684 = vpack.c.b16 %v5675, %v5674
        %v5685 = vpack.c.b16 %v5677, %v5676
        %5694 = vmatprep.subr.bf16.mxu0 0
        %5695 = vmatpush1.bf16.msra.mxu0 %v5685
        %5696 = vmatprep.subr.bf16.mxu0 0
        %5697 = vmatpush1.bf16.msra.mxu0 %v5684
        %5698 = vmatprep.subr.bf16.mxu0 0
        %5699 = vmatpush1.bf16.msra.mxu0 %v5683
        %5700 = vmatprep.subr.bf16.mxu0 0
        %5701 = vmatpush1.bf16.msra.mxu0 %v5682
        %5702 = vmatprep.subr.bf16.mxu0 0
        %5703 = vmatpush1.bf16.msra.mxu0 %v5681
        %5704 = vmatprep.subr.bf16.mxu0 0
        %5705 = vmatpush1.bf16.msra.mxu0 %v5680
        %5706 = vmatprep.subr.bf16.mxu0 0
        %5707 = vmatpush1.bf16.msra.mxu0 %v5679
        %5708 = vmatprep.subr.bf16.mxu0 0
        %5709 = vmatpush1.bf16.msra.mxu0 %v5678
        %5710 = vmatprep.subr.bf16.mxu0 0
        %5711 = vmatpush2.bf16.msra.mxu0 0
        %5712 = vmatprep.subr.bf16.mxu0 0
        %5713 = vmatpush2.bf16.msra.mxu0 0
        %5714 = vmatprep.subr.bf16.mxu0 0
        %5715 = vmatpush2.bf16.msra.mxu0 0
        %5716 = vmatprep.subr.bf16.mxu0 0
        %5717 = vmatpush2.bf16.msra.mxu0 0
        %5718 = vmatprep.subr.bf16.mxu0 0
        %5719 = vmatpush2.bf16.msra.mxu0 0
        %5720 = vmatprep.subr.bf16.mxu0 0
        %5721 = vmatpush2.bf16.msra.mxu0 0
        %5722 = vmatprep.subr.bf16.mxu0 0
        %5723 = vmatpush2.bf16.msra.mxu0 0
        %5724 = vmatprep.subr.bf16.mxu0 0
        %5725 = vmatpush2.bf16.msra.mxu0 0
        %5726 = vmatprep.mubr.bf16.mxu0 0
        %5727 = vmatmul.mubr.bf16.gmra.mxu0 %v5638
        %v5728 = vpop.f32.mrf.mxu0
        %v5729 = vadd.f32 %v5644, %v5728
        %v5730 = vpop.f32.mrf.mxu0
        %v5731 = vpop.f32.mrf.mxu0
        %v5732 = vadd.f32 %v5644, %v5731
        %v5733 = vpop.f32.mrf.mxu0
        %5734 = vmatprep.mubr.bf16.mxu0 0
        %5735 = vmatmul.mubr.bf16.gmra.mxu0 %v5639
        %v5736 = vpop.f32.mrf.mxu0
        %v5737 = vadd.f32 %v5644, %v5736
        %v5738 = vpop.f32.mrf.mxu0
        %v5739 = vpop.f32.mrf.mxu0
        %v5740 = vadd.f32 %v5644, %v5739
        %v5741 = vpop.f32.mrf.mxu0
        %5742 = vdwg.mxu0
        %v5743 = vxor.u32 %v5729, 2147483648
        %v5744 = vxor.u32 %v5732, 2147483648
        %v5745 = vxor.u32 %v5737, 2147483648
        %v5746 = vxor.u32 %v5740, 2147483648
        %v5747 = vmul.f32 %v5743, 1.442695
        %v5748 = vpow.pop %v5747
        %v5749 = vmul.f32 %v5744, 1.442695
        %v5750 = vpow.pop %v5749
        %v5751 = vmul.f32 %v5745, 1.442695
        %v5752 = vpow.pop %v5751
        %v5753 = vmul.f32 %v5746, 1.442695
        %v5754 = vpow.pop %v5753
        %v5755 = vadd.f32 %v5748, 1.0
        %v5756 = vadd.f32 %v5750, 1.0
        %v5757 = vadd.f32 %v5752, 1.0
        %v5758 = vadd.f32 %v5754, 1.0
        %v5759 = vrcp.pop %v5755
        %v5760 = vmul.f32 1.0, %v5759
        %v5761 = vrcp.pop %v5756
        %v5762 = vmul.f32 1.0, %v5761
        %v5763 = vrcp.pop %v5757
        %v5764 = vmul.f32 1.0, %v5763
        %v5765 = vrcp.pop %v5758
        %v5766 = vmul.f32 1.0, %v5765
        %5767 = vst [vmem:[%s1276] sm:$0xff] %v5760
        %5768 = vst [vmem:[%s1276 + $0x8] sm:$0xff] %v5762
        %5769 = vst [vmem:[%s1276 + $0x10] sm:$0xff] %v5764
        %5770 = vst [vmem:[%s1276 + $0x18] sm:$0xff] %v5766
        %p5771 = scmp.lt.s32.totalorder %s90, 1
        %s5772 = scalar_select %p5771, %s90, 1
        %s5773 = smul.addr %s5772, 4
        %s5774 = smul.addr %s5773, 8
        %s5775 = scalar_lea.vmem %s67, %s5774
        // Predicated region
        $region225: #{converter_forward.1} parent=151 // pred_check
          %p5776 = pneg %p806
        $region226: #{converter_forward.1} parent=151 // pred_check_branch
          %5778 = sbr.rel (%p5776) target = $region228
        $region227: #{converter_forward.1} parent=151 // pred_region
          _
        $region228: #{converter_forward.1} parent=151 // pred_fallthru
          _
      $region152: #{converter_forward.1} parent=5 // pred_fallthru
        _
      %p5779 = scmp.le.s32.totalorder 2, %s85
      // Predicated region
      $region229: #{converter_forward.1} parent=5 // pred_check
        %p5780 = pneg %p5779
      $region230: #{converter_forward.1} parent=5 // pred_check_branch
        %5782 = sbr.rel (%p5780) target = $region232
      $region231: #{converter_forward.1} parent=5 // pred_region
        %s5783 = ssub.s32 %s85, 2
        // Predicated region
        $region233: #{converter_forward.1} parent=231 // pred_check
          %p5784 = pneg %p812
        $region234: #{converter_forward.1} parent=231 // pred_check_branch
          %5786 = sbr.rel (%p5784) target = $region236
        $region235: #{converter_forward.1} parent=231 // pred_region
          %p5787 = scmp.lt.s32.totalorder %s91, 1
          %s5788 = scalar_select %p5787, %s91, 1
          %s5789 = smul.addr %s5788, 4
          %s5790 = smul.addr %s5789, 8
          %s5791 = scalar_lea.vmem %s67, %s5790
        $region236: #{converter_forward.1} parent=231 // pred_fallthru
          _
      $region232: #{converter_forward.1} parent=5 // pred_fallthru
        _
    $region6: #{converter_forward.1} parent=1 // loop_footer
      %s89 = sadd.s32 1, %s85
    $region7: #{converter_forward.1} parent=1 // loop_footer_branch
      %84 = sbr.rel target = $region3
    $region8: #{converter_forward.1} parent=1 // loop_exit
      _
    %5792 = vsyncpa [#allocation4], 1
    %s5793 = scalar_lea.sflag [#allocation4], 1
    %5794 = vsyncpa %s5793, 1
    %5795 = vsyncpa [#allocation6], 1
    %5796 = vsyncpa [#allocation9], 1
    %5797 = vsyncpa [#allocation12], 1
    %5798 = vsyncpa [#allocation15], 1
    %5799 = vsyncpa [#allocation18], 1
    %5800 = vsyncpa [#allocation21], 1
    %5801 = vsyncpa [#allocation24], 1
    %5802 = vsyncpa [#allocation27], 1
    %5803 = vsyncpa [#allocation30], 1

</llo_original>
